<compile_context>
chip_gen: v7x
topology: tpu7x:2x2x1
jax: 0.10.0
libtpu: 0.0.40
codegen_flags: <defaults>
</compile_context>

<pallas_src>
import functools

import jax
import jax.numpy as jnp
import numpy as np
from jax import lax
from jax.experimental import pallas as pl
from jax.experimental.pallas import tpu as pltpu


def _round_up(x, m):
    return ((x + m - 1) // m) * m


# ---------------------------------------------------------------------------
# Fused serial kernel: GRU recurrence + LayerNorm.
# grid = (batch_blocks [parallel], time_chunks [arbitrary]);
# one grid step == t_chunk timesteps for one batch block.
# Only the fused h @ Wh matmul + gate math are on the serial critical path;
# the LayerNorm of h_t overlaps with the next step's matmul.
# ---------------------------------------------------------------------------
def gru_recurrent_kernel(gx_ref, m_ref, h0_ref, wh_ref, bhn_ref, gamma_ref, beta_ref,
                         y_ref, hT_ref,                      # outputs
                         h_scr,                              # VMEM scratch (carry)
                         *, t_chunk, t_real, t_padded, h_real, matmul_dtype, unroll):
    tc = pl.program_id(1)                    # time-chunk index (innermost)
    b_blk, hp = h_scr.shape
    mask_tail = (t_padded != t_real)         # static: padded timesteps exist?
    pad_lanes = (hp != h_real)               # static: padded hidden lanes exist?

    @pl.when(tc == 0)
    def _():
        h_scr[...] = h0_ref[...].astype(jnp.float32)

    # Hoist loop-invariant broadcasts (JAX does not CSE broadcast_in_dim).
    bhn = jnp.broadcast_to(bhn_ref[...].astype(jnp.float32), (b_blk, hp))
    gamma = jnp.broadcast_to(gamma_ref[...].astype(jnp.float32), (b_blk, hp))
    beta = jnp.broadcast_to(beta_ref[...].astype(jnp.float32), (b_blk, hp))
    inv_n = jnp.float32(1.0 / h_real)
    if pad_lanes:
        lane = lax.broadcasted_iota(jnp.int32, (b_blk, hp), 1)
        in_range = lane < h_real

    def step(i):
        h_prev = h_scr[...]                               # (B_blk, Hp) f32
        m = m_ref[i]                                      # (B_blk, 1)
        h = h_prev * m                                    # per-step mask of carry
        # One fused MXU matmul for all three gates (r | z | n on the lanes).
        gh = jnp.dot(h.astype(matmul_dtype), wh_ref[...],
                     preferred_element_type=jnp.float32)  # (B_blk, 3*Hp) f32
        gx = gx_ref[i].astype(jnp.float32)                # precomputed x-side gates
        # r and z in ONE sigmoid over the first 2*Hp lanes (single EUP sequence).
        rz = jax.nn.sigmoid(gx[:, :2 * hp] + gh[:, :2 * hp])
        r = rz[:, :hp]
        z = rz[:, hp:]
        n = jnp.tanh(gx[:, 2 * hp:] + r * (gh[:, 2 * hp:] + bhn))
        h_new = (1.0 - z) * n + z * h
        if mask_tail:
            valid = (tc * t_chunk + i) < t_real           # freeze carry on pad steps
            h_scr[...] = jnp.where(valid, h_new, h_prev)
        else:
            h_scr[...] = h_new
        # ---- fused LayerNorm (does not feed the carry -> off the serial path).
        hm = jnp.where(in_range, h_new, 0.0) if pad_lanes else h_new
        mu = jnp.sum(hm, axis=-1, keepdims=True) * inv_n
        d = hm - mu
        if pad_lanes:
            d = jnp.where(in_range, d, 0.0)
        var = jnp.sum(d * d, axis=-1, keepdims=True) * inv_n
        y = d * lax.rsqrt(var + 1e-5) * gamma + beta
        y_ref[i] = y.astype(y_ref.dtype)

    # Partial unroll: `unroll` statically-unrolled steps inside a fori_loop
    # block, plus a static tail.  Keeps LLO visibility without vreg spills.
    u = max(1, min(unroll, t_chunk))
    n_blocks = t_chunk // u
    if n_blocks > 0:
        def blk(j, carry):
            base = j * u
            for k in range(u):
                step(base + k)
            return carry
        lax.fori_loop(0, n_blocks, blk, 0)
    for i in range(n_blocks * u, t_chunk):
        step(i)

    # hT's out-block index is constant along the (sequential) time axis, so the
    # block stays VMEM-resident; write it back only after the last chunk.
    @pl.when(tc == pl.num_programs(1) - 1)
    def _():
        hT_ref[...] = h_scr[...]


# ---------------------------------------------------------------------------
# Wrapper
# ---------------------------------------------------------------------------
def gru_module_forward(x, rnn_states, masks, params, *,
                       t_chunk=32, b_block=None, min_batch_blocks=1, unroll=8,
                       matmul_dtype=jnp.float32, weight_buffers=None,
                       x_proj_precision=lax.Precision.HIGHEST):
    """Pallas implementation of GRUModule.forward (num_layers == 1).

    x:          (T, B, D) float32
    rnn_states: (1, B, H) float32
    masks:      (T, B, 1) float32 (binary)
    returns:    (y, h_final) with y (T, B, H), h_final (1, B, H)

    min_batch_blocks=2 is recommended on v7x (2 TensorCores / chip).
    weight_buffers=1 single-buffers the (Hp, 3Hp) weight block (v7x, large H).
    x_proj_precision=lax.Precision.DEFAULT is fine in production on v6e/v7x.
    """
    T, B, D = x.shape
    H = rnn_states.shape[2]
    f32_matmul = (jnp.dtype(matmul_dtype) == jnp.dtype(jnp.float32))

    # ---- padded / blocked sizes (lane-dense, MXU-friendly) -----------------
    Hp = _round_up(H, 128)
    B8 = _round_up(B, 8)
    if b_block is None:
        # Tall MXU LHS: whole batch in one block (capped at 128 rows), split
        # into min_batch_blocks pieces if requested (v7x megacore).
        b_block = max(8, min(128, B8 // max(1, min_batch_blocks)))
    B_blk = _round_up(min(b_block, B8), 8 if f32_matmul else 16)
    Bp = _round_up(B, B_blk)
    Tc = max(1, min(t_chunk, T))
    Tp = _round_up(T, Tc)
    n_b, n_t = Bp // B_blk, Tp // Tc
    padH = Hp - H

    # ---- fuse / pad parameters ---------------------------------------------
    wi, wh, bi, bh = params["wi"], params["wh"], params["bi"], params["bh"]
    gamma, beta = params["gamma"], params["beta"]

    def pad_last(a):
        return jnp.pad(a, [(0, 0)] * (a.ndim - 1) + [(0, padH)])

    wi_cat = jnp.concatenate([pad_last(wi[g]) for g in range(3)], axis=-1)   # (D, 3Hp)
    # Fold bh_r / bh_z into the x-side bias; bh_n stays separate because of
    # the r * (h @ Whn + bhn) term.
    bi_cat = jnp.concatenate([pad_last(bi[0] + bh[0]),
                              pad_last(bi[1] + bh[1]),
                              pad_last(bi[2])], axis=-1)                     # (1, 3Hp)
    wh_cat = jnp.concatenate(
        [jnp.pad(wh[g], ((0, padH), (0, padH))) for g in range(3)],
        axis=-1).astype(matmul_dtype)                                        # (Hp, 3Hp)
    bhn = pad_last(bh[2])                                                    # (1, Hp)
    gamma_p = pad_last(gamma)                                                # (1, Hp)
    beta_p = pad_last(beta)                                                  # (1, Hp)

    # ---- pad activations ----------------------------------------------------
    xp = jnp.pad(x, ((0, Tp - T), (0, Bp - B), (0, 0)))
    mp = jnp.pad(masks.astype(jnp.float32), ((0, Tp - T), (0, Bp - B), (0, 0)))
    h0p = jnp.pad(rnn_states[0], ((0, Bp - B), (0, padH)))

    # ---- hoisted input projection: one big parallel MXU matmul (plain XLA) --
    x2 = xp.reshape(Tp * Bp, D)
    if f32_matmul:
        gx2 = jnp.dot(x2, wi_cat, precision=x_proj_precision)
        gates_x = (gx2 + bi_cat).reshape(Tp, Bp, 3 * Hp).astype(jnp.float32)
    else:
        gx2 = jnp.dot(x2.astype(matmul_dtype), wi_cat.astype(matmul_dtype),
                      preferred_element_type=jnp.float32)
        # Stream the dominant HBM input of the recurrent kernel in bf16.
        gates_x = (gx2 + bi_cat).reshape(Tp, Bp, 3 * Hp).astype(matmul_dtype)

    rec_kernel = functools.partial(
        gru_recurrent_kernel, t_chunk=Tc, t_real=T, t_padded=Tp, h_real=H,
        matmul_dtype=matmul_dtype, unroll=unroll)

    if weight_buffers is None:
        wh_spec = pl.BlockSpec((Hp, 3 * Hp), lambda b, t: (0, 0))
    else:
        # Constant-index block: extra buffers only waste VMEM; weight_buffers=1
        # halves its footprint (useful on v7x at production H).
        wh_spec = pl.BlockSpec((Hp, 3 * Hp), lambda b, t: (0, 0),
                               pipeline_mode=pl.Buffered(weight_buffers))

    # ---- VMEM budget derived from the actual tile sizes ---------------------
    gx_bytes = jnp.dtype(gates_x.dtype).itemsize
    wh_bytes = jnp.dtype(wh_cat.dtype).itemsize
    wh_bufs = 1 if weight_buffers == 1 else 2
    est = (2 * Tc * B_blk * 3 * Hp * gx_bytes      # gates_x (double buffered)
           + 2 * Tc * B_blk * 128 * 4              # masks (lane padded)
           + 2 * Tc * B_blk * Hp * 4               # y output
           + 4 * B_blk * Hp * 4                    # h0 in + hT out
           + 6 * 8 * Hp * 4                        # bhn / gamma / beta
           + wh_bufs * Hp * 3 * Hp * wh_bytes      # fused Wh
           + B_blk * Hp * 4)                       # h carry scratch
    vmem_limit = int(min(max(32 << 20, (est * 3) // 2), 100 << 20))

    y_ln, hT = pl.pallas_call(
        rec_kernel,
        out_shape=(jax.ShapeDtypeStruct((Tp, Bp, Hp), jnp.float32),
                   jax.ShapeDtypeStruct((Bp, Hp), jnp.float32)),
        grid_spec=pltpu.PrefetchScalarGridSpec(
            num_scalar_prefetch=0,
            grid=(n_b, n_t),
            in_specs=[
                pl.BlockSpec((Tc, B_blk, 3 * Hp), lambda b, t: (t, b, 0)),  # gates_x
                pl.BlockSpec((Tc, B_blk, 1),      lambda b, t: (t, b, 0)),  # masks
                pl.BlockSpec((B_blk, Hp),         lambda b, t: (b, 0)),     # h0
                wh_spec,                                                    # Wh fused
                pl.BlockSpec((1, Hp),             lambda b, t: (0, 0)),     # bh_n
                pl.BlockSpec((1, Hp),             lambda b, t: (0, 0)),     # gamma
                pl.BlockSpec((1, Hp),             lambda b, t: (0, 0)),     # beta
            ],
            out_specs=[
                pl.BlockSpec((Tc, B_blk, Hp), lambda b, t: (t, b, 0)),      # LN(h_t)
                pl.BlockSpec((B_blk, Hp),     lambda b, t: (b, 0)),         # h_T raw
            ],
            scratch_shapes=[pltpu.VMEM((B_blk, Hp), jnp.float32)],
        ),
        compiler_params=pltpu.CompilerParams(
            dimension_semantics=("parallel", "arbitrary"),
            vmem_limit_bytes=vmem_limit,
        ),
    )(gates_x, mp, h0p, wh_cat, bhn, gamma_p, beta_p)

    y = y_ln[:T, :B, :H]
    h_final = hT[:B, :H][None]
    return y, h_final


# ---------------------------------------------------------------------------
# Deterministic parameter init (mirrors nn.GRU shapes + orthogonal gain=1.4).
# ---------------------------------------------------------------------------
def _orthogonal(key, rows, cols, gain):
    a = jax.random.normal(key, (max(rows, cols), min(rows, cols)), jnp.float32)
    q, r = jnp.linalg.qr(a)
    q = q * jnp.sign(jnp.diag(r))[None, :]
    if rows < cols:
        q = q.T
    return gain * q[:rows, :cols]


def init_params(key, input_dim, hidden_dim):
    k_ih, k_hh = jax.random.split(key)
    # torch layout: weight_ih_l0 (3H, D), weight_hh_l0 (3H, H); gate order r,z,n
    w_ih = _orthogonal(k_ih, 3 * hidden_dim, input_dim, gain=1.4)
    w_hh = _orthogonal(k_hh, 3 * hidden_dim, hidden_dim, gain=1.4)
    wi = jnp.stack([w_ih[g * hidden_dim:(g + 1) * hidden_dim].T for g in range(3)])
    wh = jnp.stack([w_hh[g * hidden_dim:(g + 1) * hidden_dim].T for g in range(3)])
    bi = jnp.zeros((3, 1, hidden_dim), jnp.float32)
    bh = jnp.zeros((3, 1, hidden_dim), jnp.float32)
    gamma = jnp.ones((1, hidden_dim), jnp.float32)
    beta = jnp.zeros((1, hidden_dim), jnp.float32)
    return dict(wi=wi, wh=wh, bi=bi, bh=bh, gamma=gamma, beta=beta)


# ---------------------------------------------------------------------------
# Pure-JAX reference (same semantics) for correctness checking.
# ---------------------------------------------------------------------------
def reference_forward(x, rnn_states, masks, params):
    wi, wh, bi, bh = params["wi"], params["wh"], params["bi"], params["bh"]
    gamma, beta = params["gamma"], params["beta"]

    def mm(a, b):
        return jnp.dot(a, b, precision=lax.Precision.HIGHEST)

    def step(h, inp):
        xt, mt = inp
        h = h * mt
        r = jax.nn.sigmoid(mm(xt, wi[0]) + bi[0] + mm(h, wh[0]) + bh[0])
        z = jax.nn.sigmoid(mm(xt, wi[1]) + bi[1] + mm(h, wh[1]) + bh[1])
        n = jnp.tanh(mm(xt, wi[2]) + bi[2] + r * (mm(h, wh[2]) + bh[2]))
        h_new = (1.0 - z) * n + z * h
        return h_new, h_new

    h_final, ys = lax.scan(step, rnn_states[0], (x, masks))
    mu = jnp.mean(ys, axis=-1, keepdims=True)
    var = jnp.mean((ys - mu) ** 2, axis=-1, keepdims=True)
    y = (ys - mu) * lax.rsqrt(var + 1e-5) * gamma + beta
    return y, h_final[None]


if __name__ == "__main__":
    # Deliberately awkward sizes: T not a multiple of the time chunk, B not a
    # multiple of the batch block, H << 128 — exercises every padding path.
    T, B, D, H = 12, 12, 16, 32
    key = jax.random.PRNGKey(0)
    k_p, k_x, k_h, k_m = jax.random.split(key, 4)

    params = init_params(k_p, D, H)
    x = jax.random.normal(k_x, (T, B, D), jnp.float32)
    rnn_states = jax.random.normal(k_h, (1, B, H), jnp.float32)
    masks = (jax.random.uniform(k_m, (T, B, 1)) > 0.2).astype(jnp.float32)

    y_ref, h_ref = reference_forward(x, rnn_states, masks, params)

    # 1) Default config: single tall batch block, Tc = T, partial unroll with
    #    a static remainder (12 = 1*8 + 4).  Tight f32 check.
    fwd = jax.jit(gru_module_forward)
    y, h = fwd(x, rnn_states, masks, params)
    jax.block_until_ready((y, h))
    np.testing.assert_allclose(np.asarray(y), np.asarray(y_ref), rtol=1e-3, atol=1e-3)
    np.testing.assert_allclose(np.asarray(h), np.asarray(h_ref), rtol=1e-3, atol=1e-3)

    # 2) Multi-block config: exercises batch blocking (v7x megacore style),
    #    padded time-chunk tail masking, and multi-chunk carry.
    fwd2 = jax.jit(functools.partial(
        gru_module_forward, t_chunk=8, b_block=8, min_batch_blocks=2, unroll=4))
    y2, h2 = fwd2(x, rnn_states, masks, params)
    jax.block_until_ready((y2, h2))
    np.testing.assert_allclose(np.asarray(y2), np.asarray(y_ref), rtol=1e-3, atol=1e-3)
    np.testing.assert_allclose(np.asarray(h2), np.asarray(h_ref), rtol=1e-3, atol=1e-3)

    # 3) bf16 MXU-operand path (v6e/v7x fast path): bf16 Wh + bf16 gates_x
    #    stream, f32 accumulation + f32 gate/LN math.  Loose check (bf16 carry
    #    rounding compounds over T steps — documented tradeoff).
    fwd3 = jax.jit(functools.partial(gru_module_forward, matmul_dtype=jnp.bfloat16))
    y3, h3 = fwd3(x, rnn_states, masks, params)
    jax.block_until_ready((y3, h3))
    np.testing.assert_allclose(np.asarray(y3), np.asarray(y_ref), rtol=2e-1, atol=2e-1)
    np.testing.assert_allclose(np.asarray(h3), np.asarray(h_ref), rtol=2e-1, atol=2e-1)

    print("KERNEL_OK")
</pallas_src>

<mosaic_0001>
module attributes {stable_mosaic.version = 11 : i64} {
  func.func @gru_recurrent_kernel(%arg0: i32, %arg1: i32, %arg2: memref<12x16x384xf32, #tpu.memory_space<vmem>>, %arg3: memref<12x16x1xf32, #tpu.memory_space<vmem>>, %arg4: memref<16x128xf32, #tpu.memory_space<vmem>>, %arg5: memref<128x384xf32, #tpu.memory_space<vmem>>, %arg6: memref<1x128xf32, #tpu.memory_space<vmem>>, %arg7: memref<1x128xf32, #tpu.memory_space<vmem>>, %arg8: memref<1x128xf32, #tpu.memory_space<vmem>>, %arg9: memref<12x16x128xf32, #tpu.memory_space<vmem>>, %arg10: memref<16x128xf32, #tpu.memory_space<vmem>>, %arg11: memref<16x128xf32, #tpu.memory_space<vmem>>) attributes {dimension_semantics = [#tpu.dimension_semantics<parallel>, #tpu.dimension_semantics<arbitrary>], iteration_bounds = array<i64: 1, 1>, scalar_prefetch = 0 : i64, scratch_operands = 1 : i64, tpu.core_type = #tpu.core_type<tc>, window_params = [{transform_indices = @transform_0, window_bounds = array<i64: 12, 16, 384>}, {transform_indices = @transform_1, window_bounds = array<i64: 12, 16, 1>}, {transform_indices = @transform_2, window_bounds = array<i64: 16, 128>}, {pipeline_mode = #tpu.pipeline_mode<synchronous>, transform_indices = @transform_3, window_bounds = array<i64: 128, 384>}, {pipeline_mode = #tpu.pipeline_mode<synchronous>, transform_indices = @transform_4, window_bounds = array<i64: 1, 128>}, {pipeline_mode = #tpu.pipeline_mode<synchronous>, transform_indices = @transform_5, window_bounds = array<i64: 1, 128>}, {pipeline_mode = #tpu.pipeline_mode<synchronous>, transform_indices = @transform_6, window_bounds = array<i64: 1, 128>}, {transform_indices = @transform_7, window_bounds = array<i64: 12, 16, 128>}, {transform_indices = @transform_8, window_bounds = array<i64: 16, 128>}]} {
    %c0_i32 = arith.constant 0 : i32
    %0 = arith.cmpi eq, %arg1, %c0_i32 : i32
    %1 = arith.extui %0 : i1 to i32
    %c0_i32_0 = arith.constant 0 : i32
    %2 = arith.cmpi ne, %1, %c0_i32_0 : i32
    scf.if %2 {
      %c0_267 = arith.constant 0 : index
      %c0_268 = arith.constant 0 : index
      %723 = vector.load %arg4[%c0_267, %c0_268] : memref<16x128xf32, #tpu.memory_space<vmem>>, vector<16x128xf32>
      %c0_269 = arith.constant 0 : index
      %c0_270 = arith.constant 0 : index
      %724 = vector.load %arg11[%c0_269, %c0_270] : memref<16x128xf32, #tpu.memory_space<vmem>>, vector<16x128xf32>
      tpu.vector_store %arg11[%c0_269, %c0_270], %723 {strides = array<i32>} : memref<16x128xf32, #tpu.memory_space<vmem>>, vector<16x128xf32>,
    } else {
    }
    %c0 = arith.constant 0 : index
    %c0_1 = arith.constant 0 : index
    %3 = vector.load %arg6[%c0, %c0_1] : memref<1x128xf32, #tpu.memory_space<vmem>>, vector<1x128xf32>
    %4 = vector.shape_cast %3 : vector<1x128xf32> to vector<1x128xf32>
    %5 = vector.broadcast %4 : vector<1x128xf32> to vector<16x128xf32>
    %c0_2 = arith.constant 0 : index
    %c0_3 = arith.constant 0 : index
    %6 = vector.load %arg7[%c0_2, %c0_3] : memref<1x128xf32, #tpu.memory_space<vmem>>, vector<1x128xf32>
    %7 = vector.shape_cast %6 : vector<1x128xf32> to vector<1x128xf32>
    %8 = vector.broadcast %7 : vector<1x128xf32> to vector<16x128xf32>
    %c0_4 = arith.constant 0 : index
    %c0_5 = arith.constant 0 : index
    %9 = vector.load %arg8[%c0_4, %c0_5] : memref<1x128xf32, #tpu.memory_space<vmem>>, vector<1x128xf32>
    %10 = vector.shape_cast %9 : vector<1x128xf32> to vector<1x128xf32>
    %11 = vector.broadcast %10 : vector<1x128xf32> to vector<16x128xf32>
    %12 = tpu.iota {dimensions = array<i32: 1>} : vector<16x128xi32>
    %c32_i32 = arith.constant 32 : i32
    %13 = vector.broadcast %c32_i32 : i32 to vector<16x128xi32>
    %14 = arith.cmpi slt, %12, %13 : vector<16x128xi32>
    %cst = arith.constant 3.125000e-02 : f32
    %c0_i32_6 = arith.constant 0 : i32
    %c8_i32 = arith.constant 8 : i32
    %15 = arith.muli %c0_i32_6, %c8_i32 : i32
    %c0_i32_7 = arith.constant 0 : i32
    %16 = arith.addi %15, %c0_i32_7 : i32
    %c0_8 = arith.constant 0 : index
    %c0_9 = arith.constant 0 : index
    %17 = vector.load %arg11[%c0_8, %c0_9] : memref<16x128xf32, #tpu.memory_space<vmem>>, vector<16x128xf32>
    %18 = arith.index_cast %16 : i32 to index
    %c0_10 = arith.constant 0 : index
    %c0_11 = arith.constant 0 : index
    %19 = vector.load %arg3[%18, %c0_10, %c0_11] : memref<12x16x1xf32, #tpu.memory_space<vmem>>, vector<1x16x1xf32>
    %20 = vector.shape_cast %19 : vector<1x16x1xf32> to vector<16x1xf32>
    %21 = vector.broadcast %20 : vector<16x1xf32> to vector<16x128xf32>
    %22 = arith.mulf %17, %21 : vector<16x128xf32>
    %c0_12 = arith.constant 0 : index
    %c0_13 = arith.constant 0 : index
    %23 = vector.load %arg5[%c0_12, %c0_13] : memref<128x384xf32, #tpu.memory_space<vmem>>, vector<128x384xf32>
    %cst_14 = arith.constant dense<0.000000e+00> : vector<16x384xf32>
    %24 = tpu.matmul %22, %23, %cst_14 {dimension_numbers = #tpu.dot_dimension_numbers<[1], [0], [0], [1], [0, 0, 1, 1], [], []>} : vector<16x128xf32>, vector<128x384xf32>, vector<16x384xf32> -> vector<16x384xf32>
    %25 = arith.index_cast %16 : i32 to index
    %c0_15 = arith.constant 0 : index
    %c0_16 = arith.constant 0 : index
    %26 = vector.load %arg2[%25, %c0_15, %c0_16] : memref<12x16x384xf32, #tpu.memory_space<vmem>>, vector<1x16x384xf32>
    %27 = vector.shape_cast %26 : vector<1x16x384xf32> to vector<16x384xf32>
    %28 = vector.extract_strided_slice %27 {offsets = [0, 0], sizes = [16, 256], strides = [1, 1]} : vector<16x384xf32> to vector<16x256xf32>
    %29 = vector.extract_strided_slice %24 {offsets = [0, 0], sizes = [16, 256], strides = [1, 1]} : vector<16x384xf32> to vector<16x256xf32>
    %30 = arith.addf %28, %29 : vector<16x256xf32>
    %31 = arith.negf %30 : vector<16x256xf32>
    %32 = math.exp %31 : vector<16x256xf32>
    %cst_17 = arith.constant 1.000000e+00 : f32
    %33 = vector.broadcast %cst_17 : f32 to vector<16x256xf32>
    %34 = arith.addf %33, %32 : vector<16x256xf32>
    %35 = arith.divf %33, %34 : vector<16x256xf32>
    %36 = vector.extract_strided_slice %35 {offsets = [0, 0], sizes = [16, 128], strides = [1, 1]} : vector<16x256xf32> to vector<16x128xf32>
    %37 = vector.extract_strided_slice %35 {offsets = [0, 128], sizes = [16, 128], strides = [1, 1]} : vector<16x256xf32> to vector<16x128xf32>
    %38 = vector.extract_strided_slice %27 {offsets = [0, 256], sizes = [16, 128], strides = [1, 1]} : vector<16x384xf32> to vector<16x128xf32>
    %39 = vector.extract_strided_slice %24 {offsets = [0, 256], sizes = [16, 128], strides = [1, 1]} : vector<16x384xf32> to vector<16x128xf32>
    %40 = arith.addf %39, %5 : vector<16x128xf32>
    %41 = arith.mulf %36, %40 : vector<16x128xf32>
    %42 = arith.addf %38, %41 : vector<16x128xf32>
    %43 = math.tanh %42 : vector<16x128xf32>
    %cst_18 = arith.constant 1.000000e+00 : f32
    %44 = vector.broadcast %cst_18 : f32 to vector<16x128xf32>
    %45 = arith.subf %44, %37 : vector<16x128xf32>
    %46 = arith.mulf %45, %43 : vector<16x128xf32>
    %47 = arith.mulf %37, %22 : vector<16x128xf32>
    %48 = arith.addf %46, %47 : vector<16x128xf32>
    %c0_19 = arith.constant 0 : index
    %c0_20 = arith.constant 0 : index
    %49 = vector.load %arg11[%c0_19, %c0_20] : memref<16x128xf32, #tpu.memory_space<vmem>>, vector<16x128xf32>
    tpu.vector_store %arg11[%c0_19, %c0_20], %48 {strides = array<i32>} : memref<16x128xf32, #tpu.memory_space<vmem>>, vector<16x128xf32>,
    %cst_21 = arith.constant 0.000000e+00 : f32
    %50 = vector.broadcast %cst_21 : f32 to vector<16x128xf32>
    %51 = arith.select %14, %48, %50 : vector<16x128xi1>, vector<16x128xf32>
    %cst_22 = arith.constant dense<0.000000e+00> : vector<16xf32>
    %52 = vector.multi_reduction <add>, %51, %cst_22 [1] : vector<16x128xf32> to vector<16xf32>
    %53 = vector.shape_cast %52 : vector<16xf32> to vector<16x1xf32>
    %54 = vector.broadcast %cst : f32 to vector<16x1xf32>
    %55 = arith.mulf %53, %54 : vector<16x1xf32>
    %56 = vector.broadcast %55 : vector<16x1xf32> to vector<16x128xf32>
    %57 = arith.subf %51, %56 : vector<16x128xf32>
    %cst_23 = arith.constant 0.000000e+00 : f32
    %58 = vector.broadcast %cst_23 : f32 to vector<16x128xf32>
    %59 = arith.select %14, %57, %58 : vector<16x128xi1>, vector<16x128xf32>
    %60 = arith.mulf %59, %59 : vector<16x128xf32>
    %cst_24 = arith.constant dense<0.000000e+00> : vector<16xf32>
    %61 = vector.multi_reduction <add>, %60, %cst_24 [1] : vector<16x128xf32> to vector<16xf32>
    %62 = vector.shape_cast %61 : vector<16xf32> to vector<16x1xf32>
    %63 = vector.broadcast %cst : f32 to vector<16x1xf32>
    %64 = arith.mulf %62, %63 : vector<16x1xf32>
    %cst_25 = arith.constant 9.99999974E-6 : f32
    %65 = vector.broadcast %cst_25 : f32 to vector<16x1xf32>
    %66 = arith.addf %64, %65 : vector<16x1xf32>
    %67 = math.rsqrt %66 : vector<16x1xf32>
    %68 = vector.broadcast %67 : vector<16x1xf32> to vector<16x128xf32>
    %69 = arith.mulf %59, %68 : vector<16x128xf32>
    %70 = arith.mulf %69, %8 : vector<16x128xf32>
    %71 = arith.addf %70, %11 : vector<16x128xf32>
    %72 = arith.index_cast %16 : i32 to index
    %c0_26 = arith.constant 0 : index
    %c0_27 = arith.constant 0 : index
    %73 = vector.load %arg9[%72, %c0_26, %c0_27] : memref<12x16x128xf32, #tpu.memory_space<vmem>>, vector<1x16x128xf32>
    %74 = vector.shape_cast %73 : vector<1x16x128xf32> to vector<16x128xf32>
    %75 = vector.shape_cast %71 : vector<16x128xf32> to vector<1x16x128xf32>
    tpu.vector_store %arg9[%72, %c0_26, %c0_27], %75 {strides = array<i32>} : memref<12x16x128xf32, #tpu.memory_space<vmem>>, vector<1x16x128xf32>,
    %c1_i32 = arith.constant 1 : i32
    %76 = arith.addi %15, %c1_i32 : i32
    %c0_28 = arith.constant 0 : index
    %c0_29 = arith.constant 0 : index
    %77 = vector.load %arg11[%c0_28, %c0_29] : memref<16x128xf32, #tpu.memory_space<vmem>>, vector<16x128xf32>
    %78 = arith.index_cast %76 : i32 to index
    %c0_30 = arith.constant 0 : index
    %c0_31 = arith.constant 0 : index
    %79 = vector.load %arg3[%78, %c0_30, %c0_31] : memref<12x16x1xf32, #tpu.memory_space<vmem>>, vector<1x16x1xf32>
    %80 = vector.shape_cast %79 : vector<1x16x1xf32> to vector<16x1xf32>
    %81 = vector.broadcast %80 : vector<16x1xf32> to vector<16x128xf32>
    %82 = arith.mulf %77, %81 : vector<16x128xf32>
    %c0_32 = arith.constant 0 : index
    %c0_33 = arith.constant 0 : index
    %83 = vector.load %arg5[%c0_32, %c0_33] : memref<128x384xf32, #tpu.memory_space<vmem>>, vector<128x384xf32>
    %cst_34 = arith.constant dense<0.000000e+00> : vector<16x384xf32>
    %84 = tpu.matmul %82, %83, %cst_34 {dimension_numbers = #tpu.dot_dimension_numbers<[1], [0], [0], [1], [0, 0, 1, 1], [], []>} : vector<16x128xf32>, vector<128x384xf32>, vector<16x384xf32> -> vector<16x384xf32>
    %85 = arith.index_cast %76 : i32 to index
    %c0_35 = arith.constant 0 : index
    %c0_36 = arith.constant 0 : index
    %86 = vector.load %arg2[%85, %c0_35, %c0_36] : memref<12x16x384xf32, #tpu.memory_space<vmem>>, vector<1x16x384xf32>
    %87 = vector.shape_cast %86 : vector<1x16x384xf32> to vector<16x384xf32>
    %88 = vector.extract_strided_slice %87 {offsets = [0, 0], sizes = [16, 256], strides = [1, 1]} : vector<16x384xf32> to vector<16x256xf32>
    %89 = vector.extract_strided_slice %84 {offsets = [0, 0], sizes = [16, 256], strides = [1, 1]} : vector<16x384xf32> to vector<16x256xf32>
    %90 = arith.addf %88, %89 : vector<16x256xf32>
    %91 = arith.negf %90 : vector<16x256xf32>
    %92 = math.exp %91 : vector<16x256xf32>
    %cst_37 = arith.constant 1.000000e+00 : f32
    %93 = vector.broadcast %cst_37 : f32 to vector<16x256xf32>
    %94 = arith.addf %93, %92 : vector<16x256xf32>
    %95 = arith.divf %93, %94 : vector<16x256xf32>
    %96 = vector.extract_strided_slice %95 {offsets = [0, 0], sizes = [16, 128], strides = [1, 1]} : vector<16x256xf32> to vector<16x128xf32>
    %97 = vector.extract_strided_slice %95 {offsets = [0, 128], sizes = [16, 128], strides = [1, 1]} : vector<16x256xf32> to vector<16x128xf32>
    %98 = vector.extract_strided_slice %87 {offsets = [0, 256], sizes = [16, 128], strides = [1, 1]} : vector<16x384xf32> to vector<16x128xf32>
    %99 = vector.extract_strided_slice %84 {offsets = [0, 256], sizes = [16, 128], strides = [1, 1]} : vector<16x384xf32> to vector<16x128xf32>
    %100 = arith.addf %99, %5 : vector<16x128xf32>
    %101 = arith.mulf %96, %100 : vector<16x128xf32>
    %102 = arith.addf %98, %101 : vector<16x128xf32>
    %103 = math.tanh %102 : vector<16x128xf32>
    %cst_38 = arith.constant 1.000000e+00 : f32
    %104 = vector.broadcast %cst_38 : f32 to vector<16x128xf32>
    %105 = arith.subf %104, %97 : vector<16x128xf32>
    %106 = arith.mulf %105, %103 : vector<16x128xf32>
    %107 = arith.mulf %97, %82 : vector<16x128xf32>
    %108 = arith.addf %106, %107 : vector<16x128xf32>
    %c0_39 = arith.constant 0 : index
    %c0_40 = arith.constant 0 : index
    %109 = vector.load %arg11[%c0_39, %c0_40] : memref<16x128xf32, #tpu.memory_space<vmem>>, vector<16x128xf32>
    tpu.vector_store %arg11[%c0_39, %c0_40], %108 {strides = array<i32>} : memref<16x128xf32, #tpu.memory_space<vmem>>, vector<16x128xf32>,
    %cst_41 = arith.constant 0.000000e+00 : f32
    %110 = vector.broadcast %cst_41 : f32 to vector<16x128xf32>
    %111 = arith.select %14, %108, %110 : vector<16x128xi1>, vector<16x128xf32>
    %cst_42 = arith.constant dense<0.000000e+00> : vector<16xf32>
    %112 = vector.multi_reduction <add>, %111, %cst_42 [1] : vector<16x128xf32> to vector<16xf32>
    %113 = vector.shape_cast %112 : vector<16xf32> to vector<16x1xf32>
    %114 = vector.broadcast %cst : f32 to vector<16x1xf32>
    %115 = arith.mulf %113, %114 : vector<16x1xf32>
    %116 = vector.broadcast %115 : vector<16x1xf32> to vector<16x128xf32>
    %117 = arith.subf %111, %116 : vector<16x128xf32>
    %cst_43 = arith.constant 0.000000e+00 : f32
    %118 = vector.broadcast %cst_43 : f32 to vector<16x128xf32>
    %119 = arith.select %14, %117, %118 : vector<16x128xi1>, vector<16x128xf32>
    %120 = arith.mulf %119, %119 : vector<16x128xf32>
    %cst_44 = arith.constant dense<0.000000e+00> : vector<16xf32>
    %121 = vector.multi_reduction <add>, %120, %cst_44 [1] : vector<16x128xf32> to vector<16xf32>
    %122 = vector.shape_cast %121 : vector<16xf32> to vector<16x1xf32>
    %123 = vector.broadcast %cst : f32 to vector<16x1xf32>
    %124 = arith.mulf %122, %123 : vector<16x1xf32>
    %cst_45 = arith.constant 9.99999974E-6 : f32
    %125 = vector.broadcast %cst_45 : f32 to vector<16x1xf32>
    %126 = arith.addf %124, %125 : vector<16x1xf32>
    %127 = math.rsqrt %126 : vector<16x1xf32>
    %128 = vector.broadcast %127 : vector<16x1xf32> to vector<16x128xf32>
    %129 = arith.mulf %119, %128 : vector<16x128xf32>
    %130 = arith.mulf %129, %8 : vector<16x128xf32>
    %131 = arith.addf %130, %11 : vector<16x128xf32>
    %132 = arith.index_cast %76 : i32 to index
    %c0_46 = arith.constant 0 : index
    %c0_47 = arith.constant 0 : index
    %133 = vector.load %arg9[%132, %c0_46, %c0_47] : memref<12x16x128xf32, #tpu.memory_space<vmem>>, vector<1x16x128xf32>
    %134 = vector.shape_cast %133 : vector<1x16x128xf32> to vector<16x128xf32>
    %135 = vector.shape_cast %131 : vector<16x128xf32> to vector<1x16x128xf32>
    tpu.vector_store %arg9[%132, %c0_46, %c0_47], %135 {strides = array<i32>} : memref<12x16x128xf32, #tpu.memory_space<vmem>>, vector<1x16x128xf32>,
    %c2_i32 = arith.constant 2 : i32
    %136 = arith.addi %15, %c2_i32 : i32
    %c0_48 = arith.constant 0 : index
    %c0_49 = arith.constant 0 : index
    %137 = vector.load %arg11[%c0_48, %c0_49] : memref<16x128xf32, #tpu.memory_space<vmem>>, vector<16x128xf32>
    %138 = arith.index_cast %136 : i32 to index
    %c0_50 = arith.constant 0 : index
    %c0_51 = arith.constant 0 : index
    %139 = vector.load %arg3[%138, %c0_50, %c0_51] : memref<12x16x1xf32, #tpu.memory_space<vmem>>, vector<1x16x1xf32>
    %140 = vector.shape_cast %139 : vector<1x16x1xf32> to vector<16x1xf32>
    %141 = vector.broadcast %140 : vector<16x1xf32> to vector<16x128xf32>
    %142 = arith.mulf %137, %141 : vector<16x128xf32>
    %c0_52 = arith.constant 0 : index
    %c0_53 = arith.constant 0 : index
    %143 = vector.load %arg5[%c0_52, %c0_53] : memref<128x384xf32, #tpu.memory_space<vmem>>, vector<128x384xf32>
    %cst_54 = arith.constant dense<0.000000e+00> : vector<16x384xf32>
    %144 = tpu.matmul %142, %143, %cst_54 {dimension_numbers = #tpu.dot_dimension_numbers<[1], [0], [0], [1], [0, 0, 1, 1], [], []>} : vector<16x128xf32>, vector<128x384xf32>, vector<16x384xf32> -> vector<16x384xf32>
    %145 = arith.index_cast %136 : i32 to index
    %c0_55 = arith.constant 0 : index
    %c0_56 = arith.constant 0 : index
    %146 = vector.load %arg2[%145, %c0_55, %c0_56] : memref<12x16x384xf32, #tpu.memory_space<vmem>>, vector<1x16x384xf32>
    %147 = vector.shape_cast %146 : vector<1x16x384xf32> to vector<16x384xf32>
    %148 = vector.extract_strided_slice %147 {offsets = [0, 0], sizes = [16, 256], strides = [1, 1]} : vector<16x384xf32> to vector<16x256xf32>
    %149 = vector.extract_strided_slice %144 {offsets = [0, 0], sizes = [16, 256], strides = [1, 1]} : vector<16x384xf32> to vector<16x256xf32>
    %150 = arith.addf %148, %149 : vector<16x256xf32>
    %151 = arith.negf %150 : vector<16x256xf32>
    %152 = math.exp %151 : vector<16x256xf32>
    %cst_57 = arith.constant 1.000000e+00 : f32
    %153 = vector.broadcast %cst_57 : f32 to vector<16x256xf32>
    %154 = arith.addf %153, %152 : vector<16x256xf32>
    %155 = arith.divf %153, %154 : vector<16x256xf32>
    %156 = vector.extract_strided_slice %155 {offsets = [0, 0], sizes = [16, 128], strides = [1, 1]} : vector<16x256xf32> to vector<16x128xf32>
    %157 = vector.extract_strided_slice %155 {offsets = [0, 128], sizes = [16, 128], strides = [1, 1]} : vector<16x256xf32> to vector<16x128xf32>
    %158 = vector.extract_strided_slice %147 {offsets = [0, 256], sizes = [16, 128], strides = [1, 1]} : vector<16x384xf32> to vector<16x128xf32>
    %159 = vector.extract_strided_slice %144 {offsets = [0, 256], sizes = [16, 128], strides = [1, 1]} : vector<16x384xf32> to vector<16x128xf32>
    %160 = arith.addf %159, %5 : vector<16x128xf32>
    %161 = arith.mulf %156, %160 : vector<16x128xf32>
    %162 = arith.addf %158, %161 : vector<16x128xf32>
    %163 = math.tanh %162 : vector<16x128xf32>
    %cst_58 = arith.constant 1.000000e+00 : f32
    %164 = vector.broadcast %cst_58 : f32 to vector<16x128xf32>
    %165 = arith.subf %164, %157 : vector<16x128xf32>
    %166 = arith.mulf %165, %163 : vector<16x128xf32>
    %167 = arith.mulf %157, %142 : vector<16x128xf32>
    %168 = arith.addf %166, %167 : vector<16x128xf32>
    %c0_59 = arith.constant 0 : index
    %c0_60 = arith.constant 0 : index
    %169 = vector.load %arg11[%c0_59, %c0_60] : memref<16x128xf32, #tpu.memory_space<vmem>>, vector<16x128xf32>
    tpu.vector_store %arg11[%c0_59, %c0_60], %168 {strides = array<i32>} : memref<16x128xf32, #tpu.memory_space<vmem>>, vector<16x128xf32>,
    %cst_61 = arith.constant 0.000000e+00 : f32
    %170 = vector.broadcast %cst_61 : f32 to vector<16x128xf32>
    %171 = arith.select %14, %168, %170 : vector<16x128xi1>, vector<16x128xf32>
    %cst_62 = arith.constant dense<0.000000e+00> : vector<16xf32>
    %172 = vector.multi_reduction <add>, %171, %cst_62 [1] : vector<16x128xf32> to vector<16xf32>
    %173 = vector.shape_cast %172 : vector<16xf32> to vector<16x1xf32>
    %174 = vector.broadcast %cst : f32 to vector<16x1xf32>
    %175 = arith.mulf %173, %174 : vector<16x1xf32>
    %176 = vector.broadcast %175 : vector<16x1xf32> to vector<16x128xf32>
    %177 = arith.subf %171, %176 : vector<16x128xf32>
    %cst_63 = arith.constant 0.000000e+00 : f32
    %178 = vector.broadcast %cst_63 : f32 to vector<16x128xf32>
    %179 = arith.select %14, %177, %178 : vector<16x128xi1>, vector<16x128xf32>
    %180 = arith.mulf %179, %179 : vector<16x128xf32>
    %cst_64 = arith.constant dense<0.000000e+00> : vector<16xf32>
    %181 = vector.multi_reduction <add>, %180, %cst_64 [1] : vector<16x128xf32> to vector<16xf32>
    %182 = vector.shape_cast %181 : vector<16xf32> to vector<16x1xf32>
    %183 = vector.broadcast %cst : f32 to vector<16x1xf32>
    %184 = arith.mulf %182, %183 : vector<16x1xf32>
    %cst_65 = arith.constant 9.99999974E-6 : f32
    %185 = vector.broadcast %cst_65 : f32 to vector<16x1xf32>
    %186 = arith.addf %184, %185 : vector<16x1xf32>
    %187 = math.rsqrt %186 : vector<16x1xf32>
    %188 = vector.broadcast %187 : vector<16x1xf32> to vector<16x128xf32>
    %189 = arith.mulf %179, %188 : vector<16x128xf32>
    %190 = arith.mulf %189, %8 : vector<16x128xf32>
    %191 = arith.addf %190, %11 : vector<16x128xf32>
    %192 = arith.index_cast %136 : i32 to index
    %c0_66 = arith.constant 0 : index
    %c0_67 = arith.constant 0 : index
    %193 = vector.load %arg9[%192, %c0_66, %c0_67] : memref<12x16x128xf32, #tpu.memory_space<vmem>>, vector<1x16x128xf32>
    %194 = vector.shape_cast %193 : vector<1x16x128xf32> to vector<16x128xf32>
    %195 = vector.shape_cast %191 : vector<16x128xf32> to vector<1x16x128xf32>
    tpu.vector_store %arg9[%192, %c0_66, %c0_67], %195 {strides = array<i32>} : memref<12x16x128xf32, #tpu.memory_space<vmem>>, vector<1x16x128xf32>,
    %c3_i32 = arith.constant 3 : i32
    %196 = arith.addi %15, %c3_i32 : i32
    %c0_68 = arith.constant 0 : index
    %c0_69 = arith.constant 0 : index
    %197 = vector.load %arg11[%c0_68, %c0_69] : memref<16x128xf32, #tpu.memory_space<vmem>>, vector<16x128xf32>
    %198 = arith.index_cast %196 : i32 to index
    %c0_70 = arith.constant 0 : index
    %c0_71 = arith.constant 0 : index
    %199 = vector.load %arg3[%198, %c0_70, %c0_71] : memref<12x16x1xf32, #tpu.memory_space<vmem>>, vector<1x16x1xf32>
    %200 = vector.shape_cast %199 : vector<1x16x1xf32> to vector<16x1xf32>
    %201 = vector.broadcast %200 : vector<16x1xf32> to vector<16x128xf32>
    %202 = arith.mulf %197, %201 : vector<16x128xf32>
    %c0_72 = arith.constant 0 : index
    %c0_73 = arith.constant 0 : index
    %203 = vector.load %arg5[%c0_72, %c0_73] : memref<128x384xf32, #tpu.memory_space<vmem>>, vector<128x384xf32>
    %cst_74 = arith.constant dense<0.000000e+00> : vector<16x384xf32>
    %204 = tpu.matmul %202, %203, %cst_74 {dimension_numbers = #tpu.dot_dimension_numbers<[1], [0], [0], [1], [0, 0, 1, 1], [], []>} : vector<16x128xf32>, vector<128x384xf32>, vector<16x384xf32> -> vector<16x384xf32>
    %205 = arith.index_cast %196 : i32 to index
    %c0_75 = arith.constant 0 : index
    %c0_76 = arith.constant 0 : index
    %206 = vector.load %arg2[%205, %c0_75, %c0_76] : memref<12x16x384xf32, #tpu.memory_space<vmem>>, vector<1x16x384xf32>
    %207 = vector.shape_cast %206 : vector<1x16x384xf32> to vector<16x384xf32>
    %208 = vector.extract_strided_slice %207 {offsets = [0, 0], sizes = [16, 256], strides = [1, 1]} : vector<16x384xf32> to vector<16x256xf32>
    %209 = vector.extract_strided_slice %204 {offsets = [0, 0], sizes = [16, 256], strides = [1, 1]} : vector<16x384xf32> to vector<16x256xf32>
    %210 = arith.addf %208, %209 : vector<16x256xf32>
    %211 = arith.negf %210 : vector<16x256xf32>
    %212 = math.exp %211 : vector<16x256xf32>
    %cst_77 = arith.constant 1.000000e+00 : f32
    %213 = vector.broadcast %cst_77 : f32 to vector<16x256xf32>
    %214 = arith.addf %213, %212 : vector<16x256xf32>
    %215 = arith.divf %213, %214 : vector<16x256xf32>
    %216 = vector.extract_strided_slice %215 {offsets = [0, 0], sizes = [16, 128], strides = [1, 1]} : vector<16x256xf32> to vector<16x128xf32>
    %217 = vector.extract_strided_slice %215 {offsets = [0, 128], sizes = [16, 128], strides = [1, 1]} : vector<16x256xf32> to vector<16x128xf32>
    %218 = vector.extract_strided_slice %207 {offsets = [0, 256], sizes = [16, 128], strides = [1, 1]} : vector<16x384xf32> to vector<16x128xf32>
    %219 = vector.extract_strided_slice %204 {offsets = [0, 256], sizes = [16, 128], strides = [1, 1]} : vector<16x384xf32> to vector<16x128xf32>
    %220 = arith.addf %219, %5 : vector<16x128xf32>
    %221 = arith.mulf %216, %220 : vector<16x128xf32>
    %222 = arith.addf %218, %221 : vector<16x128xf32>
    %223 = math.tanh %222 : vector<16x128xf32>
    %cst_78 = arith.constant 1.000000e+00 : f32
    %224 = vector.broadcast %cst_78 : f32 to vector<16x128xf32>
    %225 = arith.subf %224, %217 : vector<16x128xf32>
    %226 = arith.mulf %225, %223 : vector<16x128xf32>
    %227 = arith.mulf %217, %202 : vector<16x128xf32>
    %228 = arith.addf %226, %227 : vector<16x128xf32>
    %c0_79 = arith.constant 0 : index
    %c0_80 = arith.constant 0 : index
    %229 = vector.load %arg11[%c0_79, %c0_80] : memref<16x128xf32, #tpu.memory_space<vmem>>, vector<16x128xf32>
    tpu.vector_store %arg11[%c0_79, %c0_80], %228 {strides = array<i32>} : memref<16x128xf32, #tpu.memory_space<vmem>>, vector<16x128xf32>,
    %cst_81 = arith.constant 0.000000e+00 : f32
    %230 = vector.broadcast %cst_81 : f32 to vector<16x128xf32>
    %231 = arith.select %14, %228, %230 : vector<16x128xi1>, vector<16x128xf32>
    %cst_82 = arith.constant dense<0.000000e+00> : vector<16xf32>
    %232 = vector.multi_reduction <add>, %231, %cst_82 [1] : vector<16x128xf32> to vector<16xf32>
    %233 = vector.shape_cast %232 : vector<16xf32> to vector<16x1xf32>
    %234 = vector.broadcast %cst : f32 to vector<16x1xf32>
    %235 = arith.mulf %233, %234 : vector<16x1xf32>
    %236 = vector.broadcast %235 : vector<16x1xf32> to vector<16x128xf32>
    %237 = arith.subf %231, %236 : vector<16x128xf32>
    %cst_83 = arith.constant 0.000000e+00 : f32
    %238 = vector.broadcast %cst_83 : f32 to vector<16x128xf32>
    %239 = arith.select %14, %237, %238 : vector<16x128xi1>, vector<16x128xf32>
    %240 = arith.mulf %239, %239 : vector<16x128xf32>
    %cst_84 = arith.constant dense<0.000000e+00> : vector<16xf32>
    %241 = vector.multi_reduction <add>, %240, %cst_84 [1] : vector<16x128xf32> to vector<16xf32>
    %242 = vector.shape_cast %241 : vector<16xf32> to vector<16x1xf32>
    %243 = vector.broadcast %cst : f32 to vector<16x1xf32>
    %244 = arith.mulf %242, %243 : vector<16x1xf32>
    %cst_85 = arith.constant 9.99999974E-6 : f32
    %245 = vector.broadcast %cst_85 : f32 to vector<16x1xf32>
    %246 = arith.addf %244, %245 : vector<16x1xf32>
    %247 = math.rsqrt %246 : vector<16x1xf32>
    %248 = vector.broadcast %247 : vector<16x1xf32> to vector<16x128xf32>
    %249 = arith.mulf %239, %248 : vector<16x128xf32>
    %250 = arith.mulf %249, %8 : vector<16x128xf32>
    %251 = arith.addf %250, %11 : vector<16x128xf32>
    %252 = arith.index_cast %196 : i32 to index
    %c0_86 = arith.constant 0 : index
    %c0_87 = arith.constant 0 : index
    %253 = vector.load %arg9[%252, %c0_86, %c0_87] : memref<12x16x128xf32, #tpu.memory_space<vmem>>, vector<1x16x128xf32>
    %254 = vector.shape_cast %253 : vector<1x16x128xf32> to vector<16x128xf32>
    %255 = vector.shape_cast %251 : vector<16x128xf32> to vector<1x16x128xf32>
    tpu.vector_store %arg9[%252, %c0_86, %c0_87], %255 {strides = array<i32>} : memref<12x16x128xf32, #tpu.memory_space<vmem>>, vector<1x16x128xf32>,
    %c4_i32 = arith.constant 4 : i32
    %256 = arith.addi %15, %c4_i32 : i32
    %c0_88 = arith.constant 0 : index
    %c0_89 = arith.constant 0 : index
    %257 = vector.load %arg11[%c0_88, %c0_89] : memref<16x128xf32, #tpu.memory_space<vmem>>, vector<16x128xf32>
    %258 = arith.index_cast %256 : i32 to index
    %c0_90 = arith.constant 0 : index
    %c0_91 = arith.constant 0 : index
    %259 = vector.load %arg3[%258, %c0_90, %c0_91] : memref<12x16x1xf32, #tpu.memory_space<vmem>>, vector<1x16x1xf32>
    %260 = vector.shape_cast %259 : vector<1x16x1xf32> to vector<16x1xf32>
    %261 = vector.broadcast %260 : vector<16x1xf32> to vector<16x128xf32>
    %262 = arith.mulf %257, %261 : vector<16x128xf32>
    %c0_92 = arith.constant 0 : index
    %c0_93 = arith.constant 0 : index
    %263 = vector.load %arg5[%c0_92, %c0_93] : memref<128x384xf32, #tpu.memory_space<vmem>>, vector<128x384xf32>
    %cst_94 = arith.constant dense<0.000000e+00> : vector<16x384xf32>
    %264 = tpu.matmul %262, %263, %cst_94 {dimension_numbers = #tpu.dot_dimension_numbers<[1], [0], [0], [1], [0, 0, 1, 1], [], []>} : vector<16x128xf32>, vector<128x384xf32>, vector<16x384xf32> -> vector<16x384xf32>
    %265 = arith.index_cast %256 : i32 to index
    %c0_95 = arith.constant 0 : index
    %c0_96 = arith.constant 0 : index
    %266 = vector.load %arg2[%265, %c0_95, %c0_96] : memref<12x16x384xf32, #tpu.memory_space<vmem>>, vector<1x16x384xf32>
    %267 = vector.shape_cast %266 : vector<1x16x384xf32> to vector<16x384xf32>
    %268 = vector.extract_strided_slice %267 {offsets = [0, 0], sizes = [16, 256], strides = [1, 1]} : vector<16x384xf32> to vector<16x256xf32>
    %269 = vector.extract_strided_slice %264 {offsets = [0, 0], sizes = [16, 256], strides = [1, 1]} : vector<16x384xf32> to vector<16x256xf32>
    %270 = arith.addf %268, %269 : vector<16x256xf32>
    %271 = arith.negf %270 : vector<16x256xf32>
    %272 = math.exp %271 : vector<16x256xf32>
    %cst_97 = arith.constant 1.000000e+00 : f32
    %273 = vector.broadcast %cst_97 : f32 to vector<16x256xf32>
    %274 = arith.addf %273, %272 : vector<16x256xf32>
    %275 = arith.divf %273, %274 : vector<16x256xf32>
    %276 = vector.extract_strided_slice %275 {offsets = [0, 0], sizes = [16, 128], strides = [1, 1]} : vector<16x256xf32> to vector<16x128xf32>
    %277 = vector.extract_strided_slice %275 {offsets = [0, 128], sizes = [16, 128], strides = [1, 1]} : vector<16x256xf32> to vector<16x128xf32>
    %278 = vector.extract_strided_slice %267 {offsets = [0, 256], sizes = [16, 128], strides = [1, 1]} : vector<16x384xf32> to vector<16x128xf32>
    %279 = vector.extract_strided_slice %264 {offsets = [0, 256], sizes = [16, 128], strides = [1, 1]} : vector<16x384xf32> to vector<16x128xf32>
    %280 = arith.addf %279, %5 : vector<16x128xf32>
    %281 = arith.mulf %276, %280 : vector<16x128xf32>
    %282 = arith.addf %278, %281 : vector<16x128xf32>
    %283 = math.tanh %282 : vector<16x128xf32>
    %cst_98 = arith.constant 1.000000e+00 : f32
    %284 = vector.broadcast %cst_98 : f32 to vector<16x128xf32>
    %285 = arith.subf %284, %277 : vector<16x128xf32>
    %286 = arith.mulf %285, %283 : vector<16x128xf32>
    %287 = arith.mulf %277, %262 : vector<16x128xf32>
    %288 = arith.addf %286, %287 : vector<16x128xf32>
    %c0_99 = arith.constant 0 : index
    %c0_100 = arith.constant 0 : index
    %289 = vector.load %arg11[%c0_99, %c0_100] : memref<16x128xf32, #tpu.memory_space<vmem>>, vector<16x128xf32>
    tpu.vector_store %arg11[%c0_99, %c0_100], %288 {strides = array<i32>} : memref<16x128xf32, #tpu.memory_space<vmem>>, vector<16x128xf32>,
    %cst_101 = arith.constant 0.000000e+00 : f32
    %290 = vector.broadcast %cst_101 : f32 to vector<16x128xf32>
    %291 = arith.select %14, %288, %290 : vector<16x128xi1>, vector<16x128xf32>
    %cst_102 = arith.constant dense<0.000000e+00> : vector<16xf32>
    %292 = vector.multi_reduction <add>, %291, %cst_102 [1] : vector<16x128xf32> to vector<16xf32>
    %293 = vector.shape_cast %292 : vector<16xf32> to vector<16x1xf32>
    %294 = vector.broadcast %cst : f32 to vector<16x1xf32>
    %295 = arith.mulf %293, %294 : vector<16x1xf32>
    %296 = vector.broadcast %295 : vector<16x1xf32> to vector<16x128xf32>
    %297 = arith.subf %291, %296 : vector<16x128xf32>
    %cst_103 = arith.constant 0.000000e+00 : f32
    %298 = vector.broadcast %cst_103 : f32 to vector<16x128xf32>
    %299 = arith.select %14, %297, %298 : vector<16x128xi1>, vector<16x128xf32>
    %300 = arith.mulf %299, %299 : vector<16x128xf32>
    %cst_104 = arith.constant dense<0.000000e+00> : vector<16xf32>
    %301 = vector.multi_reduction <add>, %300, %cst_104 [1] : vector<16x128xf32> to vector<16xf32>
    %302 = vector.shape_cast %301 : vector<16xf32> to vector<16x1xf32>
    %303 = vector.broadcast %cst : f32 to vector<16x1xf32>
    %304 = arith.mulf %302, %303 : vector<16x1xf32>
    %cst_105 = arith.constant 9.99999974E-6 : f32
    %305 = vector.broadcast %cst_105 : f32 to vector<16x1xf32>
    %306 = arith.addf %304, %305 : vector<16x1xf32>
    %307 = math.rsqrt %306 : vector<16x1xf32>
    %308 = vector.broadcast %307 : vector<16x1xf32> to vector<16x128xf32>
    %309 = arith.mulf %299, %308 : vector<16x128xf32>
    %310 = arith.mulf %309, %8 : vector<16x128xf32>
    %311 = arith.addf %310, %11 : vector<16x128xf32>
    %312 = arith.index_cast %256 : i32 to index
    %c0_106 = arith.constant 0 : index
    %c0_107 = arith.constant 0 : index
    %313 = vector.load %arg9[%312, %c0_106, %c0_107] : memref<12x16x128xf32, #tpu.memory_space<vmem>>, vector<1x16x128xf32>
    %314 = vector.shape_cast %313 : vector<1x16x128xf32> to vector<16x128xf32>
    %315 = vector.shape_cast %311 : vector<16x128xf32> to vector<1x16x128xf32>
    tpu.vector_store %arg9[%312, %c0_106, %c0_107], %315 {strides = array<i32>} : memref<12x16x128xf32, #tpu.memory_space<vmem>>, vector<1x16x128xf32>,
    %c5_i32 = arith.constant 5 : i32
    %316 = arith.addi %15, %c5_i32 : i32
    %c0_108 = arith.constant 0 : index
    %c0_109 = arith.constant 0 : index
    %317 = vector.load %arg11[%c0_108, %c0_109] : memref<16x128xf32, #tpu.memory_space<vmem>>, vector<16x128xf32>
    %318 = arith.index_cast %316 : i32 to index
    %c0_110 = arith.constant 0 : index
    %c0_111 = arith.constant 0 : index
    %319 = vector.load %arg3[%318, %c0_110, %c0_111] : memref<12x16x1xf32, #tpu.memory_space<vmem>>, vector<1x16x1xf32>
    %320 = vector.shape_cast %319 : vector<1x16x1xf32> to vector<16x1xf32>
    %321 = vector.broadcast %320 : vector<16x1xf32> to vector<16x128xf32>
    %322 = arith.mulf %317, %321 : vector<16x128xf32>
    %c0_112 = arith.constant 0 : index
    %c0_113 = arith.constant 0 : index
    %323 = vector.load %arg5[%c0_112, %c0_113] : memref<128x384xf32, #tpu.memory_space<vmem>>, vector<128x384xf32>
    %cst_114 = arith.constant dense<0.000000e+00> : vector<16x384xf32>
    %324 = tpu.matmul %322, %323, %cst_114 {dimension_numbers = #tpu.dot_dimension_numbers<[1], [0], [0], [1], [0, 0, 1, 1], [], []>} : vector<16x128xf32>, vector<128x384xf32>, vector<16x384xf32> -> vector<16x384xf32>
    %325 = arith.index_cast %316 : i32 to index
    %c0_115 = arith.constant 0 : index
    %c0_116 = arith.constant 0 : index
    %326 = vector.load %arg2[%325, %c0_115, %c0_116] : memref<12x16x384xf32, #tpu.memory_space<vmem>>, vector<1x16x384xf32>
    %327 = vector.shape_cast %326 : vector<1x16x384xf32> to vector<16x384xf32>
    %328 = vector.extract_strided_slice %327 {offsets = [0, 0], sizes = [16, 256], strides = [1, 1]} : vector<16x384xf32> to vector<16x256xf32>
    %329 = vector.extract_strided_slice %324 {offsets = [0, 0], sizes = [16, 256], strides = [1, 1]} : vector<16x384xf32> to vector<16x256xf32>
    %330 = arith.addf %328, %329 : vector<16x256xf32>
    %331 = arith.negf %330 : vector<16x256xf32>
    %332 = math.exp %331 : vector<16x256xf32>
    %cst_117 = arith.constant 1.000000e+00 : f32
    %333 = vector.broadcast %cst_117 : f32 to vector<16x256xf32>
    %334 = arith.addf %333, %332 : vector<16x256xf32>
    %335 = arith.divf %333, %334 : vector<16x256xf32>
    %336 = vector.extract_strided_slice %335 {offsets = [0, 0], sizes = [16, 128], strides = [1, 1]} : vector<16x256xf32> to vector<16x128xf32>
    %337 = vector.extract_strided_slice %335 {offsets = [0, 128], sizes = [16, 128], strides = [1, 1]} : vector<16x256xf32> to vector<16x128xf32>
    %338 = vector.extract_strided_slice %327 {offsets = [0, 256], sizes = [16, 128], strides = [1, 1]} : vector<16x384xf32> to vector<16x128xf32>
    %339 = vector.extract_strided_slice %324 {offsets = [0, 256], sizes = [16, 128], strides = [1, 1]} : vector<16x384xf32> to vector<16x128xf32>
    %340 = arith.addf %339, %5 : vector<16x128xf32>
    %341 = arith.mulf %336, %340 : vector<16x128xf32>
    %342 = arith.addf %338, %341 : vector<16x128xf32>
    %343 = math.tanh %342 : vector<16x128xf32>
    %cst_118 = arith.constant 1.000000e+00 : f32
    %344 = vector.broadcast %cst_118 : f32 to vector<16x128xf32>
    %345 = arith.subf %344, %337 : vector<16x128xf32>
    %346 = arith.mulf %345, %343 : vector<16x128xf32>
    %347 = arith.mulf %337, %322 : vector<16x128xf32>
    %348 = arith.addf %346, %347 : vector<16x128xf32>
    %c0_119 = arith.constant 0 : index
    %c0_120 = arith.constant 0 : index
    %349 = vector.load %arg11[%c0_119, %c0_120] : memref<16x128xf32, #tpu.memory_space<vmem>>, vector<16x128xf32>
    tpu.vector_store %arg11[%c0_119, %c0_120], %348 {strides = array<i32>} : memref<16x128xf32, #tpu.memory_space<vmem>>, vector<16x128xf32>,
    %cst_121 = arith.constant 0.000000e+00 : f32
    %350 = vector.broadcast %cst_121 : f32 to vector<16x128xf32>
    %351 = arith.select %14, %348, %350 : vector<16x128xi1>, vector<16x128xf32>
    %cst_122 = arith.constant dense<0.000000e+00> : vector<16xf32>
    %352 = vector.multi_reduction <add>, %351, %cst_122 [1] : vector<16x128xf32> to vector<16xf32>
    %353 = vector.shape_cast %352 : vector<16xf32> to vector<16x1xf32>
    %354 = vector.broadcast %cst : f32 to vector<16x1xf32>
    %355 = arith.mulf %353, %354 : vector<16x1xf32>
    %356 = vector.broadcast %355 : vector<16x1xf32> to vector<16x128xf32>
    %357 = arith.subf %351, %356 : vector<16x128xf32>
    %cst_123 = arith.constant 0.000000e+00 : f32
    %358 = vector.broadcast %cst_123 : f32 to vector<16x128xf32>
    %359 = arith.select %14, %357, %358 : vector<16x128xi1>, vector<16x128xf32>
    %360 = arith.mulf %359, %359 : vector<16x128xf32>
    %cst_124 = arith.constant dense<0.000000e+00> : vector<16xf32>
    %361 = vector.multi_reduction <add>, %360, %cst_124 [1] : vector<16x128xf32> to vector<16xf32>
    %362 = vector.shape_cast %361 : vector<16xf32> to vector<16x1xf32>
    %363 = vector.broadcast %cst : f32 to vector<16x1xf32>
    %364 = arith.mulf %362, %363 : vector<16x1xf32>
    %cst_125 = arith.constant 9.99999974E-6 : f32
    %365 = vector.broadcast %cst_125 : f32 to vector<16x1xf32>
    %366 = arith.addf %364, %365 : vector<16x1xf32>
    %367 = math.rsqrt %366 : vector<16x1xf32>
    %368 = vector.broadcast %367 : vector<16x1xf32> to vector<16x128xf32>
    %369 = arith.mulf %359, %368 : vector<16x128xf32>
    %370 = arith.mulf %369, %8 : vector<16x128xf32>
    %371 = arith.addf %370, %11 : vector<16x128xf32>
    %372 = arith.index_cast %316 : i32 to index
    %c0_126 = arith.constant 0 : index
    %c0_127 = arith.constant 0 : index
    %373 = vector.load %arg9[%372, %c0_126, %c0_127] : memref<12x16x128xf32, #tpu.memory_space<vmem>>, vector<1x16x128xf32>
    %374 = vector.shape_cast %373 : vector<1x16x128xf32> to vector<16x128xf32>
    %375 = vector.shape_cast %371 : vector<16x128xf32> to vector<1x16x128xf32>
    tpu.vector_store %arg9[%372, %c0_126, %c0_127], %375 {strides = array<i32>} : memref<12x16x128xf32, #tpu.memory_space<vmem>>, vector<1x16x128xf32>,
    %c6_i32 = arith.constant 6 : i32
    %376 = arith.addi %15, %c6_i32 : i32
    %c0_128 = arith.constant 0 : index
    %c0_129 = arith.constant 0 : index
    %377 = vector.load %arg11[%c0_128, %c0_129] : memref<16x128xf32, #tpu.memory_space<vmem>>, vector<16x128xf32>
    %378 = arith.index_cast %376 : i32 to index
    %c0_130 = arith.constant 0 : index
    %c0_131 = arith.constant 0 : index
    %379 = vector.load %arg3[%378, %c0_130, %c0_131] : memref<12x16x1xf32, #tpu.memory_space<vmem>>, vector<1x16x1xf32>
    %380 = vector.shape_cast %379 : vector<1x16x1xf32> to vector<16x1xf32>
    %381 = vector.broadcast %380 : vector<16x1xf32> to vector<16x128xf32>
    %382 = arith.mulf %377, %381 : vector<16x128xf32>
    %c0_132 = arith.constant 0 : index
    %c0_133 = arith.constant 0 : index
    %383 = vector.load %arg5[%c0_132, %c0_133] : memref<128x384xf32, #tpu.memory_space<vmem>>, vector<128x384xf32>
    %cst_134 = arith.constant dense<0.000000e+00> : vector<16x384xf32>
    %384 = tpu.matmul %382, %383, %cst_134 {dimension_numbers = #tpu.dot_dimension_numbers<[1], [0], [0], [1], [0, 0, 1, 1], [], []>} : vector<16x128xf32>, vector<128x384xf32>, vector<16x384xf32> -> vector<16x384xf32>
    %385 = arith.index_cast %376 : i32 to index
    %c0_135 = arith.constant 0 : index
    %c0_136 = arith.constant 0 : index
    %386 = vector.load %arg2[%385, %c0_135, %c0_136] : memref<12x16x384xf32, #tpu.memory_space<vmem>>, vector<1x16x384xf32>
    %387 = vector.shape_cast %386 : vector<1x16x384xf32> to vector<16x384xf32>
    %388 = vector.extract_strided_slice %387 {offsets = [0, 0], sizes = [16, 256], strides = [1, 1]} : vector<16x384xf32> to vector<16x256xf32>
    %389 = vector.extract_strided_slice %384 {offsets = [0, 0], sizes = [16, 256], strides = [1, 1]} : vector<16x384xf32> to vector<16x256xf32>
    %390 = arith.addf %388, %389 : vector<16x256xf32>
    %391 = arith.negf %390 : vector<16x256xf32>
    %392 = math.exp %391 : vector<16x256xf32>
    %cst_137 = arith.constant 1.000000e+00 : f32
    %393 = vector.broadcast %cst_137 : f32 to vector<16x256xf32>
    %394 = arith.addf %393, %392 : vector<16x256xf32>
    %395 = arith.divf %393, %394 : vector<16x256xf32>
    %396 = vector.extract_strided_slice %395 {offsets = [0, 0], sizes = [16, 128], strides = [1, 1]} : vector<16x256xf32> to vector<16x128xf32>
    %397 = vector.extract_strided_slice %395 {offsets = [0, 128], sizes = [16, 128], strides = [1, 1]} : vector<16x256xf32> to vector<16x128xf32>
    %398 = vector.extract_strided_slice %387 {offsets = [0, 256], sizes = [16, 128], strides = [1, 1]} : vector<16x384xf32> to vector<16x128xf32>
    %399 = vector.extract_strided_slice %384 {offsets = [0, 256], sizes = [16, 128], strides = [1, 1]} : vector<16x384xf32> to vector<16x128xf32>
    %400 = arith.addf %399, %5 : vector<16x128xf32>
    %401 = arith.mulf %396, %400 : vector<16x128xf32>
    %402 = arith.addf %398, %401 : vector<16x128xf32>
    %403 = math.tanh %402 : vector<16x128xf32>
    %cst_138 = arith.constant 1.000000e+00 : f32
    %404 = vector.broadcast %cst_138 : f32 to vector<16x128xf32>
    %405 = arith.subf %404, %397 : vector<16x128xf32>
    %406 = arith.mulf %405, %403 : vector<16x128xf32>
    %407 = arith.mulf %397, %382 : vector<16x128xf32>
    %408 = arith.addf %406, %407 : vector<16x128xf32>
    %c0_139 = arith.constant 0 : index
    %c0_140 = arith.constant 0 : index
    %409 = vector.load %arg11[%c0_139, %c0_140] : memref<16x128xf32, #tpu.memory_space<vmem>>, vector<16x128xf32>
    tpu.vector_store %arg11[%c0_139, %c0_140], %408 {strides = array<i32>} : memref<16x128xf32, #tpu.memory_space<vmem>>, vector<16x128xf32>,
    %cst_141 = arith.constant 0.000000e+00 : f32
    %410 = vector.broadcast %cst_141 : f32 to vector<16x128xf32>
    %411 = arith.select %14, %408, %410 : vector<16x128xi1>, vector<16x128xf32>
    %cst_142 = arith.constant dense<0.000000e+00> : vector<16xf32>
    %412 = vector.multi_reduction <add>, %411, %cst_142 [1] : vector<16x128xf32> to vector<16xf32>
    %413 = vector.shape_cast %412 : vector<16xf32> to vector<16x1xf32>
    %414 = vector.broadcast %cst : f32 to vector<16x1xf32>
    %415 = arith.mulf %413, %414 : vector<16x1xf32>
    %416 = vector.broadcast %415 : vector<16x1xf32> to vector<16x128xf32>
    %417 = arith.subf %411, %416 : vector<16x128xf32>
    %cst_143 = arith.constant 0.000000e+00 : f32
    %418 = vector.broadcast %cst_143 : f32 to vector<16x128xf32>
    %419 = arith.select %14, %417, %418 : vector<16x128xi1>, vector<16x128xf32>
    %420 = arith.mulf %419, %419 : vector<16x128xf32>
    %cst_144 = arith.constant dense<0.000000e+00> : vector<16xf32>
    %421 = vector.multi_reduction <add>, %420, %cst_144 [1] : vector<16x128xf32> to vector<16xf32>
    %422 = vector.shape_cast %421 : vector<16xf32> to vector<16x1xf32>
    %423 = vector.broadcast %cst : f32 to vector<16x1xf32>
    %424 = arith.mulf %422, %423 : vector<16x1xf32>
    %cst_145 = arith.constant 9.99999974E-6 : f32
    %425 = vector.broadcast %cst_145 : f32 to vector<16x1xf32>
    %426 = arith.addf %424, %425 : vector<16x1xf32>
    %427 = math.rsqrt %426 : vector<16x1xf32>
    %428 = vector.broadcast %427 : vector<16x1xf32> to vector<16x128xf32>
    %429 = arith.mulf %419, %428 : vector<16x128xf32>
    %430 = arith.mulf %429, %8 : vector<16x128xf32>
    %431 = arith.addf %430, %11 : vector<16x128xf32>
    %432 = arith.index_cast %376 : i32 to index
    %c0_146 = arith.constant 0 : index
    %c0_147 = arith.constant 0 : index
    %433 = vector.load %arg9[%432, %c0_146, %c0_147] : memref<12x16x128xf32, #tpu.memory_space<vmem>>, vector<1x16x128xf32>
    %434 = vector.shape_cast %433 : vector<1x16x128xf32> to vector<16x128xf32>
    %435 = vector.shape_cast %431 : vector<16x128xf32> to vector<1x16x128xf32>
    tpu.vector_store %arg9[%432, %c0_146, %c0_147], %435 {strides = array<i32>} : memref<12x16x128xf32, #tpu.memory_space<vmem>>, vector<1x16x128xf32>,
    %c7_i32 = arith.constant 7 : i32
    %436 = arith.addi %15, %c7_i32 : i32
    %c0_148 = arith.constant 0 : index
    %c0_149 = arith.constant 0 : index
    %437 = vector.load %arg11[%c0_148, %c0_149] : memref<16x128xf32, #tpu.memory_space<vmem>>, vector<16x128xf32>
    %438 = arith.index_cast %436 : i32 to index
    %c0_150 = arith.constant 0 : index
    %c0_151 = arith.constant 0 : index
    %439 = vector.load %arg3[%438, %c0_150, %c0_151] : memref<12x16x1xf32, #tpu.memory_space<vmem>>, vector<1x16x1xf32>
    %440 = vector.shape_cast %439 : vector<1x16x1xf32> to vector<16x1xf32>
    %441 = vector.broadcast %440 : vector<16x1xf32> to vector<16x128xf32>
    %442 = arith.mulf %437, %441 : vector<16x128xf32>
    %c0_152 = arith.constant 0 : index
    %c0_153 = arith.constant 0 : index
    %443 = vector.load %arg5[%c0_152, %c0_153] : memref<128x384xf32, #tpu.memory_space<vmem>>, vector<128x384xf32>
    %cst_154 = arith.constant dense<0.000000e+00> : vector<16x384xf32>
    %444 = tpu.matmul %442, %443, %cst_154 {dimension_numbers = #tpu.dot_dimension_numbers<[1], [0], [0], [1], [0, 0, 1, 1], [], []>} : vector<16x128xf32>, vector<128x384xf32>, vector<16x384xf32> -> vector<16x384xf32>
    %445 = arith.index_cast %436 : i32 to index
    %c0_155 = arith.constant 0 : index
    %c0_156 = arith.constant 0 : index
    %446 = vector.load %arg2[%445, %c0_155, %c0_156] : memref<12x16x384xf32, #tpu.memory_space<vmem>>, vector<1x16x384xf32>
    %447 = vector.shape_cast %446 : vector<1x16x384xf32> to vector<16x384xf32>
    %448 = vector.extract_strided_slice %447 {offsets = [0, 0], sizes = [16, 256], strides = [1, 1]} : vector<16x384xf32> to vector<16x256xf32>
    %449 = vector.extract_strided_slice %444 {offsets = [0, 0], sizes = [16, 256], strides = [1, 1]} : vector<16x384xf32> to vector<16x256xf32>
    %450 = arith.addf %448, %449 : vector<16x256xf32>
    %451 = arith.negf %450 : vector<16x256xf32>
    %452 = math.exp %451 : vector<16x256xf32>
    %cst_157 = arith.constant 1.000000e+00 : f32
    %453 = vector.broadcast %cst_157 : f32 to vector<16x256xf32>
    %454 = arith.addf %453, %452 : vector<16x256xf32>
    %455 = arith.divf %453, %454 : vector<16x256xf32>
    %456 = vector.extract_strided_slice %455 {offsets = [0, 0], sizes = [16, 128], strides = [1, 1]} : vector<16x256xf32> to vector<16x128xf32>
    %457 = vector.extract_strided_slice %455 {offsets = [0, 128], sizes = [16, 128], strides = [1, 1]} : vector<16x256xf32> to vector<16x128xf32>
    %458 = vector.extract_strided_slice %447 {offsets = [0, 256], sizes = [16, 128], strides = [1, 1]} : vector<16x384xf32> to vector<16x128xf32>
    %459 = vector.extract_strided_slice %444 {offsets = [0, 256], sizes = [16, 128], strides = [1, 1]} : vector<16x384xf32> to vector<16x128xf32>
    %460 = arith.addf %459, %5 : vector<16x128xf32>
    %461 = arith.mulf %456, %460 : vector<16x128xf32>
    %462 = arith.addf %458, %461 : vector<16x128xf32>
    %463 = math.tanh %462 : vector<16x128xf32>
    %cst_158 = arith.constant 1.000000e+00 : f32
    %464 = vector.broadcast %cst_158 : f32 to vector<16x128xf32>
    %465 = arith.subf %464, %457 : vector<16x128xf32>
    %466 = arith.mulf %465, %463 : vector<16x128xf32>
    %467 = arith.mulf %457, %442 : vector<16x128xf32>
    %468 = arith.addf %466, %467 : vector<16x128xf32>
    %c0_159 = arith.constant 0 : index
    %c0_160 = arith.constant 0 : index
    %469 = vector.load %arg11[%c0_159, %c0_160] : memref<16x128xf32, #tpu.memory_space<vmem>>, vector<16x128xf32>
    tpu.vector_store %arg11[%c0_159, %c0_160], %468 {strides = array<i32>} : memref<16x128xf32, #tpu.memory_space<vmem>>, vector<16x128xf32>,
    %cst_161 = arith.constant 0.000000e+00 : f32
    %470 = vector.broadcast %cst_161 : f32 to vector<16x128xf32>
    %471 = arith.select %14, %468, %470 : vector<16x128xi1>, vector<16x128xf32>
    %cst_162 = arith.constant dense<0.000000e+00> : vector<16xf32>
    %472 = vector.multi_reduction <add>, %471, %cst_162 [1] : vector<16x128xf32> to vector<16xf32>
    %473 = vector.shape_cast %472 : vector<16xf32> to vector<16x1xf32>
    %474 = vector.broadcast %cst : f32 to vector<16x1xf32>
    %475 = arith.mulf %473, %474 : vector<16x1xf32>
    %476 = vector.broadcast %475 : vector<16x1xf32> to vector<16x128xf32>
    %477 = arith.subf %471, %476 : vector<16x128xf32>
    %cst_163 = arith.constant 0.000000e+00 : f32
    %478 = vector.broadcast %cst_163 : f32 to vector<16x128xf32>
    %479 = arith.select %14, %477, %478 : vector<16x128xi1>, vector<16x128xf32>
    %480 = arith.mulf %479, %479 : vector<16x128xf32>
    %cst_164 = arith.constant dense<0.000000e+00> : vector<16xf32>
    %481 = vector.multi_reduction <add>, %480, %cst_164 [1] : vector<16x128xf32> to vector<16xf32>
    %482 = vector.shape_cast %481 : vector<16xf32> to vector<16x1xf32>
    %483 = vector.broadcast %cst : f32 to vector<16x1xf32>
    %484 = arith.mulf %482, %483 : vector<16x1xf32>
    %cst_165 = arith.constant 9.99999974E-6 : f32
    %485 = vector.broadcast %cst_165 : f32 to vector<16x1xf32>
    %486 = arith.addf %484, %485 : vector<16x1xf32>
    %487 = math.rsqrt %486 : vector<16x1xf32>
    %488 = vector.broadcast %487 : vector<16x1xf32> to vector<16x128xf32>
    %489 = arith.mulf %479, %488 : vector<16x128xf32>
    %490 = arith.mulf %489, %8 : vector<16x128xf32>
    %491 = arith.addf %490, %11 : vector<16x128xf32>
    %492 = arith.index_cast %436 : i32 to index
    %c0_166 = arith.constant 0 : index
    %c0_167 = arith.constant 0 : index
    %493 = vector.load %arg9[%492, %c0_166, %c0_167] : memref<12x16x128xf32, #tpu.memory_space<vmem>>, vector<1x16x128xf32>
    %494 = vector.shape_cast %493 : vector<1x16x128xf32> to vector<16x128xf32>
    %495 = vector.shape_cast %491 : vector<16x128xf32> to vector<1x16x128xf32>
    tpu.vector_store %arg9[%492, %c0_166, %c0_167], %495 {strides = array<i32>} : memref<12x16x128xf32, #tpu.memory_space<vmem>>, vector<1x16x128xf32>,
    %c1_i32_168 = arith.constant 1 : i32
    %c0_169 = arith.constant 0 : index
    %c0_170 = arith.constant 0 : index
    %496 = vector.load %arg11[%c0_169, %c0_170] : memref<16x128xf32, #tpu.memory_space<vmem>>, vector<16x128xf32>
    %c8 = arith.constant 8 : index
    %c0_171 = arith.constant 0 : index
    %c0_172 = arith.constant 0 : index
    %497 = vector.load %arg3[%c8, %c0_171, %c0_172] : memref<12x16x1xf32, #tpu.memory_space<vmem>>, vector<1x16x1xf32>
    %498 = vector.shape_cast %497 : vector<1x16x1xf32> to vector<16x1xf32>
    %499 = vector.broadcast %498 : vector<16x1xf32> to vector<16x128xf32>
    %500 = arith.mulf %496, %499 : vector<16x128xf32>
    %c0_173 = arith.constant 0 : index
    %c0_174 = arith.constant 0 : index
    %501 = vector.load %arg5[%c0_173, %c0_174] : memref<128x384xf32, #tpu.memory_space<vmem>>, vector<128x384xf32>
    %cst_175 = arith.constant dense<0.000000e+00> : vector<16x384xf32>
    %502 = tpu.matmul %500, %501, %cst_175 {dimension_numbers = #tpu.dot_dimension_numbers<[1], [0], [0], [1], [0, 0, 1, 1], [], []>} : vector<16x128xf32>, vector<128x384xf32>, vector<16x384xf32> -> vector<16x384xf32>
    %c8_176 = arith.constant 8 : index
    %c0_177 = arith.constant 0 : index
    %c0_178 = arith.constant 0 : index
    %503 = vector.load %arg2[%c8_176, %c0_177, %c0_178] : memref<12x16x384xf32, #tpu.memory_space<vmem>>, vector<1x16x384xf32>
    %504 = vector.shape_cast %503 : vector<1x16x384xf32> to vector<16x384xf32>
    %505 = vector.extract_strided_slice %504 {offsets = [0, 0], sizes = [16, 256], strides = [1, 1]} : vector<16x384xf32> to vector<16x256xf32>
    %506 = vector.extract_strided_slice %502 {offsets = [0, 0], sizes = [16, 256], strides = [1, 1]} : vector<16x384xf32> to vector<16x256xf32>
    %507 = arith.addf %505, %506 : vector<16x256xf32>
    %508 = arith.negf %507 : vector<16x256xf32>
    %509 = math.exp %508 : vector<16x256xf32>
    %cst_179 = arith.constant 1.000000e+00 : f32
    %510 = vector.broadcast %cst_179 : f32 to vector<16x256xf32>
    %511 = arith.addf %510, %509 : vector<16x256xf32>
    %512 = arith.divf %510, %511 : vector<16x256xf32>
    %513 = vector.extract_strided_slice %512 {offsets = [0, 0], sizes = [16, 128], strides = [1, 1]} : vector<16x256xf32> to vector<16x128xf32>
    %514 = vector.extract_strided_slice %512 {offsets = [0, 128], sizes = [16, 128], strides = [1, 1]} : vector<16x256xf32> to vector<16x128xf32>
    %515 = vector.extract_strided_slice %504 {offsets = [0, 256], sizes = [16, 128], strides = [1, 1]} : vector<16x384xf32> to vector<16x128xf32>
    %516 = vector.extract_strided_slice %502 {offsets = [0, 256], sizes = [16, 128], strides = [1, 1]} : vector<16x384xf32> to vector<16x128xf32>
    %517 = arith.addf %516, %5 : vector<16x128xf32>
    %518 = arith.mulf %513, %517 : vector<16x128xf32>
    %519 = arith.addf %515, %518 : vector<16x128xf32>
    %520 = math.tanh %519 : vector<16x128xf32>
    %cst_180 = arith.constant 1.000000e+00 : f32
    %521 = vector.broadcast %cst_180 : f32 to vector<16x128xf32>
    %522 = arith.subf %521, %514 : vector<16x128xf32>
    %523 = arith.mulf %522, %520 : vector<16x128xf32>
    %524 = arith.mulf %514, %500 : vector<16x128xf32>
    %525 = arith.addf %523, %524 : vector<16x128xf32>
    %c0_181 = arith.constant 0 : index
    %c0_182 = arith.constant 0 : index
    %526 = vector.load %arg11[%c0_181, %c0_182] : memref<16x128xf32, #tpu.memory_space<vmem>>, vector<16x128xf32>
    tpu.vector_store %arg11[%c0_181, %c0_182], %525 {strides = array<i32>} : memref<16x128xf32, #tpu.memory_space<vmem>>, vector<16x128xf32>,
    %cst_183 = arith.constant 0.000000e+00 : f32
    %527 = vector.broadcast %cst_183 : f32 to vector<16x128xf32>
    %528 = arith.select %14, %525, %527 : vector<16x128xi1>, vector<16x128xf32>
    %cst_184 = arith.constant dense<0.000000e+00> : vector<16xf32>
    %529 = vector.multi_reduction <add>, %528, %cst_184 [1] : vector<16x128xf32> to vector<16xf32>
    %530 = vector.shape_cast %529 : vector<16xf32> to vector<16x1xf32>
    %cst_185 = arith.constant 3.125000e-02 : f32
    %531 = vector.broadcast %cst_185 : f32 to vector<16x1xf32>
    %532 = arith.mulf %530, %531 : vector<16x1xf32>
    %533 = vector.broadcast %532 : vector<16x1xf32> to vector<16x128xf32>
    %534 = arith.subf %528, %533 : vector<16x128xf32>
    %cst_186 = arith.constant 0.000000e+00 : f32
    %535 = vector.broadcast %cst_186 : f32 to vector<16x128xf32>
    %536 = arith.select %14, %534, %535 : vector<16x128xi1>, vector<16x128xf32>
    %537 = arith.mulf %536, %536 : vector<16x128xf32>
    %cst_187 = arith.constant dense<0.000000e+00> : vector<16xf32>
    %538 = vector.multi_reduction <add>, %537, %cst_187 [1] : vector<16x128xf32> to vector<16xf32>
    %539 = vector.shape_cast %538 : vector<16xf32> to vector<16x1xf32>
    %cst_188 = arith.constant 3.125000e-02 : f32
    %540 = vector.broadcast %cst_188 : f32 to vector<16x1xf32>
    %541 = arith.mulf %539, %540 : vector<16x1xf32>
    %cst_189 = arith.constant 9.99999974E-6 : f32
    %542 = vector.broadcast %cst_189 : f32 to vector<16x1xf32>
    %543 = arith.addf %541, %542 : vector<16x1xf32>
    %544 = math.rsqrt %543 : vector<16x1xf32>
    %545 = vector.broadcast %544 : vector<16x1xf32> to vector<16x128xf32>
    %546 = arith.mulf %536, %545 : vector<16x128xf32>
    %547 = arith.mulf %546, %8 : vector<16x128xf32>
    %548 = arith.addf %547, %11 : vector<16x128xf32>
    %c8_190 = arith.constant 8 : index
    %c0_191 = arith.constant 0 : index
    %c0_192 = arith.constant 0 : index
    %549 = vector.load %arg9[%c8_190, %c0_191, %c0_192] : memref<12x16x128xf32, #tpu.memory_space<vmem>>, vector<1x16x128xf32>
    %550 = vector.shape_cast %549 : vector<1x16x128xf32> to vector<16x128xf32>
    %551 = vector.shape_cast %548 : vector<16x128xf32> to vector<1x16x128xf32>
    tpu.vector_store %arg9[%c8_190, %c0_191, %c0_192], %551 {strides = array<i32>} : memref<12x16x128xf32, #tpu.memory_space<vmem>>, vector<1x16x128xf32>,
    %c0_193 = arith.constant 0 : index
    %c0_194 = arith.constant 0 : index
    %552 = vector.load %arg11[%c0_193, %c0_194] : memref<16x128xf32, #tpu.memory_space<vmem>>, vector<16x128xf32>
    %c9 = arith.constant 9 : index
    %c0_195 = arith.constant 0 : index
    %c0_196 = arith.constant 0 : index
    %553 = vector.load %arg3[%c9, %c0_195, %c0_196] : memref<12x16x1xf32, #tpu.memory_space<vmem>>, vector<1x16x1xf32>
    %554 = vector.shape_cast %553 : vector<1x16x1xf32> to vector<16x1xf32>
    %555 = vector.broadcast %554 : vector<16x1xf32> to vector<16x128xf32>
    %556 = arith.mulf %552, %555 : vector<16x128xf32>
    %c0_197 = arith.constant 0 : index
    %c0_198 = arith.constant 0 : index
    %557 = vector.load %arg5[%c0_197, %c0_198] : memref<128x384xf32, #tpu.memory_space<vmem>>, vector<128x384xf32>
    %cst_199 = arith.constant dense<0.000000e+00> : vector<16x384xf32>
    %558 = tpu.matmul %556, %557, %cst_199 {dimension_numbers = #tpu.dot_dimension_numbers<[1], [0], [0], [1], [0, 0, 1, 1], [], []>} : vector<16x128xf32>, vector<128x384xf32>, vector<16x384xf32> -> vector<16x384xf32>
    %c9_200 = arith.constant 9 : index
    %c0_201 = arith.constant 0 : index
    %c0_202 = arith.constant 0 : index
    %559 = vector.load %arg2[%c9_200, %c0_201, %c0_202] : memref<12x16x384xf32, #tpu.memory_space<vmem>>, vector<1x16x384xf32>
    %560 = vector.shape_cast %559 : vector<1x16x384xf32> to vector<16x384xf32>
    %561 = vector.extract_strided_slice %560 {offsets = [0, 0], sizes = [16, 256], strides = [1, 1]} : vector<16x384xf32> to vector<16x256xf32>
    %562 = vector.extract_strided_slice %558 {offsets = [0, 0], sizes = [16, 256], strides = [1, 1]} : vector<16x384xf32> to vector<16x256xf32>
    %563 = arith.addf %561, %562 : vector<16x256xf32>
    %564 = arith.negf %563 : vector<16x256xf32>
    %565 = math.exp %564 : vector<16x256xf32>
    %cst_203 = arith.constant 1.000000e+00 : f32
    %566 = vector.broadcast %cst_203 : f32 to vector<16x256xf32>
    %567 = arith.addf %566, %565 : vector<16x256xf32>
    %568 = arith.divf %566, %567 : vector<16x256xf32>
    %569 = vector.extract_strided_slice %568 {offsets = [0, 0], sizes = [16, 128], strides = [1, 1]} : vector<16x256xf32> to vector<16x128xf32>
    %570 = vector.extract_strided_slice %568 {offsets = [0, 128], sizes = [16, 128], strides = [1, 1]} : vector<16x256xf32> to vector<16x128xf32>
    %571 = vector.extract_strided_slice %560 {offsets = [0, 256], sizes = [16, 128], strides = [1, 1]} : vector<16x384xf32> to vector<16x128xf32>
    %572 = vector.extract_strided_slice %558 {offsets = [0, 256], sizes = [16, 128], strides = [1, 1]} : vector<16x384xf32> to vector<16x128xf32>
    %573 = arith.addf %572, %5 : vector<16x128xf32>
    %574 = arith.mulf %569, %573 : vector<16x128xf32>
    %575 = arith.addf %571, %574 : vector<16x128xf32>
    %576 = math.tanh %575 : vector<16x128xf32>
    %cst_204 = arith.constant 1.000000e+00 : f32
    %577 = vector.broadcast %cst_204 : f32 to vector<16x128xf32>
    %578 = arith.subf %577, %570 : vector<16x128xf32>
    %579 = arith.mulf %578, %576 : vector<16x128xf32>
    %580 = arith.mulf %570, %556 : vector<16x128xf32>
    %581 = arith.addf %579, %580 : vector<16x128xf32>
    %c0_205 = arith.constant 0 : index
    %c0_206 = arith.constant 0 : index
    %582 = vector.load %arg11[%c0_205, %c0_206] : memref<16x128xf32, #tpu.memory_space<vmem>>, vector<16x128xf32>
    tpu.vector_store %arg11[%c0_205, %c0_206], %581 {strides = array<i32>} : memref<16x128xf32, #tpu.memory_space<vmem>>, vector<16x128xf32>,
    %cst_207 = arith.constant 0.000000e+00 : f32
    %583 = vector.broadcast %cst_207 : f32 to vector<16x128xf32>
    %584 = arith.select %14, %581, %583 : vector<16x128xi1>, vector<16x128xf32>
    %cst_208 = arith.constant dense<0.000000e+00> : vector<16xf32>
    %585 = vector.multi_reduction <add>, %584, %cst_208 [1] : vector<16x128xf32> to vector<16xf32>
    %586 = vector.shape_cast %585 : vector<16xf32> to vector<16x1xf32>
    %cst_209 = arith.constant 3.125000e-02 : f32
    %587 = vector.broadcast %cst_209 : f32 to vector<16x1xf32>
    %588 = arith.mulf %586, %587 : vector<16x1xf32>
    %589 = vector.broadcast %588 : vector<16x1xf32> to vector<16x128xf32>
    %590 = arith.subf %584, %589 : vector<16x128xf32>
    %cst_210 = arith.constant 0.000000e+00 : f32
    %591 = vector.broadcast %cst_210 : f32 to vector<16x128xf32>
    %592 = arith.select %14, %590, %591 : vector<16x128xi1>, vector<16x128xf32>
    %593 = arith.mulf %592, %592 : vector<16x128xf32>
    %cst_211 = arith.constant dense<0.000000e+00> : vector<16xf32>
    %594 = vector.multi_reduction <add>, %593, %cst_211 [1] : vector<16x128xf32> to vector<16xf32>
    %595 = vector.shape_cast %594 : vector<16xf32> to vector<16x1xf32>
    %cst_212 = arith.constant 3.125000e-02 : f32
    %596 = vector.broadcast %cst_212 : f32 to vector<16x1xf32>
    %597 = arith.mulf %595, %596 : vector<16x1xf32>
    %cst_213 = arith.constant 9.99999974E-6 : f32
    %598 = vector.broadcast %cst_213 : f32 to vector<16x1xf32>
    %599 = arith.addf %597, %598 : vector<16x1xf32>
    %600 = math.rsqrt %599 : vector<16x1xf32>
    %601 = vector.broadcast %600 : vector<16x1xf32> to vector<16x128xf32>
    %602 = arith.mulf %592, %601 : vector<16x128xf32>
    %603 = arith.mulf %602, %8 : vector<16x128xf32>
    %604 = arith.addf %603, %11 : vector<16x128xf32>
    %c9_214 = arith.constant 9 : index
    %c0_215 = arith.constant 0 : index
    %c0_216 = arith.constant 0 : index
    %605 = vector.load %arg9[%c9_214, %c0_215, %c0_216] : memref<12x16x128xf32, #tpu.memory_space<vmem>>, vector<1x16x128xf32>
    %606 = vector.shape_cast %605 : vector<1x16x128xf32> to vector<16x128xf32>
    %607 = vector.shape_cast %604 : vector<16x128xf32> to vector<1x16x128xf32>
    tpu.vector_store %arg9[%c9_214, %c0_215, %c0_216], %607 {strides = array<i32>} : memref<12x16x128xf32, #tpu.memory_space<vmem>>, vector<1x16x128xf32>,
    %c0_217 = arith.constant 0 : index
    %c0_218 = arith.constant 0 : index
    %608 = vector.load %arg11[%c0_217, %c0_218] : memref<16x128xf32, #tpu.memory_space<vmem>>, vector<16x128xf32>
    %c10 = arith.constant 10 : index
    %c0_219 = arith.constant 0 : index
    %c0_220 = arith.constant 0 : index
    %609 = vector.load %arg3[%c10, %c0_219, %c0_220] : memref<12x16x1xf32, #tpu.memory_space<vmem>>, vector<1x16x1xf32>
    %610 = vector.shape_cast %609 : vector<1x16x1xf32> to vector<16x1xf32>
    %611 = vector.broadcast %610 : vector<16x1xf32> to vector<16x128xf32>
    %612 = arith.mulf %608, %611 : vector<16x128xf32>
    %c0_221 = arith.constant 0 : index
    %c0_222 = arith.constant 0 : index
    %613 = vector.load %arg5[%c0_221, %c0_222] : memref<128x384xf32, #tpu.memory_space<vmem>>, vector<128x384xf32>
    %cst_223 = arith.constant dense<0.000000e+00> : vector<16x384xf32>
    %614 = tpu.matmul %612, %613, %cst_223 {dimension_numbers = #tpu.dot_dimension_numbers<[1], [0], [0], [1], [0, 0, 1, 1], [], []>} : vector<16x128xf32>, vector<128x384xf32>, vector<16x384xf32> -> vector<16x384xf32>
    %c10_224 = arith.constant 10 : index
    %c0_225 = arith.constant 0 : index
    %c0_226 = arith.constant 0 : index
    %615 = vector.load %arg2[%c10_224, %c0_225, %c0_226] : memref<12x16x384xf32, #tpu.memory_space<vmem>>, vector<1x16x384xf32>
    %616 = vector.shape_cast %615 : vector<1x16x384xf32> to vector<16x384xf32>
    %617 = vector.extract_strided_slice %616 {offsets = [0, 0], sizes = [16, 256], strides = [1, 1]} : vector<16x384xf32> to vector<16x256xf32>
    %618 = vector.extract_strided_slice %614 {offsets = [0, 0], sizes = [16, 256], strides = [1, 1]} : vector<16x384xf32> to vector<16x256xf32>
    %619 = arith.addf %617, %618 : vector<16x256xf32>
    %620 = arith.negf %619 : vector<16x256xf32>
    %621 = math.exp %620 : vector<16x256xf32>
    %cst_227 = arith.constant 1.000000e+00 : f32
    %622 = vector.broadcast %cst_227 : f32 to vector<16x256xf32>
    %623 = arith.addf %622, %621 : vector<16x256xf32>
    %624 = arith.divf %622, %623 : vector<16x256xf32>
    %625 = vector.extract_strided_slice %624 {offsets = [0, 0], sizes = [16, 128], strides = [1, 1]} : vector<16x256xf32> to vector<16x128xf32>
    %626 = vector.extract_strided_slice %624 {offsets = [0, 128], sizes = [16, 128], strides = [1, 1]} : vector<16x256xf32> to vector<16x128xf32>
    %627 = vector.extract_strided_slice %616 {offsets = [0, 256], sizes = [16, 128], strides = [1, 1]} : vector<16x384xf32> to vector<16x128xf32>
    %628 = vector.extract_strided_slice %614 {offsets = [0, 256], sizes = [16, 128], strides = [1, 1]} : vector<16x384xf32> to vector<16x128xf32>
    %629 = arith.addf %628, %5 : vector<16x128xf32>
    %630 = arith.mulf %625, %629 : vector<16x128xf32>
    %631 = arith.addf %627, %630 : vector<16x128xf32>
    %632 = math.tanh %631 : vector<16x128xf32>
    %cst_228 = arith.constant 1.000000e+00 : f32
    %633 = vector.broadcast %cst_228 : f32 to vector<16x128xf32>
    %634 = arith.subf %633, %626 : vector<16x128xf32>
    %635 = arith.mulf %634, %632 : vector<16x128xf32>
    %636 = arith.mulf %626, %612 : vector<16x128xf32>
    %637 = arith.addf %635, %636 : vector<16x128xf32>
    %c0_229 = arith.constant 0 : index
    %c0_230 = arith.constant 0 : index
    %638 = vector.load %arg11[%c0_229, %c0_230] : memref<16x128xf32, #tpu.memory_space<vmem>>, vector<16x128xf32>
    tpu.vector_store %arg11[%c0_229, %c0_230], %637 {strides = array<i32>} : memref<16x128xf32, #tpu.memory_space<vmem>>, vector<16x128xf32>,
    %cst_231 = arith.constant 0.000000e+00 : f32
    %639 = vector.broadcast %cst_231 : f32 to vector<16x128xf32>
    %640 = arith.select %14, %637, %639 : vector<16x128xi1>, vector<16x128xf32>
    %cst_232 = arith.constant dense<0.000000e+00> : vector<16xf32>
    %641 = vector.multi_reduction <add>, %640, %cst_232 [1] : vector<16x128xf32> to vector<16xf32>
    %642 = vector.shape_cast %641 : vector<16xf32> to vector<16x1xf32>
    %cst_233 = arith.constant 3.125000e-02 : f32
    %643 = vector.broadcast %cst_233 : f32 to vector<16x1xf32>
    %644 = arith.mulf %642, %643 : vector<16x1xf32>
    %645 = vector.broadcast %644 : vector<16x1xf32> to vector<16x128xf32>
    %646 = arith.subf %640, %645 : vector<16x128xf32>
    %cst_234 = arith.constant 0.000000e+00 : f32
    %647 = vector.broadcast %cst_234 : f32 to vector<16x128xf32>
    %648 = arith.select %14, %646, %647 : vector<16x128xi1>, vector<16x128xf32>
    %649 = arith.mulf %648, %648 : vector<16x128xf32>
    %cst_235 = arith.constant dense<0.000000e+00> : vector<16xf32>
    %650 = vector.multi_reduction <add>, %649, %cst_235 [1] : vector<16x128xf32> to vector<16xf32>
    %651 = vector.shape_cast %650 : vector<16xf32> to vector<16x1xf32>
    %cst_236 = arith.constant 3.125000e-02 : f32
    %652 = vector.broadcast %cst_236 : f32 to vector<16x1xf32>
    %653 = arith.mulf %651, %652 : vector<16x1xf32>
    %cst_237 = arith.constant 9.99999974E-6 : f32
    %654 = vector.broadcast %cst_237 : f32 to vector<16x1xf32>
    %655 = arith.addf %653, %654 : vector<16x1xf32>
    %656 = math.rsqrt %655 : vector<16x1xf32>
    %657 = vector.broadcast %656 : vector<16x1xf32> to vector<16x128xf32>
    %658 = arith.mulf %648, %657 : vector<16x128xf32>
    %659 = arith.mulf %658, %8 : vector<16x128xf32>
    %660 = arith.addf %659, %11 : vector<16x128xf32>
    %c10_238 = arith.constant 10 : index
    %c0_239 = arith.constant 0 : index
    %c0_240 = arith.constant 0 : index
    %661 = vector.load %arg9[%c10_238, %c0_239, %c0_240] : memref<12x16x128xf32, #tpu.memory_space<vmem>>, vector<1x16x128xf32>
    %662 = vector.shape_cast %661 : vector<1x16x128xf32> to vector<16x128xf32>
    %663 = vector.shape_cast %660 : vector<16x128xf32> to vector<1x16x128xf32>
    tpu.vector_store %arg9[%c10_238, %c0_239, %c0_240], %663 {strides = array<i32>} : memref<12x16x128xf32, #tpu.memory_space<vmem>>, vector<1x16x128xf32>,
    %c0_241 = arith.constant 0 : index
    %c0_242 = arith.constant 0 : index
    %664 = vector.load %arg11[%c0_241, %c0_242] : memref<16x128xf32, #tpu.memory_space<vmem>>, vector<16x128xf32>
    %c11 = arith.constant 11 : index
    %c0_243 = arith.constant 0 : index
    %c0_244 = arith.constant 0 : index
    %665 = vector.load %arg3[%c11, %c0_243, %c0_244] : memref<12x16x1xf32, #tpu.memory_space<vmem>>, vector<1x16x1xf32>
    %666 = vector.shape_cast %665 : vector<1x16x1xf32> to vector<16x1xf32>
    %667 = vector.broadcast %666 : vector<16x1xf32> to vector<16x128xf32>
    %668 = arith.mulf %664, %667 : vector<16x128xf32>
    %c0_245 = arith.constant 0 : index
    %c0_246 = arith.constant 0 : index
    %669 = vector.load %arg5[%c0_245, %c0_246] : memref<128x384xf32, #tpu.memory_space<vmem>>, vector<128x384xf32>
    %cst_247 = arith.constant dense<0.000000e+00> : vector<16x384xf32>
    %670 = tpu.matmul %668, %669, %cst_247 {dimension_numbers = #tpu.dot_dimension_numbers<[1], [0], [0], [1], [0, 0, 1, 1], [], []>} : vector<16x128xf32>, vector<128x384xf32>, vector<16x384xf32> -> vector<16x384xf32>
    %c11_248 = arith.constant 11 : index
    %c0_249 = arith.constant 0 : index
    %c0_250 = arith.constant 0 : index
    %671 = vector.load %arg2[%c11_248, %c0_249, %c0_250] : memref<12x16x384xf32, #tpu.memory_space<vmem>>, vector<1x16x384xf32>
    %672 = vector.shape_cast %671 : vector<1x16x384xf32> to vector<16x384xf32>
    %673 = vector.extract_strided_slice %672 {offsets = [0, 0], sizes = [16, 256], strides = [1, 1]} : vector<16x384xf32> to vector<16x256xf32>
    %674 = vector.extract_strided_slice %670 {offsets = [0, 0], sizes = [16, 256], strides = [1, 1]} : vector<16x384xf32> to vector<16x256xf32>
    %675 = arith.addf %673, %674 : vector<16x256xf32>
    %676 = arith.negf %675 : vector<16x256xf32>
    %677 = math.exp %676 : vector<16x256xf32>
    %cst_251 = arith.constant 1.000000e+00 : f32
    %678 = vector.broadcast %cst_251 : f32 to vector<16x256xf32>
    %679 = arith.addf %678, %677 : vector<16x256xf32>
    %680 = arith.divf %678, %679 : vector<16x256xf32>
    %681 = vector.extract_strided_slice %680 {offsets = [0, 0], sizes = [16, 128], strides = [1, 1]} : vector<16x256xf32> to vector<16x128xf32>
    %682 = vector.extract_strided_slice %680 {offsets = [0, 128], sizes = [16, 128], strides = [1, 1]} : vector<16x256xf32> to vector<16x128xf32>
    %683 = vector.extract_strided_slice %672 {offsets = [0, 256], sizes = [16, 128], strides = [1, 1]} : vector<16x384xf32> to vector<16x128xf32>
    %684 = vector.extract_strided_slice %670 {offsets = [0, 256], sizes = [16, 128], strides = [1, 1]} : vector<16x384xf32> to vector<16x128xf32>
    %685 = arith.addf %684, %5 : vector<16x128xf32>
    %686 = arith.mulf %681, %685 : vector<16x128xf32>
    %687 = arith.addf %683, %686 : vector<16x128xf32>
    %688 = math.tanh %687 : vector<16x128xf32>
    %cst_252 = arith.constant 1.000000e+00 : f32
    %689 = vector.broadcast %cst_252 : f32 to vector<16x128xf32>
    %690 = arith.subf %689, %682 : vector<16x128xf32>
    %691 = arith.mulf %690, %688 : vector<16x128xf32>
    %692 = arith.mulf %682, %668 : vector<16x128xf32>
    %693 = arith.addf %691, %692 : vector<16x128xf32>
    %c0_253 = arith.constant 0 : index
    %c0_254 = arith.constant 0 : index
    %694 = vector.load %arg11[%c0_253, %c0_254] : memref<16x128xf32, #tpu.memory_space<vmem>>, vector<16x128xf32>
    tpu.vector_store %arg11[%c0_253, %c0_254], %693 {strides = array<i32>} : memref<16x128xf32, #tpu.memory_space<vmem>>, vector<16x128xf32>,
    %cst_255 = arith.constant 0.000000e+00 : f32
    %695 = vector.broadcast %cst_255 : f32 to vector<16x128xf32>
    %696 = arith.select %14, %693, %695 : vector<16x128xi1>, vector<16x128xf32>
    %cst_256 = arith.constant dense<0.000000e+00> : vector<16xf32>
    %697 = vector.multi_reduction <add>, %696, %cst_256 [1] : vector<16x128xf32> to vector<16xf32>
    %698 = vector.shape_cast %697 : vector<16xf32> to vector<16x1xf32>
    %cst_257 = arith.constant 3.125000e-02 : f32
    %699 = vector.broadcast %cst_257 : f32 to vector<16x1xf32>
    %700 = arith.mulf %698, %699 : vector<16x1xf32>
    %701 = vector.broadcast %700 : vector<16x1xf32> to vector<16x128xf32>
    %702 = arith.subf %696, %701 : vector<16x128xf32>
    %cst_258 = arith.constant 0.000000e+00 : f32
    %703 = vector.broadcast %cst_258 : f32 to vector<16x128xf32>
    %704 = arith.select %14, %702, %703 : vector<16x128xi1>, vector<16x128xf32>
    %705 = arith.mulf %704, %704 : vector<16x128xf32>
    %cst_259 = arith.constant dense<0.000000e+00> : vector<16xf32>
    %706 = vector.multi_reduction <add>, %705, %cst_259 [1] : vector<16x128xf32> to vector<16xf32>
    %707 = vector.shape_cast %706 : vector<16xf32> to vector<16x1xf32>
    %cst_260 = arith.constant 3.125000e-02 : f32
    %708 = vector.broadcast %cst_260 : f32 to vector<16x1xf32>
    %709 = arith.mulf %707, %708 : vector<16x1xf32>
    %cst_261 = arith.constant 9.99999974E-6 : f32
    %710 = vector.broadcast %cst_261 : f32 to vector<16x1xf32>
    %711 = arith.addf %709, %710 : vector<16x1xf32>
    %712 = math.rsqrt %711 : vector<16x1xf32>
    %713 = vector.broadcast %712 : vector<16x1xf32> to vector<16x128xf32>
    %714 = arith.mulf %704, %713 : vector<16x128xf32>
    %715 = arith.mulf %714, %8 : vector<16x128xf32>
    %716 = arith.addf %715, %11 : vector<16x128xf32>
    %c11_262 = arith.constant 11 : index
    %c0_263 = arith.constant 0 : index
    %c0_264 = arith.constant 0 : index
    %717 = vector.load %arg9[%c11_262, %c0_263, %c0_264] : memref<12x16x128xf32, #tpu.memory_space<vmem>>, vector<1x16x128xf32>
    %718 = vector.shape_cast %717 : vector<1x16x128xf32> to vector<16x128xf32>
    %719 = vector.shape_cast %716 : vector<16x128xf32> to vector<1x16x128xf32>
    tpu.vector_store %arg9[%c11_262, %c0_263, %c0_264], %719 {strides = array<i32>} : memref<12x16x128xf32, #tpu.memory_space<vmem>>, vector<1x16x128xf32>,
    %c0_i32_265 = arith.constant 0 : i32
    %720 = arith.cmpi eq, %arg1, %c0_i32_265 : i32
    %721 = arith.extui %720 : i1 to i32
    %c0_i32_266 = arith.constant 0 : i32
    %722 = arith.cmpi ne, %721, %c0_i32_266 : i32
    scf.if %722 {
      %c0_267 = arith.constant 0 : index
      %c0_268 = arith.constant 0 : index
      %723 = vector.load %arg11[%c0_267, %c0_268] : memref<16x128xf32, #tpu.memory_space<vmem>>, vector<16x128xf32>
      %c0_269 = arith.constant 0 : index
      %c0_270 = arith.constant 0 : index
      %724 = vector.load %arg10[%c0_269, %c0_270] : memref<16x128xf32, #tpu.memory_space<vmem>>, vector<16x128xf32>
      tpu.vector_store %arg10[%c0_269, %c0_270], %723 {strides = array<i32>} : memref<16x128xf32, #tpu.memory_space<vmem>>, vector<16x128xf32>,
    } else {
    }
    return
  }
  func.func @transform_0(%arg0: i32, %arg1: i32) -> (i32, i32, i32) {
    %c0_i32 = arith.constant 0 : i32
    %c0_i32_0 = arith.constant 0 : i32
    return %arg1, %arg0, %c0_i32 : i32, i32, i32
  }
  func.func @transform_1(%arg0: i32, %arg1: i32) -> (i32, i32, i32) {
    %c0_i32 = arith.constant 0 : i32
    %c0_i32_0 = arith.constant 0 : i32
    return %arg1, %arg0, %c0_i32 : i32, i32, i32
  }
  func.func @transform_2(%arg0: i32, %arg1: i32) -> (i32, i32) {
    %c0_i32 = arith.constant 0 : i32
    %c0_i32_0 = arith.constant 0 : i32
    return %arg0, %c0_i32 : i32, i32
  }
  func.func @transform_3(%arg0: i32, %arg1: i32) -> (i32, i32) {
    %c0_i32 = arith.constant 0 : i32
    %c0_i32_0 = arith.constant 0 : i32
    %c0_i32_1 = arith.constant 0 : i32
    return %c0_i32, %c0_i32_0 : i32, i32
  }
  func.func @transform_4(%arg0: i32, %arg1: i32) -> (i32, i32) {
    %c0_i32 = arith.constant 0 : i32
    %c0_i32_0 = arith.constant 0 : i32
    %c0_i32_1 = arith.constant 0 : i32
    return %c0_i32, %c0_i32_0 : i32, i32
  }
  func.func @transform_5(%arg0: i32, %arg1: i32) -> (i32, i32) {
    %c0_i32 = arith.constant 0 : i32
    %c0_i32_0 = arith.constant 0 : i32
    %c0_i32_1 = arith.constant 0 : i32
    return %c0_i32, %c0_i32_0 : i32, i32
  }
  func.func @transform_6(%arg0: i32, %arg1: i32) -> (i32, i32) {
    %c0_i32 = arith.constant 0 : i32
    %c0_i32_0 = arith.constant 0 : i32
    %c0_i32_1 = arith.constant 0 : i32
    return %c0_i32, %c0_i32_0 : i32, i32
  }
  func.func @transform_7(%arg0: i32, %arg1: i32) -> (i32, i32, i32) {
    %c0_i32 = arith.constant 0 : i32
    %c0_i32_0 = arith.constant 0 : i32
    return %arg1, %arg0, %c0_i32 : i32, i32, i32
  }
  func.func @transform_8(%arg0: i32, %arg1: i32) -> (i32, i32) {
    %c0_i32 = arith.constant 0 : i32
    %c0_i32_0 = arith.constant 0 : i32
    return %arg0, %c0_i32 : i32, i32
  }
}

</mosaic_0001>

<llo_original>
// kernel: gru_module_forward.1
$region0: #{gru_module_forward.1}
  #allocation0 [shape = 'u32[]', space=smem, size = 0x4, offset = 0x4, fixed_abs, tag = 'smem constant byte address 0x4 - core index']
  #allocation1 [shape = 'u32[144,128]{1,0:T(1,128)}', space=vmem, size = 0x12000, scoped, tag = 'internal scratch']
  #allocation2 [shape = 'f32[16,128]{1,0:T(8,128)}', space=vmem, size = 0x2000, scoped, tag = 'scratch operand']
  %s0 = inlined_call_operand.vmem [shape: f32[12,16,384], index: 0, kind: input, shape index: {}]
  %s1 = inlined_call_operand.vmem [shape: f32[12,16,1], index: 1, kind: input, shape index: {}]
  %s2 = inlined_call_operand.vmem [shape: f32[16,128], index: 2, kind: input, shape index: {}]
  %s3 = inlined_call_operand.vmem [shape: f32[128,384], index: 3, kind: input, shape index: {}]
  %s4 = inlined_call_operand.vmem [shape: f32[1,128], index: 4, kind: input, shape index: {}]
  %s5 = inlined_call_operand.vmem [shape: f32[1,128], index: 5, kind: input, shape index: {}]
  %s6 = inlined_call_operand.vmem [shape: f32[1,128], index: 6, kind: input, shape index: {}]
  %s7 = inlined_call_operand.hbm [shape: f32[12,16,128], index: 7, kind: output, shape index: {0}]
  %s8 = inlined_call_operand.vmem [shape: f32[16,128], index: 8, kind: output, shape index: {1}]
  %9 = xla_tuple %s7, %s8
  %s10 = sld [smem:[#allocation0]]
  $region54: #{gru_module_forward.1} parent=0
    _
  %s12 = ssub.s32 1, %s10
  %s13 = scalar_select 0, %s12, %s10
  $region1: #{gru_module_forward.1} parent=0
    #allocation3 [shape = 'u8[98304]{0}', space=vmem, size = 0x18000, scoped, tag = 'output window, operand 0, single buffered']
    #allocation4 [shape = 's32[1]{0}', space=sflag, size = 0x4, scoped, tag = 'scoped memory for gru_module_forward.1']
    %14 = vsyncpa [#allocation4], 0
    // Predicated region
    $region2: #{gru_module_forward.1} parent=1 // pred_check
      _
    $region3: #{gru_module_forward.1} parent=1 // pred_check_branch
      %16 = sbr.rel (0) target = $region5
    $region4: #{gru_module_forward.1} parent=1 // pred_region
      _
    $region5: #{gru_module_forward.1} parent=1 // pred_fallthru
      _
    // Predicated region
    $region6: #{gru_module_forward.1} parent=1 // pred_check
      _
    $region7: #{gru_module_forward.1} parent=1 // pred_check_branch
      %18 = sbr.rel (0) target = $region9
    $region8: #{gru_module_forward.1} parent=1 // pred_region
      _
    $region9: #{gru_module_forward.1} parent=1 // pred_fallthru
      _
    // Predicated region
    $region10: #{gru_module_forward.1} parent=1 // pred_check
      _
    $region11: #{gru_module_forward.1} parent=1 // pred_check_branch
      %20 = sbr.rel (0) target = $region13
    $region12: #{gru_module_forward.1} parent=1 // pred_region
      _
    $region13: #{gru_module_forward.1} parent=1 // pred_fallthru
      _
    // Predicated region
    $region14: #{gru_module_forward.1} parent=1 // pred_check
      _
    $region15: #{gru_module_forward.1} parent=1 // pred_check_branch
      %22 = sbr.rel (0) target = $region17
    $region16: #{gru_module_forward.1} parent=1 // pred_region
      _
    $region17: #{gru_module_forward.1} parent=1 // pred_fallthru
      _
    // Predicated region
    $region18: #{gru_module_forward.1} parent=1 // pred_check
      _
    $region19: #{gru_module_forward.1} parent=1 // pred_check_branch
      %24 = sbr.rel (0) target = $region21
    $region20: #{gru_module_forward.1} parent=1 // pred_region
      _
    $region21: #{gru_module_forward.1} parent=1 // pred_fallthru
      _
    // Predicated region
    $region22: #{gru_module_forward.1} parent=1 // pred_check
      _
    $region23: #{gru_module_forward.1} parent=1 // pred_check_branch
      %26 = sbr.rel (0) target = $region25
    $region24: #{gru_module_forward.1} parent=1 // pred_region
      _
    $region25: #{gru_module_forward.1} parent=1 // pred_fallthru
      _
    // Predicated region
    $region26: #{gru_module_forward.1} parent=1 // pred_check
      _
    $region27: #{gru_module_forward.1} parent=1 // pred_check_branch
      %28 = sbr.rel (0) target = $region29
    $region28: #{gru_module_forward.1} parent=1 // pred_region
      _
    $region29: #{gru_module_forward.1} parent=1 // pred_fallthru
      _
    %p29 = scmp.eq.s32.totalorder 0, 0
    // Predicated region
    $region30: #{gru_module_forward.1} parent=1 // pred_check
      %p30 = pneg %p29
    $region31: #{gru_module_forward.1} parent=1 // pred_check_branch
      %32 = sbr.rel (%p30) target = $region33
    $region32: #{gru_module_forward.1} parent=1 // pred_region
      %v33 = vld [vmem:[%s2] sm:$0xff]
      %v34 = vld [vmem:[%s2 + $0x8] sm:$0xff]
      %35 = vst [vmem:[#allocation2] sm:$0xff] %v33
      %36 = vst [vmem:[#allocation2 + $0x8] sm:$0xff] %v34
    $region33: #{gru_module_forward.1} parent=1 // pred_fallthru
      _
    %v37 = vld [vmem:[%s4] sm:$0x1]
    %v39 = vlaneseq
    %v40 = vshrl.u32 %v39, 7
    %v41 = vsub.s32 0, %v40
    %v42 = vrot.slane %v37, %v41
    %v44 = vld [vmem:[%s5] sm:$0x1]
    %v46 = vlaneseq
    %v47 = vshrl.u32 %v46, 7
    %v48 = vsub.s32 0, %v47
    %v49 = vrot.slane %v44, %v48
    %v51 = vld [vmem:[%s6] sm:$0x1]
    %v53 = vlaneseq
    %v54 = vshrl.u32 %v53, 7
    %v55 = vsub.s32 0, %v54
    %v56 = vrot.slane %v51, %v55
    %v58 = vlaneseq
    %v59 = vand.u32 %v58, 127
    %vm60 = vcmp.lt.s32.totalorder %v59, 32
    %v61 = vld [vmem:[#allocation2] sm:$0xff]
    %v62 = vld [vmem:[#allocation2 + $0x8] sm:$0xff]
    %v63 = vld [vmem:[%s1] sm:$0xff]
    %v64 = vld [vmem:[%s1 + $0x8] sm:$0xff]
    %66 = vset.pattern.permute.xlu0 0
    %67 = vperm.xlu0 %66, %v63
    %v68 = vpop.permute.xlu0 %67
    %71 = vset.pattern.permute.xlu0 0
    %72 = vperm.xlu0 %71, %v64
    %v73 = vpop.permute.xlu0 %72
    %v75 = vmul.f32 %v61, %v68
    %v76 = vmul.f32 %v62, %v73
    %v77 = vld [vmem:[%s3] sm:$0xff]
    %v78 = vld [vmem:[%s3 + $0x8] sm:$0xff]
    %v79 = vld [vmem:[%s3 + $0x10] sm:$0xff]
    %v80 = vld [vmem:[%s3 + $0x18] sm:$0xff]
    %v81 = vld [vmem:[%s3 + $0x20] sm:$0xff]
    %v82 = vld [vmem:[%s3 + $0x28] sm:$0xff]
    %v83 = vld [vmem:[%s3 + $0x30] sm:$0xff]
    %v84 = vld [vmem:[%s3 + $0x38] sm:$0xff]
    %v85 = vld [vmem:[%s3 + $0x40] sm:$0xff]
    %v86 = vld [vmem:[%s3 + $0x48] sm:$0xff]
    %v87 = vld [vmem:[%s3 + $0x50] sm:$0xff]
    %v88 = vld [vmem:[%s3 + $0x58] sm:$0xff]
    %v89 = vld [vmem:[%s3 + $0x60] sm:$0xff]
    %v90 = vld [vmem:[%s3 + $0x68] sm:$0xff]
    %v91 = vld [vmem:[%s3 + $0x70] sm:$0xff]
    %v92 = vld [vmem:[%s3 + $0x78] sm:$0xff]
    %v93 = vld [vmem:[%s3 + $0x80] sm:$0xff]
    %v94 = vld [vmem:[%s3 + $0x88] sm:$0xff]
    %v95 = vld [vmem:[%s3 + $0x90] sm:$0xff]
    %v96 = vld [vmem:[%s3 + $0x98] sm:$0xff]
    %v97 = vld [vmem:[%s3 + $0xa0] sm:$0xff]
    %v98 = vld [vmem:[%s3 + $0xa8] sm:$0xff]
    %v99 = vld [vmem:[%s3 + $0xb0] sm:$0xff]
    %v100 = vld [vmem:[%s3 + $0xb8] sm:$0xff]
    %v101 = vld [vmem:[%s3 + $0xc0] sm:$0xff]
    %v102 = vld [vmem:[%s3 + $0xc8] sm:$0xff]
    %v103 = vld [vmem:[%s3 + $0xd0] sm:$0xff]
    %v104 = vld [vmem:[%s3 + $0xd8] sm:$0xff]
    %v105 = vld [vmem:[%s3 + $0xe0] sm:$0xff]
    %v106 = vld [vmem:[%s3 + $0xe8] sm:$0xff]
    %v107 = vld [vmem:[%s3 + $0xf0] sm:$0xff]
    %v108 = vld [vmem:[%s3 + $0xf8] sm:$0xff]
    %v109 = vld [vmem:[%s3 + $0x100] sm:$0xff]
    %v110 = vld [vmem:[%s3 + $0x108] sm:$0xff]
    %v111 = vld [vmem:[%s3 + $0x110] sm:$0xff]
    %v112 = vld [vmem:[%s3 + $0x118] sm:$0xff]
    %v113 = vld [vmem:[%s3 + $0x120] sm:$0xff]
    %v114 = vld [vmem:[%s3 + $0x128] sm:$0xff]
    %v115 = vld [vmem:[%s3 + $0x130] sm:$0xff]
    %v116 = vld [vmem:[%s3 + $0x138] sm:$0xff]
    %v117 = vld [vmem:[%s3 + $0x140] sm:$0xff]
    %v118 = vld [vmem:[%s3 + $0x148] sm:$0xff]
    %v119 = vld [vmem:[%s3 + $0x150] sm:$0xff]
    %v120 = vld [vmem:[%s3 + $0x158] sm:$0xff]
    %v121 = vld [vmem:[%s3 + $0x160] sm:$0xff]
    %v122 = vld [vmem:[%s3 + $0x168] sm:$0xff]
    %v123 = vld [vmem:[%s3 + $0x170] sm:$0xff]
    %v124 = vld [vmem:[%s3 + $0x178] sm:$0xff]
    %125 = vmatprep.subr.mxu0 %v78
    %126 = vmatpush1.msra.mxu0 %v77
    %127 = vmatprep.subr.mxu0 %v81
    %128 = vmatpush1.msra.mxu0 %v80
    %129 = vmatprep.subr.mxu0 %v84
    %130 = vmatpush1.msra.mxu0 %v83
    %131 = vmatprep.subr.mxu0 %v87
    %132 = vmatpush1.msra.mxu0 %v86
    %133 = vmatprep.subr.mxu0 %v90
    %134 = vmatpush1.msra.mxu0 %v89
    %135 = vmatprep.subr.mxu0 %v93
    %136 = vmatpush1.msra.mxu0 %v92
    %137 = vmatprep.subr.mxu0 %v96
    %138 = vmatpush1.msra.mxu0 %v95
    %139 = vmatprep.subr.mxu0 %v99
    %140 = vmatpush1.msra.mxu0 %v98
    %141 = vmatprep.subr.mxu0 %v102
    %142 = vmatpush1.msra.mxu0 %v101
    %143 = vmatprep.subr.mxu0 %v105
    %144 = vmatpush1.msra.mxu0 %v104
    %145 = vmatprep.subr.mxu0 %v108
    %146 = vmatpush1.msra.mxu0 %v107
    %147 = vmatprep.subr.mxu0 %v111
    %148 = vmatpush1.msra.mxu0 %v110
    %149 = vmatprep.subr.mxu0 %v114
    %150 = vmatpush1.msra.mxu0 %v113
    %151 = vmatprep.subr.mxu0 %v117
    %152 = vmatpush1.msra.mxu0 %v116
    %153 = vmatprep.subr.mxu0 %v120
    %154 = vmatpush1.msra.mxu0 %v119
    %155 = vmatprep.subr.mxu0 %v123
    %156 = vmatpush1.msra.mxu0 %v122
    %157 = vmatprep.subr.mxu0 0.0
    %158 = vmatpush1.msra.mxu0 0.0
    %159 = vmatprep.subr.mxu0 0.0
    %160 = vmatpush1.msra.mxu0 0.0
    %161 = vmatprep.subr.mxu0 0.0
    %162 = vmatpush1.msra.mxu0 0.0
    %163 = vmatprep.subr.mxu0 0.0
    %164 = vmatpush1.msra.mxu0 0.0
    %165 = vmatprep.subr.mxu0 0.0
    %166 = vmatpush1.msra.mxu0 0.0
    %167 = vmatprep.subr.mxu0 0.0
    %168 = vmatpush1.msra.mxu0 0.0
    %169 = vmatprep.subr.mxu0 0.0
    %170 = vmatpush1.msra.mxu0 0.0
    %171 = vmatprep.subr.mxu0 0.0
    %172 = vmatpush1.msra.mxu0 0.0
    %173 = vmatprep.subr.mxu0 0.0
    %174 = vmatpush1.msra.mxu0 0.0
    %175 = vmatprep.subr.mxu0 0.0
    %176 = vmatpush1.msra.mxu0 0.0
    %177 = vmatprep.subr.mxu0 0.0
    %178 = vmatpush1.msra.mxu0 0.0
    %179 = vmatprep.subr.mxu0 0.0
    %180 = vmatpush1.msra.mxu0 0.0
    %181 = vmatprep.subr.mxu0 0.0
    %182 = vmatpush1.msra.mxu0 0.0
    %183 = vmatprep.subr.mxu0 0.0
    %184 = vmatpush1.msra.mxu0 0.0
    %185 = vmatprep.subr.mxu0 0.0
    %186 = vmatpush1.msra.mxu0 0.0
    %187 = vmatprep.subr.mxu0 0.0
    %188 = vmatpush1.msra.mxu0 0.0
    %189 = vmatprep.mubr.f32.mxu0 0.0
    %190 = vmatmul.mubr.f32.gmra.mrb[0].mxu0 %v75
    %v191 = vpop.f32.mrb[0].mxu0
    %v192 = vadd.f32 0.0, %v191
    %v193 = vpop.f32.mrb[0].mxu0
    %v194 = vadd.f32 0.0, %v193
    %195 = vmatprep.mubr.f32.mxu0 0.0
    %196 = vmatmul.mubr.f32.gmra.mrb[0].mxu0 %v76
    %v197 = vpop.f32.mrb[0].mxu0
    %v198 = vadd.f32 0.0, %v197
    %v199 = vpop.f32.mrb[0].mxu0
    %v200 = vadd.f32 0.0, %v199
    %201 = vdwg.mxu0
    %202 = vmatprep.subr.mxu0 0.0
    %203 = vmatpush1.msra.mxu0 %v79
    %204 = vmatprep.subr.mxu0 0.0
    %205 = vmatpush1.msra.mxu0 %v82
    %206 = vmatprep.subr.mxu0 0.0
    %207 = vmatpush1.msra.mxu0 %v85
    %208 = vmatprep.subr.mxu0 0.0
    %209 = vmatpush1.msra.mxu0 %v88
    %210 = vmatprep.subr.mxu0 0.0
    %211 = vmatpush1.msra.mxu0 %v91
    %212 = vmatprep.subr.mxu0 0.0
    %213 = vmatpush1.msra.mxu0 %v94
    %214 = vmatprep.subr.mxu0 0.0
    %215 = vmatpush1.msra.mxu0 %v97
    %216 = vmatprep.subr.mxu0 0.0
    %217 = vmatpush1.msra.mxu0 %v100
    %218 = vmatprep.subr.mxu0 0.0
    %219 = vmatpush1.msra.mxu0 %v103
    %220 = vmatprep.subr.mxu0 0.0
    %221 = vmatpush1.msra.mxu0 %v106
    %222 = vmatprep.subr.mxu0 0.0
    %223 = vmatpush1.msra.mxu0 %v109
    %224 = vmatprep.subr.mxu0 0.0
    %225 = vmatpush1.msra.mxu0 %v112
    %226 = vmatprep.subr.mxu0 0.0
    %227 = vmatpush1.msra.mxu0 %v115
    %228 = vmatprep.subr.mxu0 0.0
    %229 = vmatpush1.msra.mxu0 %v118
    %230 = vmatprep.subr.mxu0 0.0
    %231 = vmatpush1.msra.mxu0 %v121
    %232 = vmatprep.subr.mxu0 0.0
    %233 = vmatpush1.msra.mxu0 %v124
    %234 = vmatprep.subr.mxu0 0.0
    %235 = vmatpush1.msra.mxu0 0.0
    %236 = vmatprep.subr.mxu0 0.0
    %237 = vmatpush1.msra.mxu0 0.0
    %238 = vmatprep.subr.mxu0 0.0
    %239 = vmatpush1.msra.mxu0 0.0
    %240 = vmatprep.subr.mxu0 0.0
    %241 = vmatpush1.msra.mxu0 0.0
    %242 = vmatprep.subr.mxu0 0.0
    %243 = vmatpush1.msra.mxu0 0.0
    %244 = vmatprep.subr.mxu0 0.0
    %245 = vmatpush1.msra.mxu0 0.0
    %246 = vmatprep.subr.mxu0 0.0
    %247 = vmatpush1.msra.mxu0 0.0
    %248 = vmatprep.subr.mxu0 0.0
    %249 = vmatpush1.msra.mxu0 0.0
    %250 = vmatprep.subr.mxu0 0.0
    %251 = vmatpush1.msra.mxu0 0.0
    %252 = vmatprep.subr.mxu0 0.0
    %253 = vmatpush1.msra.mxu0 0.0
    %254 = vmatprep.subr.mxu0 0.0
    %255 = vmatpush1.msra.mxu0 0.0
    %256 = vmatprep.subr.mxu0 0.0
    %257 = vmatpush1.msra.mxu0 0.0
    %258 = vmatprep.subr.mxu0 0.0
    %259 = vmatpush1.msra.mxu0 0.0
    %260 = vmatprep.subr.mxu0 0.0
    %261 = vmatpush1.msra.mxu0 0.0
    %262 = vmatprep.subr.mxu0 0.0
    %263 = vmatpush1.msra.mxu0 0.0
    %264 = vmatprep.subr.mxu0 0.0
    %265 = vmatpush1.msra.mxu0 0.0
    %266 = vmatprep.mubr.f32.mxu0 0.0
    %267 = vmatmul.mubr.f32.gmra.mrb[0].mxu0 %v75
    %v268 = vpop.f32.mrb[0].mxu0
    %v269 = vadd.f32 0.0, %v268
    %v270 = vpop.f32.mrb[0].mxu0
    %271 = vmatprep.mubr.f32.mxu0 0.0
    %272 = vmatmul.mubr.f32.gmra.mrb[0].mxu0 %v76
    %v273 = vpop.f32.mrb[0].mxu0
    %v274 = vadd.f32 0.0, %v273
    %v275 = vpop.f32.mrb[0].mxu0
    %276 = vdwg.mxu0
    %v277 = vld [vmem:[%s0] sm:$0xff]
    %v278 = vld [vmem:[%s0 + $0x8] sm:$0xff]
    %v279 = vld [vmem:[%s0 + $0x10] sm:$0xff]
    %v280 = vld [vmem:[%s0 + $0x18] sm:$0xff]
    %v281 = vld [vmem:[%s0 + $0x20] sm:$0xff]
    %v282 = vld [vmem:[%s0 + $0x28] sm:$0xff]
    %v283 = vadd.f32 %v277, %v192
    %v284 = vadd.f32 %v278, %v194
    %v285 = vadd.f32 %v280, %v198
    %v286 = vadd.f32 %v281, %v200
    %v287 = vxor.u32 %v283, 2147483648
    %v288 = vxor.u32 %v284, 2147483648
    %v289 = vxor.u32 %v285, 2147483648
    %v290 = vxor.u32 %v286, 2147483648
    %v291 = vmul.f32 %v287, 1.442695
    %v292 = vpow.pop %v291
    %v293 = vmul.f32 %v288, 1.442695
    %v294 = vpow.pop %v293
    %v295 = vmul.f32 %v289, 1.442695
    %v296 = vpow.pop %v295
    %v297 = vmul.f32 %v290, 1.442695
    %v298 = vpow.pop %v297
    %v299 = vadd.f32 %v292, 1.0
    %v300 = vadd.f32 %v294, 1.0
    %v301 = vadd.f32 %v296, 1.0
    %v302 = vadd.f32 %v298, 1.0
    %v303 = vrcp.pop %v299
    %v304 = vmul.f32 1.0, %v303
    %v305 = vrcp.pop %v300
    %v306 = vmul.f32 1.0, %v305
    %v307 = vrcp.pop %v301
    %v308 = vmul.f32 1.0, %v307
    %v309 = vrcp.pop %v302
    %v310 = vmul.f32 1.0, %v309
    %v311 = vadd.f32 %v269, %v42
    %v312 = vadd.f32 %v274, %v42
    %v313 = vmul.f32 %v304, %v311
    %v314 = vmul.f32 %v308, %v312
    %v315 = vadd.f32 %v279, %v313
    %v316 = vadd.f32 %v282, %v314
    %v317 = vtanh.pop %v315
    %v318 = vtanh.pop %v316
    %v319 = vsub.f32 1.0, %v306
    %v320 = vsub.f32 1.0, %v310
    %v321 = vmul.f32 %v319, %v317
    %v322 = vmul.f32 %v320, %v318
    %v323 = vmul.f32 %v306, %v75
    %v324 = vmul.f32 %v310, %v76
    %v325 = vadd.f32 %v321, %v323
    %v326 = vadd.f32 %v322, %v324
    %327 = vst [vmem:[#allocation2] sm:$0xff] %v325
    %328 = vst [vmem:[#allocation2 + $0x8] sm:$0xff] %v326
    %v329 = vsel %vm60, %v325, 0.0
    %v330 = vsel %vm60, %v326, 0.0
    %331 = vadd.xlane.f32.xlu0 %v329
    %v332 = vpop.xlane.xlu0 %331
    %333 = vadd.xlane.f32.xlu0 %v330
    %v334 = vpop.xlane.xlu0 %333
    %v335 = vmul.f32 %v332, 0.03125
    %v336 = vmul.f32 %v334, 0.03125
    %v337 = vsub.f32 %v329, %v335
    %v338 = vsub.f32 %v330, %v336
    %v339 = vsel %vm60, %v337, 0.0
    %v340 = vsel %vm60, %v338, 0.0
    %v341 = vmul.f32 %v339, %v339
    %v342 = vmul.f32 %v340, %v340
    %343 = vadd.xlane.f32.xlu0 %v341
    %v344 = vpop.xlane.xlu0 %343
    %345 = vadd.xlane.f32.xlu0 %v342
    %v346 = vpop.xlane.xlu0 %345
    %v347 = vmul.f32 %v344, 0.03125
    %v348 = vmul.f32 %v346, 0.03125
    %v349 = vadd.f32 %v347, 1e-05
    %v350 = vadd.f32 %v348, 1e-05
    %v351 = vrsqrt.pop %v349
    %v352 = vrsqrt.pop %v350
    %v353 = vmul.f32 %v339, %v351
    %v354 = vmul.f32 %v340, %v352
    %v355 = vmul.f32 %v353, %v49
    %v356 = vmul.f32 %v354, %v49
    %v357 = vadd.f32 %v355, %v56
    %v358 = vadd.f32 %v356, %v56
    %359 = vst [vmem:[#allocation3] sm:$0xff] %v357
    %360 = vst [vmem:[#allocation3 + $0x8] sm:$0xff] %v358
    %v361 = vld [vmem:[#allocation2] sm:$0xff]
    %v362 = vld [vmem:[#allocation2 + $0x8] sm:$0xff]
    %s363 = scalar_lea.vmem %s1, 16
    %v364 = vld [vmem:[%s363] sm:$0xff]
    %v365 = vld [vmem:[%s363 + $0x8] sm:$0xff]
    %367 = vset.pattern.permute.xlu0 0
    %368 = vperm.xlu0 %367, %v364
    %v369 = vpop.permute.xlu0 %368
    %372 = vset.pattern.permute.xlu0 0
    %373 = vperm.xlu0 %372, %v365
    %v374 = vpop.permute.xlu0 %373
    %v376 = vmul.f32 %v361, %v369
    %v377 = vmul.f32 %v362, %v374
    %v378 = vld [vmem:[%s3] sm:$0xff]
    %v379 = vld [vmem:[%s3 + $0x8] sm:$0xff]
    %v380 = vld [vmem:[%s3 + $0x10] sm:$0xff]
    %v381 = vld [vmem:[%s3 + $0x18] sm:$0xff]
    %v382 = vld [vmem:[%s3 + $0x20] sm:$0xff]
    %v383 = vld [vmem:[%s3 + $0x28] sm:$0xff]
    %v384 = vld [vmem:[%s3 + $0x30] sm:$0xff]
    %v385 = vld [vmem:[%s3 + $0x38] sm:$0xff]
    %v386 = vld [vmem:[%s3 + $0x40] sm:$0xff]
    %v387 = vld [vmem:[%s3 + $0x48] sm:$0xff]
    %v388 = vld [vmem:[%s3 + $0x50] sm:$0xff]
    %v389 = vld [vmem:[%s3 + $0x58] sm:$0xff]
    %v390 = vld [vmem:[%s3 + $0x60] sm:$0xff]
    %v391 = vld [vmem:[%s3 + $0x68] sm:$0xff]
    %v392 = vld [vmem:[%s3 + $0x70] sm:$0xff]
    %v393 = vld [vmem:[%s3 + $0x78] sm:$0xff]
    %v394 = vld [vmem:[%s3 + $0x80] sm:$0xff]
    %v395 = vld [vmem:[%s3 + $0x88] sm:$0xff]
    %v396 = vld [vmem:[%s3 + $0x90] sm:$0xff]
    %v397 = vld [vmem:[%s3 + $0x98] sm:$0xff]
    %v398 = vld [vmem:[%s3 + $0xa0] sm:$0xff]
    %v399 = vld [vmem:[%s3 + $0xa8] sm:$0xff]
    %v400 = vld [vmem:[%s3 + $0xb0] sm:$0xff]
    %v401 = vld [vmem:[%s3 + $0xb8] sm:$0xff]
    %v402 = vld [vmem:[%s3 + $0xc0] sm:$0xff]
    %v403 = vld [vmem:[%s3 + $0xc8] sm:$0xff]
    %v404 = vld [vmem:[%s3 + $0xd0] sm:$0xff]
    %v405 = vld [vmem:[%s3 + $0xd8] sm:$0xff]
    %v406 = vld [vmem:[%s3 + $0xe0] sm:$0xff]
    %v407 = vld [vmem:[%s3 + $0xe8] sm:$0xff]
    %v408 = vld [vmem:[%s3 + $0xf0] sm:$0xff]
    %v409 = vld [vmem:[%s3 + $0xf8] sm:$0xff]
    %v410 = vld [vmem:[%s3 + $0x100] sm:$0xff]
    %v411 = vld [vmem:[%s3 + $0x108] sm:$0xff]
    %v412 = vld [vmem:[%s3 + $0x110] sm:$0xff]
    %v413 = vld [vmem:[%s3 + $0x118] sm:$0xff]
    %v414 = vld [vmem:[%s3 + $0x120] sm:$0xff]
    %v415 = vld [vmem:[%s3 + $0x128] sm:$0xff]
    %v416 = vld [vmem:[%s3 + $0x130] sm:$0xff]
    %v417 = vld [vmem:[%s3 + $0x138] sm:$0xff]
    %v418 = vld [vmem:[%s3 + $0x140] sm:$0xff]
    %v419 = vld [vmem:[%s3 + $0x148] sm:$0xff]
    %v420 = vld [vmem:[%s3 + $0x150] sm:$0xff]
    %v421 = vld [vmem:[%s3 + $0x158] sm:$0xff]
    %v422 = vld [vmem:[%s3 + $0x160] sm:$0xff]
    %v423 = vld [vmem:[%s3 + $0x168] sm:$0xff]
    %v424 = vld [vmem:[%s3 + $0x170] sm:$0xff]
    %v425 = vld [vmem:[%s3 + $0x178] sm:$0xff]
    %426 = vmatprep.subr.mxu0 %v379
    %427 = vmatpush1.msra.mxu0 %v378
    %428 = vmatprep.subr.mxu0 %v382
    %429 = vmatpush1.msra.mxu0 %v381
    %430 = vmatprep.subr.mxu0 %v385
    %431 = vmatpush1.msra.mxu0 %v384
    %432 = vmatprep.subr.mxu0 %v388
    %433 = vmatpush1.msra.mxu0 %v387
    %434 = vmatprep.subr.mxu0 %v391
    %435 = vmatpush1.msra.mxu0 %v390
    %436 = vmatprep.subr.mxu0 %v394
    %437 = vmatpush1.msra.mxu0 %v393
    %438 = vmatprep.subr.mxu0 %v397
    %439 = vmatpush1.msra.mxu0 %v396
    %440 = vmatprep.subr.mxu0 %v400
    %441 = vmatpush1.msra.mxu0 %v399
    %442 = vmatprep.subr.mxu0 %v403
    %443 = vmatpush1.msra.mxu0 %v402
    %444 = vmatprep.subr.mxu0 %v406
    %445 = vmatpush1.msra.mxu0 %v405
    %446 = vmatprep.subr.mxu0 %v409
    %447 = vmatpush1.msra.mxu0 %v408
    %448 = vmatprep.subr.mxu0 %v412
    %449 = vmatpush1.msra.mxu0 %v411
    %450 = vmatprep.subr.mxu0 %v415
    %451 = vmatpush1.msra.mxu0 %v414
    %452 = vmatprep.subr.mxu0 %v418
    %453 = vmatpush1.msra.mxu0 %v417
    %454 = vmatprep.subr.mxu0 %v421
    %455 = vmatpush1.msra.mxu0 %v420
    %456 = vmatprep.subr.mxu0 %v424
    %457 = vmatpush1.msra.mxu0 %v423
    %458 = vmatprep.subr.mxu0 0.0
    %459 = vmatpush1.msra.mxu0 0.0
    %460 = vmatprep.subr.mxu0 0.0
    %461 = vmatpush1.msra.mxu0 0.0
    %462 = vmatprep.subr.mxu0 0.0
    %463 = vmatpush1.msra.mxu0 0.0
    %464 = vmatprep.subr.mxu0 0.0
    %465 = vmatpush1.msra.mxu0 0.0
    %466 = vmatprep.subr.mxu0 0.0
    %467 = vmatpush1.msra.mxu0 0.0
    %468 = vmatprep.subr.mxu0 0.0
    %469 = vmatpush1.msra.mxu0 0.0
    %470 = vmatprep.subr.mxu0 0.0
    %471 = vmatpush1.msra.mxu0 0.0
    %472 = vmatprep.subr.mxu0 0.0
    %473 = vmatpush1.msra.mxu0 0.0
    %474 = vmatprep.subr.mxu0 0.0
    %475 = vmatpush1.msra.mxu0 0.0
    %476 = vmatprep.subr.mxu0 0.0
    %477 = vmatpush1.msra.mxu0 0.0
    %478 = vmatprep.subr.mxu0 0.0
    %479 = vmatpush1.msra.mxu0 0.0
    %480 = vmatprep.subr.mxu0 0.0
    %481 = vmatpush1.msra.mxu0 0.0
    %482 = vmatprep.subr.mxu0 0.0
    %483 = vmatpush1.msra.mxu0 0.0
    %484 = vmatprep.subr.mxu0 0.0
    %485 = vmatpush1.msra.mxu0 0.0
    %486 = vmatprep.subr.mxu0 0.0
    %487 = vmatpush1.msra.mxu0 0.0
    %488 = vmatprep.subr.mxu0 0.0
    %489 = vmatpush1.msra.mxu0 0.0
    %490 = vmatprep.mubr.f32.mxu0 0.0
    %491 = vmatmul.mubr.f32.gmra.mrb[0].mxu0 %v376
    %v492 = vpop.f32.mrb[0].mxu0
    %v493 = vadd.f32 0.0, %v492
    %v494 = vpop.f32.mrb[0].mxu0
    %v495 = vadd.f32 0.0, %v494
    %496 = vmatprep.mubr.f32.mxu0 0.0
    %497 = vmatmul.mubr.f32.gmra.mrb[0].mxu0 %v377
    %v498 = vpop.f32.mrb[0].mxu0
    %v499 = vadd.f32 0.0, %v498
    %v500 = vpop.f32.mrb[0].mxu0
    %v501 = vadd.f32 0.0, %v500
    %502 = vdwg.mxu0
    %503 = vmatprep.subr.mxu0 0.0
    %504 = vmatpush1.msra.mxu0 %v380
    %505 = vmatprep.subr.mxu0 0.0
    %506 = vmatpush1.msra.mxu0 %v383
    %507 = vmatprep.subr.mxu0 0.0
    %508 = vmatpush1.msra.mxu0 %v386
    %509 = vmatprep.subr.mxu0 0.0
    %510 = vmatpush1.msra.mxu0 %v389
    %511 = vmatprep.subr.mxu0 0.0
    %512 = vmatpush1.msra.mxu0 %v392
    %513 = vmatprep.subr.mxu0 0.0
    %514 = vmatpush1.msra.mxu0 %v395
    %515 = vmatprep.subr.mxu0 0.0
    %516 = vmatpush1.msra.mxu0 %v398
    %517 = vmatprep.subr.mxu0 0.0
    %518 = vmatpush1.msra.mxu0 %v401
    %519 = vmatprep.subr.mxu0 0.0
    %520 = vmatpush1.msra.mxu0 %v404
    %521 = vmatprep.subr.mxu0 0.0
    %522 = vmatpush1.msra.mxu0 %v407
    %523 = vmatprep.subr.mxu0 0.0
    %524 = vmatpush1.msra.mxu0 %v410
    %525 = vmatprep.subr.mxu0 0.0
    %526 = vmatpush1.msra.mxu0 %v413
    %527 = vmatprep.subr.mxu0 0.0
    %528 = vmatpush1.msra.mxu0 %v416
    %529 = vmatprep.subr.mxu0 0.0
    %530 = vmatpush1.msra.mxu0 %v419
    %531 = vmatprep.subr.mxu0 0.0
    %532 = vmatpush1.msra.mxu0 %v422
    %533 = vmatprep.subr.mxu0 0.0
    %534 = vmatpush1.msra.mxu0 %v425
    %535 = vmatprep.subr.mxu0 0.0
    %536 = vmatpush1.msra.mxu0 0.0
    %537 = vmatprep.subr.mxu0 0.0
    %538 = vmatpush1.msra.mxu0 0.0
    %539 = vmatprep.subr.mxu0 0.0
    %540 = vmatpush1.msra.mxu0 0.0
    %541 = vmatprep.subr.mxu0 0.0
    %542 = vmatpush1.msra.mxu0 0.0
    %543 = vmatprep.subr.mxu0 0.0
    %544 = vmatpush1.msra.mxu0 0.0
    %545 = vmatprep.subr.mxu0 0.0
    %546 = vmatpush1.msra.mxu0 0.0
    %547 = vmatprep.subr.mxu0 0.0
    %548 = vmatpush1.msra.mxu0 0.0
    %549 = vmatprep.subr.mxu0 0.0
    %550 = vmatpush1.msra.mxu0 0.0
    %551 = vmatprep.subr.mxu0 0.0
    %552 = vmatpush1.msra.mxu0 0.0
    %553 = vmatprep.subr.mxu0 0.0
    %554 = vmatpush1.msra.mxu0 0.0
    %555 = vmatprep.subr.mxu0 0.0
    %556 = vmatpush1.msra.mxu0 0.0
    %557 = vmatprep.subr.mxu0 0.0
    %558 = vmatpush1.msra.mxu0 0.0
    %559 = vmatprep.subr.mxu0 0.0
    %560 = vmatpush1.msra.mxu0 0.0
    %561 = vmatprep.subr.mxu0 0.0
    %562 = vmatpush1.msra.mxu0 0.0
    %563 = vmatprep.subr.mxu0 0.0
    %564 = vmatpush1.msra.mxu0 0.0
    %565 = vmatprep.subr.mxu0 0.0
    %566 = vmatpush1.msra.mxu0 0.0
    %567 = vmatprep.mubr.f32.mxu0 0.0
    %568 = vmatmul.mubr.f32.gmra.mrb[0].mxu0 %v376
    %v569 = vpop.f32.mrb[0].mxu0
    %v570 = vadd.f32 0.0, %v569
    %v571 = vpop.f32.mrb[0].mxu0
    %572 = vmatprep.mubr.f32.mxu0 0.0
    %573 = vmatmul.mubr.f32.gmra.mrb[0].mxu0 %v377
    %v574 = vpop.f32.mrb[0].mxu0
    %v575 = vadd.f32 0.0, %v574
    %v576 = vpop.f32.mrb[0].mxu0
    %577 = vdwg.mxu0
    %s578 = scalar_lea.vmem %s0, 48
    %v579 = vld [vmem:[%s578] sm:$0xff]
    %v580 = vld [vmem:[%s578 + $0x8] sm:$0xff]
    %v581 = vld [vmem:[%s578 + $0x10] sm:$0xff]
    %v582 = vld [vmem:[%s578 + $0x18] sm:$0xff]
    %v583 = vld [vmem:[%s578 + $0x20] sm:$0xff]
    %v584 = vld [vmem:[%s578 + $0x28] sm:$0xff]
    %v585 = vadd.f32 %v579, %v493
    %v586 = vadd.f32 %v580, %v495
    %v587 = vadd.f32 %v582, %v499
    %v588 = vadd.f32 %v583, %v501
    %v589 = vxor.u32 %v585, 2147483648
    %v590 = vxor.u32 %v586, 2147483648
    %v591 = vxor.u32 %v587, 2147483648
    %v592 = vxor.u32 %v588, 2147483648
    %v593 = vmul.f32 %v589, 1.442695
    %v594 = vpow.pop %v593
    %v595 = vmul.f32 %v590, 1.442695
    %v596 = vpow.pop %v595
    %v597 = vmul.f32 %v591, 1.442695
    %v598 = vpow.pop %v597
    %v599 = vmul.f32 %v592, 1.442695
    %v600 = vpow.pop %v599
    %v601 = vadd.f32 %v594, 1.0
    %v602 = vadd.f32 %v596, 1.0
    %v603 = vadd.f32 %v598, 1.0
    %v604 = vadd.f32 %v600, 1.0
    %v605 = vrcp.pop %v601
    %v606 = vmul.f32 1.0, %v605
    %v607 = vrcp.pop %v602
    %v608 = vmul.f32 1.0, %v607
    %v609 = vrcp.pop %v603
    %v610 = vmul.f32 1.0, %v609
    %v611 = vrcp.pop %v604
    %v612 = vmul.f32 1.0, %v611
    %v613 = vadd.f32 %v570, %v42
    %v614 = vadd.f32 %v575, %v42
    %v615 = vmul.f32 %v606, %v613
    %v616 = vmul.f32 %v610, %v614
    %v617 = vadd.f32 %v581, %v615
    %v618 = vadd.f32 %v584, %v616
    %v619 = vtanh.pop %v617
    %v620 = vtanh.pop %v618
    %v621 = vsub.f32 1.0, %v608
    %v622 = vsub.f32 1.0, %v612
    %v623 = vmul.f32 %v621, %v619
    %v624 = vmul.f32 %v622, %v620
    %v625 = vmul.f32 %v608, %v376
    %v626 = vmul.f32 %v612, %v377
    %v627 = vadd.f32 %v623, %v625
    %v628 = vadd.f32 %v624, %v626
    %629 = vst [vmem:[#allocation2] sm:$0xff] %v627
    %630 = vst [vmem:[#allocation2 + $0x8] sm:$0xff] %v628
    %v631 = vsel %vm60, %v627, 0.0
    %v632 = vsel %vm60, %v628, 0.0
    %633 = vadd.xlane.f32.xlu0 %v631
    %v634 = vpop.xlane.xlu0 %633
    %635 = vadd.xlane.f32.xlu0 %v632
    %v636 = vpop.xlane.xlu0 %635
    %v637 = vmul.f32 %v634, 0.03125
    %v638 = vmul.f32 %v636, 0.03125
    %v639 = vsub.f32 %v631, %v637
    %v640 = vsub.f32 %v632, %v638
    %v641 = vsel %vm60, %v639, 0.0
    %v642 = vsel %vm60, %v640, 0.0
    %v643 = vmul.f32 %v641, %v641
    %v644 = vmul.f32 %v642, %v642
    %645 = vadd.xlane.f32.xlu0 %v643
    %v646 = vpop.xlane.xlu0 %645
    %647 = vadd.xlane.f32.xlu0 %v644
    %v648 = vpop.xlane.xlu0 %647
    %v649 = vmul.f32 %v646, 0.03125
    %v650 = vmul.f32 %v648, 0.03125
    %v651 = vadd.f32 %v649, 1e-05
    %v652 = vadd.f32 %v650, 1e-05
    %v653 = vrsqrt.pop %v651
    %v654 = vrsqrt.pop %v652
    %v655 = vmul.f32 %v641, %v653
    %v656 = vmul.f32 %v642, %v654
    %v657 = vmul.f32 %v655, %v49
    %v658 = vmul.f32 %v656, %v49
    %v659 = vadd.f32 %v657, %v56
    %v660 = vadd.f32 %v658, %v56
    %s661 = scalar_lea.vmem [#allocation3], 16
    %662 = vst [vmem:[%s661] sm:$0xff] %v659
    %663 = vst [vmem:[%s661 + $0x8] sm:$0xff] %v660
    %v664 = vld [vmem:[#allocation2] sm:$0xff]
    %v665 = vld [vmem:[#allocation2 + $0x8] sm:$0xff]
    %s666 = scalar_lea.vmem %s1, 32
    %v667 = vld [vmem:[%s666] sm:$0xff]
    %v668 = vld [vmem:[%s666 + $0x8] sm:$0xff]
    %670 = vset.pattern.permute.xlu0 0
    %671 = vperm.xlu0 %670, %v667
    %v672 = vpop.permute.xlu0 %671
    %675 = vset.pattern.permute.xlu0 0
    %676 = vperm.xlu0 %675, %v668
    %v677 = vpop.permute.xlu0 %676
    %v679 = vmul.f32 %v664, %v672
    %v680 = vmul.f32 %v665, %v677
    %v681 = vld [vmem:[%s3] sm:$0xff]
    %v682 = vld [vmem:[%s3 + $0x8] sm:$0xff]
    %v683 = vld [vmem:[%s3 + $0x10] sm:$0xff]
    %v684 = vld [vmem:[%s3 + $0x18] sm:$0xff]
    %v685 = vld [vmem:[%s3 + $0x20] sm:$0xff]
    %v686 = vld [vmem:[%s3 + $0x28] sm:$0xff]
    %v687 = vld [vmem:[%s3 + $0x30] sm:$0xff]
    %v688 = vld [vmem:[%s3 + $0x38] sm:$0xff]
    %v689 = vld [vmem:[%s3 + $0x40] sm:$0xff]
    %v690 = vld [vmem:[%s3 + $0x48] sm:$0xff]
    %v691 = vld [vmem:[%s3 + $0x50] sm:$0xff]
    %v692 = vld [vmem:[%s3 + $0x58] sm:$0xff]
    %v693 = vld [vmem:[%s3 + $0x60] sm:$0xff]
    %v694 = vld [vmem:[%s3 + $0x68] sm:$0xff]
    %v695 = vld [vmem:[%s3 + $0x70] sm:$0xff]
    %v696 = vld [vmem:[%s3 + $0x78] sm:$0xff]
    %v697 = vld [vmem:[%s3 + $0x80] sm:$0xff]
    %v698 = vld [vmem:[%s3 + $0x88] sm:$0xff]
    %v699 = vld [vmem:[%s3 + $0x90] sm:$0xff]
    %v700 = vld [vmem:[%s3 + $0x98] sm:$0xff]
    %v701 = vld [vmem:[%s3 + $0xa0] sm:$0xff]
    %v702 = vld [vmem:[%s3 + $0xa8] sm:$0xff]
    %v703 = vld [vmem:[%s3 + $0xb0] sm:$0xff]
    %v704 = vld [vmem:[%s3 + $0xb8] sm:$0xff]
    %v705 = vld [vmem:[%s3 + $0xc0] sm:$0xff]
    %v706 = vld [vmem:[%s3 + $0xc8] sm:$0xff]
    %v707 = vld [vmem:[%s3 + $0xd0] sm:$0xff]
    %v708 = vld [vmem:[%s3 + $0xd8] sm:$0xff]
    %v709 = vld [vmem:[%s3 + $0xe0] sm:$0xff]
    %v710 = vld [vmem:[%s3 + $0xe8] sm:$0xff]
    %v711 = vld [vmem:[%s3 + $0xf0] sm:$0xff]
    %v712 = vld [vmem:[%s3 + $0xf8] sm:$0xff]
    %v713 = vld [vmem:[%s3 + $0x100] sm:$0xff]
    %v714 = vld [vmem:[%s3 + $0x108] sm:$0xff]
    %v715 = vld [vmem:[%s3 + $0x110] sm:$0xff]
    %v716 = vld [vmem:[%s3 + $0x118] sm:$0xff]
    %v717 = vld [vmem:[%s3 + $0x120] sm:$0xff]
    %v718 = vld [vmem:[%s3 + $0x128] sm:$0xff]
    %v719 = vld [vmem:[%s3 + $0x130] sm:$0xff]
    %v720 = vld [vmem:[%s3 + $0x138] sm:$0xff]
    %v721 = vld [vmem:[%s3 + $0x140] sm:$0xff]
    %v722 = vld [vmem:[%s3 + $0x148] sm:$0xff]
    %v723 = vld [vmem:[%s3 + $0x150] sm:$0xff]
    %v724 = vld [vmem:[%s3 + $0x158] sm:$0xff]
    %v725 = vld [vmem:[%s3 + $0x160] sm:$0xff]
    %v726 = vld [vmem:[%s3 + $0x168] sm:$0xff]
    %v727 = vld [vmem:[%s3 + $0x170] sm:$0xff]
    %v728 = vld [vmem:[%s3 + $0x178] sm:$0xff]
    %729 = vmatprep.subr.mxu0 %v682
    %730 = vmatpush1.msra.mxu0 %v681
    %731 = vmatprep.subr.mxu0 %v685
    %732 = vmatpush1.msra.mxu0 %v684
    %733 = vmatprep.subr.mxu0 %v688
    %734 = vmatpush1.msra.mxu0 %v687
    %735 = vmatprep.subr.mxu0 %v691
    %736 = vmatpush1.msra.mxu0 %v690
    %737 = vmatprep.subr.mxu0 %v694
    %738 = vmatpush1.msra.mxu0 %v693
    %739 = vmatprep.subr.mxu0 %v697
    %740 = vmatpush1.msra.mxu0 %v696
    %741 = vmatprep.subr.mxu0 %v700
    %742 = vmatpush1.msra.mxu0 %v699
    %743 = vmatprep.subr.mxu0 %v703
    %744 = vmatpush1.msra.mxu0 %v702
    %745 = vmatprep.subr.mxu0 %v706
    %746 = vmatpush1.msra.mxu0 %v705
    %747 = vmatprep.subr.mxu0 %v709
    %748 = vmatpush1.msra.mxu0 %v708
    %749 = vmatprep.subr.mxu0 %v712
    %750 = vmatpush1.msra.mxu0 %v711
    %751 = vmatprep.subr.mxu0 %v715
    %752 = vmatpush1.msra.mxu0 %v714
    %753 = vmatprep.subr.mxu0 %v718
    %754 = vmatpush1.msra.mxu0 %v717
    %755 = vmatprep.subr.mxu0 %v721
    %756 = vmatpush1.msra.mxu0 %v720
    %757 = vmatprep.subr.mxu0 %v724
    %758 = vmatpush1.msra.mxu0 %v723
    %759 = vmatprep.subr.mxu0 %v727
    %760 = vmatpush1.msra.mxu0 %v726
    %761 = vmatprep.subr.mxu0 0.0
    %762 = vmatpush1.msra.mxu0 0.0
    %763 = vmatprep.subr.mxu0 0.0
    %764 = vmatpush1.msra.mxu0 0.0
    %765 = vmatprep.subr.mxu0 0.0
    %766 = vmatpush1.msra.mxu0 0.0
    %767 = vmatprep.subr.mxu0 0.0
    %768 = vmatpush1.msra.mxu0 0.0
    %769 = vmatprep.subr.mxu0 0.0
    %770 = vmatpush1.msra.mxu0 0.0
    %771 = vmatprep.subr.mxu0 0.0
    %772 = vmatpush1.msra.mxu0 0.0
    %773 = vmatprep.subr.mxu0 0.0
    %774 = vmatpush1.msra.mxu0 0.0
    %775 = vmatprep.subr.mxu0 0.0
    %776 = vmatpush1.msra.mxu0 0.0
    %777 = vmatprep.subr.mxu0 0.0
    %778 = vmatpush1.msra.mxu0 0.0
    %779 = vmatprep.subr.mxu0 0.0
    %780 = vmatpush1.msra.mxu0 0.0
    %781 = vmatprep.subr.mxu0 0.0
    %782 = vmatpush1.msra.mxu0 0.0
    %783 = vmatprep.subr.mxu0 0.0
    %784 = vmatpush1.msra.mxu0 0.0
    %785 = vmatprep.subr.mxu0 0.0
    %786 = vmatpush1.msra.mxu0 0.0
    %787 = vmatprep.subr.mxu0 0.0
    %788 = vmatpush1.msra.mxu0 0.0
    %789 = vmatprep.subr.mxu0 0.0
    %790 = vmatpush1.msra.mxu0 0.0
    %791 = vmatprep.subr.mxu0 0.0
    %792 = vmatpush1.msra.mxu0 0.0
    %793 = vmatprep.mubr.f32.mxu0 0.0
    %794 = vmatmul.mubr.f32.gmra.mrb[0].mxu0 %v679
    %v795 = vpop.f32.mrb[0].mxu0
    %v796 = vadd.f32 0.0, %v795
    %v797 = vpop.f32.mrb[0].mxu0
    %v798 = vadd.f32 0.0, %v797
    %799 = vmatprep.mubr.f32.mxu0 0.0
    %800 = vmatmul.mubr.f32.gmra.mrb[0].mxu0 %v680
    %v801 = vpop.f32.mrb[0].mxu0
    %v802 = vadd.f32 0.0, %v801
    %v803 = vpop.f32.mrb[0].mxu0
    %v804 = vadd.f32 0.0, %v803
    %805 = vdwg.mxu0
    %806 = vmatprep.subr.mxu0 0.0
    %807 = vmatpush1.msra.mxu0 %v683
    %808 = vmatprep.subr.mxu0 0.0
    %809 = vmatpush1.msra.mxu0 %v686
    %810 = vmatprep.subr.mxu0 0.0
    %811 = vmatpush1.msra.mxu0 %v689
    %812 = vmatprep.subr.mxu0 0.0
    %813 = vmatpush1.msra.mxu0 %v692
    %814 = vmatprep.subr.mxu0 0.0
    %815 = vmatpush1.msra.mxu0 %v695
    %816 = vmatprep.subr.mxu0 0.0
    %817 = vmatpush1.msra.mxu0 %v698
    %818 = vmatprep.subr.mxu0 0.0
    %819 = vmatpush1.msra.mxu0 %v701
    %820 = vmatprep.subr.mxu0 0.0
    %821 = vmatpush1.msra.mxu0 %v704
    %822 = vmatprep.subr.mxu0 0.0
    %823 = vmatpush1.msra.mxu0 %v707
    %824 = vmatprep.subr.mxu0 0.0
    %825 = vmatpush1.msra.mxu0 %v710
    %826 = vmatprep.subr.mxu0 0.0
    %827 = vmatpush1.msra.mxu0 %v713
    %828 = vmatprep.subr.mxu0 0.0
    %829 = vmatpush1.msra.mxu0 %v716
    %830 = vmatprep.subr.mxu0 0.0
    %831 = vmatpush1.msra.mxu0 %v719
    %832 = vmatprep.subr.mxu0 0.0
    %833 = vmatpush1.msra.mxu0 %v722
    %834 = vmatprep.subr.mxu0 0.0
    %835 = vmatpush1.msra.mxu0 %v725
    %836 = vmatprep.subr.mxu0 0.0
    %837 = vmatpush1.msra.mxu0 %v728
    %838 = vmatprep.subr.mxu0 0.0
    %839 = vmatpush1.msra.mxu0 0.0
    %840 = vmatprep.subr.mxu0 0.0
    %841 = vmatpush1.msra.mxu0 0.0
    %842 = vmatprep.subr.mxu0 0.0
    %843 = vmatpush1.msra.mxu0 0.0
    %844 = vmatprep.subr.mxu0 0.0
    %845 = vmatpush1.msra.mxu0 0.0
    %846 = vmatprep.subr.mxu0 0.0
    %847 = vmatpush1.msra.mxu0 0.0
    %848 = vmatprep.subr.mxu0 0.0
    %849 = vmatpush1.msra.mxu0 0.0
    %850 = vmatprep.subr.mxu0 0.0
    %851 = vmatpush1.msra.mxu0 0.0
    %852 = vmatprep.subr.mxu0 0.0
    %853 = vmatpush1.msra.mxu0 0.0
    %854 = vmatprep.subr.mxu0 0.0
    %855 = vmatpush1.msra.mxu0 0.0
    %856 = vmatprep.subr.mxu0 0.0
    %857 = vmatpush1.msra.mxu0 0.0
    %858 = vmatprep.subr.mxu0 0.0
    %859 = vmatpush1.msra.mxu0 0.0
    %860 = vmatprep.subr.mxu0 0.0
    %861 = vmatpush1.msra.mxu0 0.0
    %862 = vmatprep.subr.mxu0 0.0
    %863 = vmatpush1.msra.mxu0 0.0
    %864 = vmatprep.subr.mxu0 0.0
    %865 = vmatpush1.msra.mxu0 0.0
    %866 = vmatprep.subr.mxu0 0.0
    %867 = vmatpush1.msra.mxu0 0.0
    %868 = vmatprep.subr.mxu0 0.0
    %869 = vmatpush1.msra.mxu0 0.0
    %870 = vmatprep.mubr.f32.mxu0 0.0
    %871 = vmatmul.mubr.f32.gmra.mrb[0].mxu0 %v679
    %v872 = vpop.f32.mrb[0].mxu0
    %v873 = vadd.f32 0.0, %v872
    %v874 = vpop.f32.mrb[0].mxu0
    %875 = vmatprep.mubr.f32.mxu0 0.0
    %876 = vmatmul.mubr.f32.gmra.mrb[0].mxu0 %v680
    %v877 = vpop.f32.mrb[0].mxu0
    %v878 = vadd.f32 0.0, %v877
    %v879 = vpop.f32.mrb[0].mxu0
    %880 = vdwg.mxu0
    %s881 = scalar_lea.vmem %s0, 96
    %v882 = vld [vmem:[%s881] sm:$0xff]
    %v883 = vld [vmem:[%s881 + $0x8] sm:$0xff]
    %v884 = vld [vmem:[%s881 + $0x10] sm:$0xff]
    %v885 = vld [vmem:[%s881 + $0x18] sm:$0xff]
    %v886 = vld [vmem:[%s881 + $0x20] sm:$0xff]
    %v887 = vld [vmem:[%s881 + $0x28] sm:$0xff]
    %v888 = vadd.f32 %v882, %v796
    %v889 = vadd.f32 %v883, %v798
    %v890 = vadd.f32 %v885, %v802
    %v891 = vadd.f32 %v886, %v804
    %v892 = vxor.u32 %v888, 2147483648
    %v893 = vxor.u32 %v889, 2147483648
    %v894 = vxor.u32 %v890, 2147483648
    %v895 = vxor.u32 %v891, 2147483648
    %v896 = vmul.f32 %v892, 1.442695
    %v897 = vpow.pop %v896
    %v898 = vmul.f32 %v893, 1.442695
    %v899 = vpow.pop %v898
    %v900 = vmul.f32 %v894, 1.442695
    %v901 = vpow.pop %v900
    %v902 = vmul.f32 %v895, 1.442695
    %v903 = vpow.pop %v902
    %v904 = vadd.f32 %v897, 1.0
    %v905 = vadd.f32 %v899, 1.0
    %v906 = vadd.f32 %v901, 1.0
    %v907 = vadd.f32 %v903, 1.0
    %v908 = vrcp.pop %v904
    %v909 = vmul.f32 1.0, %v908
    %v910 = vrcp.pop %v905
    %v911 = vmul.f32 1.0, %v910
    %v912 = vrcp.pop %v906
    %v913 = vmul.f32 1.0, %v912
    %v914 = vrcp.pop %v907
    %v915 = vmul.f32 1.0, %v914
    %v916 = vadd.f32 %v873, %v42
    %v917 = vadd.f32 %v878, %v42
    %v918 = vmul.f32 %v909, %v916
    %v919 = vmul.f32 %v913, %v917
    %v920 = vadd.f32 %v884, %v918
    %v921 = vadd.f32 %v887, %v919
    %v922 = vtanh.pop %v920
    %v923 = vtanh.pop %v921
    %v924 = vsub.f32 1.0, %v911
    %v925 = vsub.f32 1.0, %v915
    %v926 = vmul.f32 %v924, %v922
    %v927 = vmul.f32 %v925, %v923
    %v928 = vmul.f32 %v911, %v679
    %v929 = vmul.f32 %v915, %v680
    %v930 = vadd.f32 %v926, %v928
    %v931 = vadd.f32 %v927, %v929
    %932 = vst [vmem:[#allocation2] sm:$0xff] %v930
    %933 = vst [vmem:[#allocation2 + $0x8] sm:$0xff] %v931
    %v934 = vsel %vm60, %v930, 0.0
    %v935 = vsel %vm60, %v931, 0.0
    %936 = vadd.xlane.f32.xlu0 %v934
    %v937 = vpop.xlane.xlu0 %936
    %938 = vadd.xlane.f32.xlu0 %v935
    %v939 = vpop.xlane.xlu0 %938
    %v940 = vmul.f32 %v937, 0.03125
    %v941 = vmul.f32 %v939, 0.03125
    %v942 = vsub.f32 %v934, %v940
    %v943 = vsub.f32 %v935, %v941
    %v944 = vsel %vm60, %v942, 0.0
    %v945 = vsel %vm60, %v943, 0.0
    %v946 = vmul.f32 %v944, %v944
    %v947 = vmul.f32 %v945, %v945
    %948 = vadd.xlane.f32.xlu0 %v946
    %v949 = vpop.xlane.xlu0 %948
    %950 = vadd.xlane.f32.xlu0 %v947
    %v951 = vpop.xlane.xlu0 %950
    %v952 = vmul.f32 %v949, 0.03125
    %v953 = vmul.f32 %v951, 0.03125
    %v954 = vadd.f32 %v952, 1e-05
    %v955 = vadd.f32 %v953, 1e-05
    %v956 = vrsqrt.pop %v954
    %v957 = vrsqrt.pop %v955
    %v958 = vmul.f32 %v944, %v956
    %v959 = vmul.f32 %v945, %v957
    %v960 = vmul.f32 %v958, %v49
    %v961 = vmul.f32 %v959, %v49
    %v962 = vadd.f32 %v960, %v56
    %v963 = vadd.f32 %v961, %v56
    %s964 = scalar_lea.vmem [#allocation3], 32
    %965 = vst [vmem:[%s964] sm:$0xff] %v962
    %966 = vst [vmem:[%s964 + $0x8] sm:$0xff] %v963
    %v967 = vld [vmem:[#allocation2] sm:$0xff]
    %v968 = vld [vmem:[#allocation2 + $0x8] sm:$0xff]
    %s969 = scalar_lea.vmem %s1, 48
    %v970 = vld [vmem:[%s969] sm:$0xff]
    %v971 = vld [vmem:[%s969 + $0x8] sm:$0xff]
    %973 = vset.pattern.permute.xlu0 0
    %974 = vperm.xlu0 %973, %v970
    %v975 = vpop.permute.xlu0 %974
    %978 = vset.pattern.permute.xlu0 0
    %979 = vperm.xlu0 %978, %v971
    %v980 = vpop.permute.xlu0 %979
    %v982 = vmul.f32 %v967, %v975
    %v983 = vmul.f32 %v968, %v980
    %v984 = vld [vmem:[%s3] sm:$0xff]
    %v985 = vld [vmem:[%s3 + $0x8] sm:$0xff]
    %v986 = vld [vmem:[%s3 + $0x10] sm:$0xff]
    %v987 = vld [vmem:[%s3 + $0x18] sm:$0xff]
    %v988 = vld [vmem:[%s3 + $0x20] sm:$0xff]
    %v989 = vld [vmem:[%s3 + $0x28] sm:$0xff]
    %v990 = vld [vmem:[%s3 + $0x30] sm:$0xff]
    %v991 = vld [vmem:[%s3 + $0x38] sm:$0xff]
    %v992 = vld [vmem:[%s3 + $0x40] sm:$0xff]
    %v993 = vld [vmem:[%s3 + $0x48] sm:$0xff]
    %v994 = vld [vmem:[%s3 + $0x50] sm:$0xff]
    %v995 = vld [vmem:[%s3 + $0x58] sm:$0xff]
    %v996 = vld [vmem:[%s3 + $0x60] sm:$0xff]
    %v997 = vld [vmem:[%s3 + $0x68] sm:$0xff]
    %v998 = vld [vmem:[%s3 + $0x70] sm:$0xff]
    %v999 = vld [vmem:[%s3 + $0x78] sm:$0xff]
    %v1000 = vld [vmem:[%s3 + $0x80] sm:$0xff]
    %v1001 = vld [vmem:[%s3 + $0x88] sm:$0xff]
    %v1002 = vld [vmem:[%s3 + $0x90] sm:$0xff]
    %v1003 = vld [vmem:[%s3 + $0x98] sm:$0xff]
    %v1004 = vld [vmem:[%s3 + $0xa0] sm:$0xff]
    %v1005 = vld [vmem:[%s3 + $0xa8] sm:$0xff]
    %v1006 = vld [vmem:[%s3 + $0xb0] sm:$0xff]
    %v1007 = vld [vmem:[%s3 + $0xb8] sm:$0xff]
    %v1008 = vld [vmem:[%s3 + $0xc0] sm:$0xff]
    %v1009 = vld [vmem:[%s3 + $0xc8] sm:$0xff]
    %v1010 = vld [vmem:[%s3 + $0xd0] sm:$0xff]
    %v1011 = vld [vmem:[%s3 + $0xd8] sm:$0xff]
    %v1012 = vld [vmem:[%s3 + $0xe0] sm:$0xff]
    %v1013 = vld [vmem:[%s3 + $0xe8] sm:$0xff]
    %v1014 = vld [vmem:[%s3 + $0xf0] sm:$0xff]
    %v1015 = vld [vmem:[%s3 + $0xf8] sm:$0xff]
    %v1016 = vld [vmem:[%s3 + $0x100] sm:$0xff]
    %v1017 = vld [vmem:[%s3 + $0x108] sm:$0xff]
    %v1018 = vld [vmem:[%s3 + $0x110] sm:$0xff]
    %v1019 = vld [vmem:[%s3 + $0x118] sm:$0xff]
    %v1020 = vld [vmem:[%s3 + $0x120] sm:$0xff]
    %v1021 = vld [vmem:[%s3 + $0x128] sm:$0xff]
    %v1022 = vld [vmem:[%s3 + $0x130] sm:$0xff]
    %v1023 = vld [vmem:[%s3 + $0x138] sm:$0xff]
    %v1024 = vld [vmem:[%s3 + $0x140] sm:$0xff]
    %v1025 = vld [vmem:[%s3 + $0x148] sm:$0xff]
    %v1026 = vld [vmem:[%s3 + $0x150] sm:$0xff]
    %v1027 = vld [vmem:[%s3 + $0x158] sm:$0xff]
    %v1028 = vld [vmem:[%s3 + $0x160] sm:$0xff]
    %v1029 = vld [vmem:[%s3 + $0x168] sm:$0xff]
    %v1030 = vld [vmem:[%s3 + $0x170] sm:$0xff]
    %v1031 = vld [vmem:[%s3 + $0x178] sm:$0xff]
    %1032 = vmatprep.subr.mxu0 %v985
    %1033 = vmatpush1.msra.mxu0 %v984
    %1034 = vmatprep.subr.mxu0 %v988
    %1035 = vmatpush1.msra.mxu0 %v987
    %1036 = vmatprep.subr.mxu0 %v991
    %1037 = vmatpush1.msra.mxu0 %v990
    %1038 = vmatprep.subr.mxu0 %v994
    %1039 = vmatpush1.msra.mxu0 %v993
    %1040 = vmatprep.subr.mxu0 %v997
    %1041 = vmatpush1.msra.mxu0 %v996
    %1042 = vmatprep.subr.mxu0 %v1000
    %1043 = vmatpush1.msra.mxu0 %v999
    %1044 = vmatprep.subr.mxu0 %v1003
    %1045 = vmatpush1.msra.mxu0 %v1002
    %1046 = vmatprep.subr.mxu0 %v1006
    %1047 = vmatpush1.msra.mxu0 %v1005
    %1048 = vmatprep.subr.mxu0 %v1009
    %1049 = vmatpush1.msra.mxu0 %v1008
    %1050 = vmatprep.subr.mxu0 %v1012
    %1051 = vmatpush1.msra.mxu0 %v1011
    %1052 = vmatprep.subr.mxu0 %v1015
    %1053 = vmatpush1.msra.mxu0 %v1014
    %1054 = vmatprep.subr.mxu0 %v1018
    %1055 = vmatpush1.msra.mxu0 %v1017
    %1056 = vmatprep.subr.mxu0 %v1021
    %1057 = vmatpush1.msra.mxu0 %v1020
    %1058 = vmatprep.subr.mxu0 %v1024
    %1059 = vmatpush1.msra.mxu0 %v1023
    %1060 = vmatprep.subr.mxu0 %v1027
    %1061 = vmatpush1.msra.mxu0 %v1026
    %1062 = vmatprep.subr.mxu0 %v1030
    %1063 = vmatpush1.msra.mxu0 %v1029
    %1064 = vmatprep.subr.mxu0 0.0
    %1065 = vmatpush1.msra.mxu0 0.0
    %1066 = vmatprep.subr.mxu0 0.0
    %1067 = vmatpush1.msra.mxu0 0.0
    %1068 = vmatprep.subr.mxu0 0.0
    %1069 = vmatpush1.msra.mxu0 0.0
    %1070 = vmatprep.subr.mxu0 0.0
    %1071 = vmatpush1.msra.mxu0 0.0
    %1072 = vmatprep.subr.mxu0 0.0
    %1073 = vmatpush1.msra.mxu0 0.0
    %1074 = vmatprep.subr.mxu0 0.0
    %1075 = vmatpush1.msra.mxu0 0.0
    %1076 = vmatprep.subr.mxu0 0.0
    %1077 = vmatpush1.msra.mxu0 0.0
    %1078 = vmatprep.subr.mxu0 0.0
    %1079 = vmatpush1.msra.mxu0 0.0
    %1080 = vmatprep.subr.mxu0 0.0
    %1081 = vmatpush1.msra.mxu0 0.0
    %1082 = vmatprep.subr.mxu0 0.0
    %1083 = vmatpush1.msra.mxu0 0.0
    %1084 = vmatprep.subr.mxu0 0.0
    %1085 = vmatpush1.msra.mxu0 0.0
    %1086 = vmatprep.subr.mxu0 0.0
    %1087 = vmatpush1.msra.mxu0 0.0
    %1088 = vmatprep.subr.mxu0 0.0
    %1089 = vmatpush1.msra.mxu0 0.0
    %1090 = vmatprep.subr.mxu0 0.0
    %1091 = vmatpush1.msra.mxu0 0.0
    %1092 = vmatprep.subr.mxu0 0.0
    %1093 = vmatpush1.msra.mxu0 0.0
    %1094 = vmatprep.subr.mxu0 0.0
    %1095 = vmatpush1.msra.mxu0 0.0
    %1096 = vmatprep.mubr.f32.mxu0 0.0
    %1097 = vmatmul.mubr.f32.gmra.mrb[0].mxu0 %v982
    %v1098 = vpop.f32.mrb[0].mxu0
    %v1099 = vadd.f32 0.0, %v1098
    %v1100 = vpop.f32.mrb[0].mxu0
    %v1101 = vadd.f32 0.0, %v1100
    %1102 = vmatprep.mubr.f32.mxu0 0.0
    %1103 = vmatmul.mubr.f32.gmra.mrb[0].mxu0 %v983
    %v1104 = vpop.f32.mrb[0].mxu0
    %v1105 = vadd.f32 0.0, %v1104
    %v1106 = vpop.f32.mrb[0].mxu0
    %v1107 = vadd.f32 0.0, %v1106
    %1108 = vdwg.mxu0
    %1109 = vmatprep.subr.mxu0 0.0
    %1110 = vmatpush1.msra.mxu0 %v986
    %1111 = vmatprep.subr.mxu0 0.0
    %1112 = vmatpush1.msra.mxu0 %v989
    %1113 = vmatprep.subr.mxu0 0.0
    %1114 = vmatpush1.msra.mxu0 %v992
    %1115 = vmatprep.subr.mxu0 0.0
    %1116 = vmatpush1.msra.mxu0 %v995
    %1117 = vmatprep.subr.mxu0 0.0
    %1118 = vmatpush1.msra.mxu0 %v998
    %1119 = vmatprep.subr.mxu0 0.0
    %1120 = vmatpush1.msra.mxu0 %v1001
    %1121 = vmatprep.subr.mxu0 0.0
    %1122 = vmatpush1.msra.mxu0 %v1004
    %1123 = vmatprep.subr.mxu0 0.0
    %1124 = vmatpush1.msra.mxu0 %v1007
    %1125 = vmatprep.subr.mxu0 0.0
    %1126 = vmatpush1.msra.mxu0 %v1010
    %1127 = vmatprep.subr.mxu0 0.0
    %1128 = vmatpush1.msra.mxu0 %v1013
    %1129 = vmatprep.subr.mxu0 0.0
    %1130 = vmatpush1.msra.mxu0 %v1016
    %1131 = vmatprep.subr.mxu0 0.0
    %1132 = vmatpush1.msra.mxu0 %v1019
    %1133 = vmatprep.subr.mxu0 0.0
    %1134 = vmatpush1.msra.mxu0 %v1022
    %1135 = vmatprep.subr.mxu0 0.0
    %1136 = vmatpush1.msra.mxu0 %v1025
    %1137 = vmatprep.subr.mxu0 0.0
    %1138 = vmatpush1.msra.mxu0 %v1028
    %1139 = vmatprep.subr.mxu0 0.0
    %1140 = vmatpush1.msra.mxu0 %v1031
    %1141 = vmatprep.subr.mxu0 0.0
    %1142 = vmatpush1.msra.mxu0 0.0
    %1143 = vmatprep.subr.mxu0 0.0
    %1144 = vmatpush1.msra.mxu0 0.0
    %1145 = vmatprep.subr.mxu0 0.0
    %1146 = vmatpush1.msra.mxu0 0.0
    %1147 = vmatprep.subr.mxu0 0.0
    %1148 = vmatpush1.msra.mxu0 0.0
    %1149 = vmatprep.subr.mxu0 0.0
    %1150 = vmatpush1.msra.mxu0 0.0
    %1151 = vmatprep.subr.mxu0 0.0
    %1152 = vmatpush1.msra.mxu0 0.0
    %1153 = vmatprep.subr.mxu0 0.0
    %1154 = vmatpush1.msra.mxu0 0.0
    %1155 = vmatprep.subr.mxu0 0.0
    %1156 = vmatpush1.msra.mxu0 0.0
    %1157 = vmatprep.subr.mxu0 0.0
    %1158 = vmatpush1.msra.mxu0 0.0
    %1159 = vmatprep.subr.mxu0 0.0
    %1160 = vmatpush1.msra.mxu0 0.0
    %1161 = vmatprep.subr.mxu0 0.0
    %1162 = vmatpush1.msra.mxu0 0.0
    %1163 = vmatprep.subr.mxu0 0.0
    %1164 = vmatpush1.msra.mxu0 0.0
    %1165 = vmatprep.subr.mxu0 0.0
    %1166 = vmatpush1.msra.mxu0 0.0
    %1167 = vmatprep.subr.mxu0 0.0
    %1168 = vmatpush1.msra.mxu0 0.0
    %1169 = vmatprep.subr.mxu0 0.0
    %1170 = vmatpush1.msra.mxu0 0.0
    %1171 = vmatprep.subr.mxu0 0.0
    %1172 = vmatpush1.msra.mxu0 0.0
    %1173 = vmatprep.mubr.f32.mxu0 0.0
    %1174 = vmatmul.mubr.f32.gmra.mrb[0].mxu0 %v982
    %v1175 = vpop.f32.mrb[0].mxu0
    %v1176 = vadd.f32 0.0, %v1175
    %v1177 = vpop.f32.mrb[0].mxu0
    %1178 = vmatprep.mubr.f32.mxu0 0.0
    %1179 = vmatmul.mubr.f32.gmra.mrb[0].mxu0 %v983
    %v1180 = vpop.f32.mrb[0].mxu0
    %v1181 = vadd.f32 0.0, %v1180
    %v1182 = vpop.f32.mrb[0].mxu0
    %1183 = vdwg.mxu0
    %s1184 = scalar_lea.vmem %s0, 144
    %v1185 = vld [vmem:[%s1184] sm:$0xff]
    %v1186 = vld [vmem:[%s1184 + $0x8] sm:$0xff]
    %v1187 = vld [vmem:[%s1184 + $0x10] sm:$0xff]
    %v1188 = vld [vmem:[%s1184 + $0x18] sm:$0xff]
    %v1189 = vld [vmem:[%s1184 + $0x20] sm:$0xff]
    %v1190 = vld [vmem:[%s1184 + $0x28] sm:$0xff]
    %v1191 = vadd.f32 %v1185, %v1099
    %v1192 = vadd.f32 %v1186, %v1101
    %v1193 = vadd.f32 %v1188, %v1105
    %v1194 = vadd.f32 %v1189, %v1107
    %v1195 = vxor.u32 %v1191, 2147483648
    %v1196 = vxor.u32 %v1192, 2147483648
    %v1197 = vxor.u32 %v1193, 2147483648
    %v1198 = vxor.u32 %v1194, 2147483648
    %v1199 = vmul.f32 %v1195, 1.442695
    %v1200 = vpow.pop %v1199
    %v1201 = vmul.f32 %v1196, 1.442695
    %v1202 = vpow.pop %v1201
    %v1203 = vmul.f32 %v1197, 1.442695
    %v1204 = vpow.pop %v1203
    %v1205 = vmul.f32 %v1198, 1.442695
    %v1206 = vpow.pop %v1205
    %v1207 = vadd.f32 %v1200, 1.0
    %v1208 = vadd.f32 %v1202, 1.0
    %v1209 = vadd.f32 %v1204, 1.0
    %v1210 = vadd.f32 %v1206, 1.0
    %v1211 = vrcp.pop %v1207
    %v1212 = vmul.f32 1.0, %v1211
    %v1213 = vrcp.pop %v1208
    %v1214 = vmul.f32 1.0, %v1213
    %v1215 = vrcp.pop %v1209
    %v1216 = vmul.f32 1.0, %v1215
    %v1217 = vrcp.pop %v1210
    %v1218 = vmul.f32 1.0, %v1217
    %v1219 = vadd.f32 %v1176, %v42
    %v1220 = vadd.f32 %v1181, %v42
    %v1221 = vmul.f32 %v1212, %v1219
    %v1222 = vmul.f32 %v1216, %v1220
    %v1223 = vadd.f32 %v1187, %v1221
    %v1224 = vadd.f32 %v1190, %v1222
    %v1225 = vtanh.pop %v1223
    %v1226 = vtanh.pop %v1224
    %v1227 = vsub.f32 1.0, %v1214
    %v1228 = vsub.f32 1.0, %v1218
    %v1229 = vmul.f32 %v1227, %v1225
    %v1230 = vmul.f32 %v1228, %v1226
    %v1231 = vmul.f32 %v1214, %v982
    %v1232 = vmul.f32 %v1218, %v983
    %v1233 = vadd.f32 %v1229, %v1231
    %v1234 = vadd.f32 %v1230, %v1232
    %1235 = vst [vmem:[#allocation2] sm:$0xff] %v1233
    %1236 = vst [vmem:[#allocation2 + $0x8] sm:$0xff] %v1234
    %v1237 = vsel %vm60, %v1233, 0.0
    %v1238 = vsel %vm60, %v1234, 0.0
    %1239 = vadd.xlane.f32.xlu0 %v1237
    %v1240 = vpop.xlane.xlu0 %1239
    %1241 = vadd.xlane.f32.xlu0 %v1238
    %v1242 = vpop.xlane.xlu0 %1241
    %v1243 = vmul.f32 %v1240, 0.03125
    %v1244 = vmul.f32 %v1242, 0.03125
    %v1245 = vsub.f32 %v1237, %v1243
    %v1246 = vsub.f32 %v1238, %v1244
    %v1247 = vsel %vm60, %v1245, 0.0
    %v1248 = vsel %vm60, %v1246, 0.0
    %v1249 = vmul.f32 %v1247, %v1247
    %v1250 = vmul.f32 %v1248, %v1248
    %1251 = vadd.xlane.f32.xlu0 %v1249
    %v1252 = vpop.xlane.xlu0 %1251
    %1253 = vadd.xlane.f32.xlu0 %v1250
    %v1254 = vpop.xlane.xlu0 %1253
    %v1255 = vmul.f32 %v1252, 0.03125
    %v1256 = vmul.f32 %v1254, 0.03125
    %v1257 = vadd.f32 %v1255, 1e-05
    %v1258 = vadd.f32 %v1256, 1e-05
    %v1259 = vrsqrt.pop %v1257
    %v1260 = vrsqrt.pop %v1258
    %v1261 = vmul.f32 %v1247, %v1259
    %v1262 = vmul.f32 %v1248, %v1260
    %v1263 = vmul.f32 %v1261, %v49
    %v1264 = vmul.f32 %v1262, %v49
    %v1265 = vadd.f32 %v1263, %v56
    %v1266 = vadd.f32 %v1264, %v56
    %s1267 = scalar_lea.vmem [#allocation3], 48
    %1268 = vst [vmem:[%s1267] sm:$0xff] %v1265
    %1269 = vst [vmem:[%s1267 + $0x8] sm:$0xff] %v1266
    %v1270 = vld [vmem:[#allocation2] sm:$0xff]
    %v1271 = vld [vmem:[#allocation2 + $0x8] sm:$0xff]
    %s1272 = scalar_lea.vmem %s1, 64
    %v1273 = vld [vmem:[%s1272] sm:$0xff]
    %v1274 = vld [vmem:[%s1272 + $0x8] sm:$0xff]
    %1276 = vset.pattern.permute.xlu0 0
    %1277 = vperm.xlu0 %1276, %v1273
    %v1278 = vpop.permute.xlu0 %1277
    %1281 = vset.pattern.permute.xlu0 0
    %1282 = vperm.xlu0 %1281, %v1274
    %v1283 = vpop.permute.xlu0 %1282
    %v1285 = vmul.f32 %v1270, %v1278
    %v1286 = vmul.f32 %v1271, %v1283
    %v1287 = vld [vmem:[%s3] sm:$0xff]
    %v1288 = vld [vmem:[%s3 + $0x8] sm:$0xff]
    %v1289 = vld [vmem:[%s3 + $0x10] sm:$0xff]
    %v1290 = vld [vmem:[%s3 + $0x18] sm:$0xff]
    %v1291 = vld [vmem:[%s3 + $0x20] sm:$0xff]
    %v1292 = vld [vmem:[%s3 + $0x28] sm:$0xff]
    %v1293 = vld [vmem:[%s3 + $0x30] sm:$0xff]
    %v1294 = vld [vmem:[%s3 + $0x38] sm:$0xff]
    %v1295 = vld [vmem:[%s3 + $0x40] sm:$0xff]
    %v1296 = vld [vmem:[%s3 + $0x48] sm:$0xff]
    %v1297 = vld [vmem:[%s3 + $0x50] sm:$0xff]
    %v1298 = vld [vmem:[%s3 + $0x58] sm:$0xff]
    %v1299 = vld [vmem:[%s3 + $0x60] sm:$0xff]
    %v1300 = vld [vmem:[%s3 + $0x68] sm:$0xff]
    %v1301 = vld [vmem:[%s3 + $0x70] sm:$0xff]
    %v1302 = vld [vmem:[%s3 + $0x78] sm:$0xff]
    %v1303 = vld [vmem:[%s3 + $0x80] sm:$0xff]
    %v1304 = vld [vmem:[%s3 + $0x88] sm:$0xff]
    %v1305 = vld [vmem:[%s3 + $0x90] sm:$0xff]
    %v1306 = vld [vmem:[%s3 + $0x98] sm:$0xff]
    %v1307 = vld [vmem:[%s3 + $0xa0] sm:$0xff]
    %v1308 = vld [vmem:[%s3 + $0xa8] sm:$0xff]
    %v1309 = vld [vmem:[%s3 + $0xb0] sm:$0xff]
    %v1310 = vld [vmem:[%s3 + $0xb8] sm:$0xff]
    %v1311 = vld [vmem:[%s3 + $0xc0] sm:$0xff]
    %v1312 = vld [vmem:[%s3 + $0xc8] sm:$0xff]
    %v1313 = vld [vmem:[%s3 + $0xd0] sm:$0xff]
    %v1314 = vld [vmem:[%s3 + $0xd8] sm:$0xff]
    %v1315 = vld [vmem:[%s3 + $0xe0] sm:$0xff]
    %v1316 = vld [vmem:[%s3 + $0xe8] sm:$0xff]
    %v1317 = vld [vmem:[%s3 + $0xf0] sm:$0xff]
    %v1318 = vld [vmem:[%s3 + $0xf8] sm:$0xff]
    %v1319 = vld [vmem:[%s3 + $0x100] sm:$0xff]
    %v1320 = vld [vmem:[%s3 + $0x108] sm:$0xff]
    %v1321 = vld [vmem:[%s3 + $0x110] sm:$0xff]
    %v1322 = vld [vmem:[%s3 + $0x118] sm:$0xff]
    %v1323 = vld [vmem:[%s3 + $0x120] sm:$0xff]
    %v1324 = vld [vmem:[%s3 + $0x128] sm:$0xff]
    %v1325 = vld [vmem:[%s3 + $0x130] sm:$0xff]
    %v1326 = vld [vmem:[%s3 + $0x138] sm:$0xff]
    %v1327 = vld [vmem:[%s3 + $0x140] sm:$0xff]
    %v1328 = vld [vmem:[%s3 + $0x148] sm:$0xff]
    %v1329 = vld [vmem:[%s3 + $0x150] sm:$0xff]
    %v1330 = vld [vmem:[%s3 + $0x158] sm:$0xff]
    %v1331 = vld [vmem:[%s3 + $0x160] sm:$0xff]
    %v1332 = vld [vmem:[%s3 + $0x168] sm:$0xff]
    %v1333 = vld [vmem:[%s3 + $0x170] sm:$0xff]
    %v1334 = vld [vmem:[%s3 + $0x178] sm:$0xff]
    %1335 = vmatprep.subr.mxu0 %v1288
    %1336 = vmatpush1.msra.mxu0 %v1287
    %1337 = vmatprep.subr.mxu0 %v1291
    %1338 = vmatpush1.msra.mxu0 %v1290
    %1339 = vmatprep.subr.mxu0 %v1294
    %1340 = vmatpush1.msra.mxu0 %v1293
    %1341 = vmatprep.subr.mxu0 %v1297
    %1342 = vmatpush1.msra.mxu0 %v1296
    %1343 = vmatprep.subr.mxu0 %v1300
    %1344 = vmatpush1.msra.mxu0 %v1299
    %1345 = vmatprep.subr.mxu0 %v1303
    %1346 = vmatpush1.msra.mxu0 %v1302
    %1347 = vmatprep.subr.mxu0 %v1306
    %1348 = vmatpush1.msra.mxu0 %v1305
    %1349 = vmatprep.subr.mxu0 %v1309
    %1350 = vmatpush1.msra.mxu0 %v1308
    %1351 = vmatprep.subr.mxu0 %v1312
    %1352 = vmatpush1.msra.mxu0 %v1311
    %1353 = vmatprep.subr.mxu0 %v1315
    %1354 = vmatpush1.msra.mxu0 %v1314
    %1355 = vmatprep.subr.mxu0 %v1318
    %1356 = vmatpush1.msra.mxu0 %v1317
    %1357 = vmatprep.subr.mxu0 %v1321
    %1358 = vmatpush1.msra.mxu0 %v1320
    %1359 = vmatprep.subr.mxu0 %v1324
    %1360 = vmatpush1.msra.mxu0 %v1323
    %1361 = vmatprep.subr.mxu0 %v1327
    %1362 = vmatpush1.msra.mxu0 %v1326
    %1363 = vmatprep.subr.mxu0 %v1330
    %1364 = vmatpush1.msra.mxu0 %v1329
    %1365 = vmatprep.subr.mxu0 %v1333
    %1366 = vmatpush1.msra.mxu0 %v1332
    %1367 = vmatprep.subr.mxu0 0.0
    %1368 = vmatpush1.msra.mxu0 0.0
    %1369 = vmatprep.subr.mxu0 0.0
    %1370 = vmatpush1.msra.mxu0 0.0
    %1371 = vmatprep.subr.mxu0 0.0
    %1372 = vmatpush1.msra.mxu0 0.0
    %1373 = vmatprep.subr.mxu0 0.0
    %1374 = vmatpush1.msra.mxu0 0.0
    %1375 = vmatprep.subr.mxu0 0.0
    %1376 = vmatpush1.msra.mxu0 0.0
    %1377 = vmatprep.subr.mxu0 0.0
    %1378 = vmatpush1.msra.mxu0 0.0
    %1379 = vmatprep.subr.mxu0 0.0
    %1380 = vmatpush1.msra.mxu0 0.0
    %1381 = vmatprep.subr.mxu0 0.0
    %1382 = vmatpush1.msra.mxu0 0.0
    %1383 = vmatprep.subr.mxu0 0.0
    %1384 = vmatpush1.msra.mxu0 0.0
    %1385 = vmatprep.subr.mxu0 0.0
    %1386 = vmatpush1.msra.mxu0 0.0
    %1387 = vmatprep.subr.mxu0 0.0
    %1388 = vmatpush1.msra.mxu0 0.0
    %1389 = vmatprep.subr.mxu0 0.0
    %1390 = vmatpush1.msra.mxu0 0.0
    %1391 = vmatprep.subr.mxu0 0.0
    %1392 = vmatpush1.msra.mxu0 0.0
    %1393 = vmatprep.subr.mxu0 0.0
    %1394 = vmatpush1.msra.mxu0 0.0
    %1395 = vmatprep.subr.mxu0 0.0
    %1396 = vmatpush1.msra.mxu0 0.0
    %1397 = vmatprep.subr.mxu0 0.0
    %1398 = vmatpush1.msra.mxu0 0.0
    %1399 = vmatprep.mubr.f32.mxu0 0.0
    %1400 = vmatmul.mubr.f32.gmra.mrb[0].mxu0 %v1285
    %v1401 = vpop.f32.mrb[0].mxu0
    %v1402 = vadd.f32 0.0, %v1401
    %v1403 = vpop.f32.mrb[0].mxu0
    %v1404 = vadd.f32 0.0, %v1403
    %1405 = vmatprep.mubr.f32.mxu0 0.0
    %1406 = vmatmul.mubr.f32.gmra.mrb[0].mxu0 %v1286
    %v1407 = vpop.f32.mrb[0].mxu0
    %v1408 = vadd.f32 0.0, %v1407
    %v1409 = vpop.f32.mrb[0].mxu0
    %v1410 = vadd.f32 0.0, %v1409
    %1411 = vdwg.mxu0
    %1412 = vmatprep.subr.mxu0 0.0
    %1413 = vmatpush1.msra.mxu0 %v1289
    %1414 = vmatprep.subr.mxu0 0.0
    %1415 = vmatpush1.msra.mxu0 %v1292
    %1416 = vmatprep.subr.mxu0 0.0
    %1417 = vmatpush1.msra.mxu0 %v1295
    %1418 = vmatprep.subr.mxu0 0.0
    %1419 = vmatpush1.msra.mxu0 %v1298
    %1420 = vmatprep.subr.mxu0 0.0
    %1421 = vmatpush1.msra.mxu0 %v1301
    %1422 = vmatprep.subr.mxu0 0.0
    %1423 = vmatpush1.msra.mxu0 %v1304
    %1424 = vmatprep.subr.mxu0 0.0
    %1425 = vmatpush1.msra.mxu0 %v1307
    %1426 = vmatprep.subr.mxu0 0.0
    %1427 = vmatpush1.msra.mxu0 %v1310
    %1428 = vmatprep.subr.mxu0 0.0
    %1429 = vmatpush1.msra.mxu0 %v1313
    %1430 = vmatprep.subr.mxu0 0.0
    %1431 = vmatpush1.msra.mxu0 %v1316
    %1432 = vmatprep.subr.mxu0 0.0
    %1433 = vmatpush1.msra.mxu0 %v1319
    %1434 = vmatprep.subr.mxu0 0.0
    %1435 = vmatpush1.msra.mxu0 %v1322
    %1436 = vmatprep.subr.mxu0 0.0
    %1437 = vmatpush1.msra.mxu0 %v1325
    %1438 = vmatprep.subr.mxu0 0.0
    %1439 = vmatpush1.msra.mxu0 %v1328
    %1440 = vmatprep.subr.mxu0 0.0
    %1441 = vmatpush1.msra.mxu0 %v1331
    %1442 = vmatprep.subr.mxu0 0.0
    %1443 = vmatpush1.msra.mxu0 %v1334
    %1444 = vmatprep.subr.mxu0 0.0
    %1445 = vmatpush1.msra.mxu0 0.0
    %1446 = vmatprep.subr.mxu0 0.0
    %1447 = vmatpush1.msra.mxu0 0.0
    %1448 = vmatprep.subr.mxu0 0.0
    %1449 = vmatpush1.msra.mxu0 0.0
    %1450 = vmatprep.subr.mxu0 0.0
    %1451 = vmatpush1.msra.mxu0 0.0
    %1452 = vmatprep.subr.mxu0 0.0
    %1453 = vmatpush1.msra.mxu0 0.0
    %1454 = vmatprep.subr.mxu0 0.0
    %1455 = vmatpush1.msra.mxu0 0.0
    %1456 = vmatprep.subr.mxu0 0.0
    %1457 = vmatpush1.msra.mxu0 0.0
    %1458 = vmatprep.subr.mxu0 0.0
    %1459 = vmatpush1.msra.mxu0 0.0
    %1460 = vmatprep.subr.mxu0 0.0
    %1461 = vmatpush1.msra.mxu0 0.0
    %1462 = vmatprep.subr.mxu0 0.0
    %1463 = vmatpush1.msra.mxu0 0.0
    %1464 = vmatprep.subr.mxu0 0.0
    %1465 = vmatpush1.msra.mxu0 0.0
    %1466 = vmatprep.subr.mxu0 0.0
    %1467 = vmatpush1.msra.mxu0 0.0
    %1468 = vmatprep.subr.mxu0 0.0
    %1469 = vmatpush1.msra.mxu0 0.0
    %1470 = vmatprep.subr.mxu0 0.0
    %1471 = vmatpush1.msra.mxu0 0.0
    %1472 = vmatprep.subr.mxu0 0.0
    %1473 = vmatpush1.msra.mxu0 0.0
    %1474 = vmatprep.subr.mxu0 0.0
    %1475 = vmatpush1.msra.mxu0 0.0
    %1476 = vmatprep.mubr.f32.mxu0 0.0
    %1477 = vmatmul.mubr.f32.gmra.mrb[0].mxu0 %v1285
    %v1478 = vpop.f32.mrb[0].mxu0
    %v1479 = vadd.f32 0.0, %v1478
    %v1480 = vpop.f32.mrb[0].mxu0
    %1481 = vmatprep.mubr.f32.mxu0 0.0
    %1482 = vmatmul.mubr.f32.gmra.mrb[0].mxu0 %v1286
    %v1483 = vpop.f32.mrb[0].mxu0
    %v1484 = vadd.f32 0.0, %v1483
    %v1485 = vpop.f32.mrb[0].mxu0
    %1486 = vdwg.mxu0
    %s1487 = scalar_lea.vmem %s0, 192
    %v1488 = vld [vmem:[%s1487] sm:$0xff]
    %v1489 = vld [vmem:[%s1487 + $0x8] sm:$0xff]
    %v1490 = vld [vmem:[%s1487 + $0x10] sm:$0xff]
    %v1491 = vld [vmem:[%s1487 + $0x18] sm:$0xff]
    %v1492 = vld [vmem:[%s1487 + $0x20] sm:$0xff]
    %v1493 = vld [vmem:[%s1487 + $0x28] sm:$0xff]
    %v1494 = vadd.f32 %v1488, %v1402
    %v1495 = vadd.f32 %v1489, %v1404
    %v1496 = vadd.f32 %v1491, %v1408
    %v1497 = vadd.f32 %v1492, %v1410
    %v1498 = vxor.u32 %v1494, 2147483648
    %v1499 = vxor.u32 %v1495, 2147483648
    %v1500 = vxor.u32 %v1496, 2147483648
    %v1501 = vxor.u32 %v1497, 2147483648
    %v1502 = vmul.f32 %v1498, 1.442695
    %v1503 = vpow.pop %v1502
    %v1504 = vmul.f32 %v1499, 1.442695
    %v1505 = vpow.pop %v1504
    %v1506 = vmul.f32 %v1500, 1.442695
    %v1507 = vpow.pop %v1506
    %v1508 = vmul.f32 %v1501, 1.442695
    %v1509 = vpow.pop %v1508
    %v1510 = vadd.f32 %v1503, 1.0
    %v1511 = vadd.f32 %v1505, 1.0
    %v1512 = vadd.f32 %v1507, 1.0
    %v1513 = vadd.f32 %v1509, 1.0
    %v1514 = vrcp.pop %v1510
    %v1515 = vmul.f32 1.0, %v1514
    %v1516 = vrcp.pop %v1511
    %v1517 = vmul.f32 1.0, %v1516
    %v1518 = vrcp.pop %v1512
    %v1519 = vmul.f32 1.0, %v1518
    %v1520 = vrcp.pop %v1513
    %v1521 = vmul.f32 1.0, %v1520
    %v1522 = vadd.f32 %v1479, %v42
    %v1523 = vadd.f32 %v1484, %v42
    %v1524 = vmul.f32 %v1515, %v1522
    %v1525 = vmul.f32 %v1519, %v1523
    %v1526 = vadd.f32 %v1490, %v1524
    %v1527 = vadd.f32 %v1493, %v1525
    %v1528 = vtanh.pop %v1526
    %v1529 = vtanh.pop %v1527
    %v1530 = vsub.f32 1.0, %v1517
    %v1531 = vsub.f32 1.0, %v1521
    %v1532 = vmul.f32 %v1530, %v1528
    %v1533 = vmul.f32 %v1531, %v1529
    %v1534 = vmul.f32 %v1517, %v1285
    %v1535 = vmul.f32 %v1521, %v1286
    %v1536 = vadd.f32 %v1532, %v1534
    %v1537 = vadd.f32 %v1533, %v1535
    %1538 = vst [vmem:[#allocation2] sm:$0xff] %v1536
    %1539 = vst [vmem:[#allocation2 + $0x8] sm:$0xff] %v1537
    %v1540 = vsel %vm60, %v1536, 0.0
    %v1541 = vsel %vm60, %v1537, 0.0
    %1542 = vadd.xlane.f32.xlu0 %v1540
    %v1543 = vpop.xlane.xlu0 %1542
    %1544 = vadd.xlane.f32.xlu0 %v1541
    %v1545 = vpop.xlane.xlu0 %1544
    %v1546 = vmul.f32 %v1543, 0.03125
    %v1547 = vmul.f32 %v1545, 0.03125
    %v1548 = vsub.f32 %v1540, %v1546
    %v1549 = vsub.f32 %v1541, %v1547
    %v1550 = vsel %vm60, %v1548, 0.0
    %v1551 = vsel %vm60, %v1549, 0.0
    %v1552 = vmul.f32 %v1550, %v1550
    %v1553 = vmul.f32 %v1551, %v1551
    %1554 = vadd.xlane.f32.xlu0 %v1552
    %v1555 = vpop.xlane.xlu0 %1554
    %1556 = vadd.xlane.f32.xlu0 %v1553
    %v1557 = vpop.xlane.xlu0 %1556
    %v1558 = vmul.f32 %v1555, 0.03125
    %v1559 = vmul.f32 %v1557, 0.03125
    %v1560 = vadd.f32 %v1558, 1e-05
    %v1561 = vadd.f32 %v1559, 1e-05
    %v1562 = vrsqrt.pop %v1560
    %v1563 = vrsqrt.pop %v1561
    %v1564 = vmul.f32 %v1550, %v1562
    %v1565 = vmul.f32 %v1551, %v1563
    %v1566 = vmul.f32 %v1564, %v49
    %v1567 = vmul.f32 %v1565, %v49
    %v1568 = vadd.f32 %v1566, %v56
    %v1569 = vadd.f32 %v1567, %v56
    %s1570 = scalar_lea.vmem [#allocation3], 64
    %1571 = vst [vmem:[%s1570] sm:$0xff] %v1568
    %1572 = vst [vmem:[%s1570 + $0x8] sm:$0xff] %v1569
    %v1573 = vld [vmem:[#allocation2] sm:$0xff]
    %v1574 = vld [vmem:[#allocation2 + $0x8] sm:$0xff]
    %s1575 = scalar_lea.vmem %s1, 80
    %v1576 = vld [vmem:[%s1575] sm:$0xff]
    %v1577 = vld [vmem:[%s1575 + $0x8] sm:$0xff]
    %1579 = vset.pattern.permute.xlu0 0
    %1580 = vperm.xlu0 %1579, %v1576
    %v1581 = vpop.permute.xlu0 %1580
    %1584 = vset.pattern.permute.xlu0 0
    %1585 = vperm.xlu0 %1584, %v1577
    %v1586 = vpop.permute.xlu0 %1585
    %v1588 = vmul.f32 %v1573, %v1581
    %v1589 = vmul.f32 %v1574, %v1586
    %v1590 = vld [vmem:[%s3] sm:$0xff]
    %v1591 = vld [vmem:[%s3 + $0x8] sm:$0xff]
    %v1592 = vld [vmem:[%s3 + $0x10] sm:$0xff]
    %v1593 = vld [vmem:[%s3 + $0x18] sm:$0xff]
    %v1594 = vld [vmem:[%s3 + $0x20] sm:$0xff]
    %v1595 = vld [vmem:[%s3 + $0x28] sm:$0xff]
    %v1596 = vld [vmem:[%s3 + $0x30] sm:$0xff]
    %v1597 = vld [vmem:[%s3 + $0x38] sm:$0xff]
    %v1598 = vld [vmem:[%s3 + $0x40] sm:$0xff]
    %v1599 = vld [vmem:[%s3 + $0x48] sm:$0xff]
    %v1600 = vld [vmem:[%s3 + $0x50] sm:$0xff]
    %v1601 = vld [vmem:[%s3 + $0x58] sm:$0xff]
    %v1602 = vld [vmem:[%s3 + $0x60] sm:$0xff]
    %v1603 = vld [vmem:[%s3 + $0x68] sm:$0xff]
    %v1604 = vld [vmem:[%s3 + $0x70] sm:$0xff]
    %v1605 = vld [vmem:[%s3 + $0x78] sm:$0xff]
    %v1606 = vld [vmem:[%s3 + $0x80] sm:$0xff]
    %v1607 = vld [vmem:[%s3 + $0x88] sm:$0xff]
    %v1608 = vld [vmem:[%s3 + $0x90] sm:$0xff]
    %v1609 = vld [vmem:[%s3 + $0x98] sm:$0xff]
    %v1610 = vld [vmem:[%s3 + $0xa0] sm:$0xff]
    %v1611 = vld [vmem:[%s3 + $0xa8] sm:$0xff]
    %v1612 = vld [vmem:[%s3 + $0xb0] sm:$0xff]
    %v1613 = vld [vmem:[%s3 + $0xb8] sm:$0xff]
    %v1614 = vld [vmem:[%s3 + $0xc0] sm:$0xff]
    %v1615 = vld [vmem:[%s3 + $0xc8] sm:$0xff]
    %v1616 = vld [vmem:[%s3 + $0xd0] sm:$0xff]
    %v1617 = vld [vmem:[%s3 + $0xd8] sm:$0xff]
    %v1618 = vld [vmem:[%s3 + $0xe0] sm:$0xff]
    %v1619 = vld [vmem:[%s3 + $0xe8] sm:$0xff]
    %v1620 = vld [vmem:[%s3 + $0xf0] sm:$0xff]
    %v1621 = vld [vmem:[%s3 + $0xf8] sm:$0xff]
    %v1622 = vld [vmem:[%s3 + $0x100] sm:$0xff]
    %v1623 = vld [vmem:[%s3 + $0x108] sm:$0xff]
    %v1624 = vld [vmem:[%s3 + $0x110] sm:$0xff]
    %v1625 = vld [vmem:[%s3 + $0x118] sm:$0xff]
    %v1626 = vld [vmem:[%s3 + $0x120] sm:$0xff]
    %v1627 = vld [vmem:[%s3 + $0x128] sm:$0xff]
    %v1628 = vld [vmem:[%s3 + $0x130] sm:$0xff]
    %v1629 = vld [vmem:[%s3 + $0x138] sm:$0xff]
    %v1630 = vld [vmem:[%s3 + $0x140] sm:$0xff]
    %v1631 = vld [vmem:[%s3 + $0x148] sm:$0xff]
    %v1632 = vld [vmem:[%s3 + $0x150] sm:$0xff]
    %v1633 = vld [vmem:[%s3 + $0x158] sm:$0xff]
    %v1634 = vld [vmem:[%s3 + $0x160] sm:$0xff]
    %v1635 = vld [vmem:[%s3 + $0x168] sm:$0xff]
    %v1636 = vld [vmem:[%s3 + $0x170] sm:$0xff]
    %v1637 = vld [vmem:[%s3 + $0x178] sm:$0xff]
    %1638 = vmatprep.subr.mxu0 %v1591
    %1639 = vmatpush1.msra.mxu0 %v1590
    %1640 = vmatprep.subr.mxu0 %v1594
    %1641 = vmatpush1.msra.mxu0 %v1593
    %1642 = vmatprep.subr.mxu0 %v1597
    %1643 = vmatpush1.msra.mxu0 %v1596
    %1644 = vmatprep.subr.mxu0 %v1600
    %1645 = vmatpush1.msra.mxu0 %v1599
    %1646 = vmatprep.subr.mxu0 %v1603
    %1647 = vmatpush1.msra.mxu0 %v1602
    %1648 = vmatprep.subr.mxu0 %v1606
    %1649 = vmatpush1.msra.mxu0 %v1605
    %1650 = vmatprep.subr.mxu0 %v1609
    %1651 = vmatpush1.msra.mxu0 %v1608
    %1652 = vmatprep.subr.mxu0 %v1612
    %1653 = vmatpush1.msra.mxu0 %v1611
    %1654 = vmatprep.subr.mxu0 %v1615
    %1655 = vmatpush1.msra.mxu0 %v1614
    %1656 = vmatprep.subr.mxu0 %v1618
    %1657 = vmatpush1.msra.mxu0 %v1617
    %1658 = vmatprep.subr.mxu0 %v1621
    %1659 = vmatpush1.msra.mxu0 %v1620
    %1660 = vmatprep.subr.mxu0 %v1624
    %1661 = vmatpush1.msra.mxu0 %v1623
    %1662 = vmatprep.subr.mxu0 %v1627
    %1663 = vmatpush1.msra.mxu0 %v1626
    %1664 = vmatprep.subr.mxu0 %v1630
    %1665 = vmatpush1.msra.mxu0 %v1629
    %1666 = vmatprep.subr.mxu0 %v1633
    %1667 = vmatpush1.msra.mxu0 %v1632
    %1668 = vmatprep.subr.mxu0 %v1636
    %1669 = vmatpush1.msra.mxu0 %v1635
    %1670 = vmatprep.subr.mxu0 0.0
    %1671 = vmatpush1.msra.mxu0 0.0
    %1672 = vmatprep.subr.mxu0 0.0
    %1673 = vmatpush1.msra.mxu0 0.0
    %1674 = vmatprep.subr.mxu0 0.0
    %1675 = vmatpush1.msra.mxu0 0.0
    %1676 = vmatprep.subr.mxu0 0.0
    %1677 = vmatpush1.msra.mxu0 0.0
    %1678 = vmatprep.subr.mxu0 0.0
    %1679 = vmatpush1.msra.mxu0 0.0
    %1680 = vmatprep.subr.mxu0 0.0
    %1681 = vmatpush1.msra.mxu0 0.0
    %1682 = vmatprep.subr.mxu0 0.0
    %1683 = vmatpush1.msra.mxu0 0.0
    %1684 = vmatprep.subr.mxu0 0.0
    %1685 = vmatpush1.msra.mxu0 0.0
    %1686 = vmatprep.subr.mxu0 0.0
    %1687 = vmatpush1.msra.mxu0 0.0
    %1688 = vmatprep.subr.mxu0 0.0
    %1689 = vmatpush1.msra.mxu0 0.0
    %1690 = vmatprep.subr.mxu0 0.0
    %1691 = vmatpush1.msra.mxu0 0.0
    %1692 = vmatprep.subr.mxu0 0.0
    %1693 = vmatpush1.msra.mxu0 0.0
    %1694 = vmatprep.subr.mxu0 0.0
    %1695 = vmatpush1.msra.mxu0 0.0
    %1696 = vmatprep.subr.mxu0 0.0
    %1697 = vmatpush1.msra.mxu0 0.0
    %1698 = vmatprep.subr.mxu0 0.0
    %1699 = vmatpush1.msra.mxu0 0.0
    %1700 = vmatprep.subr.mxu0 0.0
    %1701 = vmatpush1.msra.mxu0 0.0
    %1702 = vmatprep.mubr.f32.mxu0 0.0
    %1703 = vmatmul.mubr.f32.gmra.mrb[0].mxu0 %v1588
    %v1704 = vpop.f32.mrb[0].mxu0
    %v1705 = vadd.f32 0.0, %v1704
    %v1706 = vpop.f32.mrb[0].mxu0
    %v1707 = vadd.f32 0.0, %v1706
    %1708 = vmatprep.mubr.f32.mxu0 0.0
    %1709 = vmatmul.mubr.f32.gmra.mrb[0].mxu0 %v1589
    %v1710 = vpop.f32.mrb[0].mxu0
    %v1711 = vadd.f32 0.0, %v1710
    %v1712 = vpop.f32.mrb[0].mxu0
    %v1713 = vadd.f32 0.0, %v1712
    %1714 = vdwg.mxu0
    %1715 = vmatprep.subr.mxu0 0.0
    %1716 = vmatpush1.msra.mxu0 %v1592
    %1717 = vmatprep.subr.mxu0 0.0
    %1718 = vmatpush1.msra.mxu0 %v1595
    %1719 = vmatprep.subr.mxu0 0.0
    %1720 = vmatpush1.msra.mxu0 %v1598
    %1721 = vmatprep.subr.mxu0 0.0
    %1722 = vmatpush1.msra.mxu0 %v1601
    %1723 = vmatprep.subr.mxu0 0.0
    %1724 = vmatpush1.msra.mxu0 %v1604
    %1725 = vmatprep.subr.mxu0 0.0
    %1726 = vmatpush1.msra.mxu0 %v1607
    %1727 = vmatprep.subr.mxu0 0.0
    %1728 = vmatpush1.msra.mxu0 %v1610
    %1729 = vmatprep.subr.mxu0 0.0
    %1730 = vmatpush1.msra.mxu0 %v1613
    %1731 = vmatprep.subr.mxu0 0.0
    %1732 = vmatpush1.msra.mxu0 %v1616
    %1733 = vmatprep.subr.mxu0 0.0
    %1734 = vmatpush1.msra.mxu0 %v1619
    %1735 = vmatprep.subr.mxu0 0.0
    %1736 = vmatpush1.msra.mxu0 %v1622
    %1737 = vmatprep.subr.mxu0 0.0
    %1738 = vmatpush1.msra.mxu0 %v1625
    %1739 = vmatprep.subr.mxu0 0.0
    %1740 = vmatpush1.msra.mxu0 %v1628
    %1741 = vmatprep.subr.mxu0 0.0
    %1742 = vmatpush1.msra.mxu0 %v1631
    %1743 = vmatprep.subr.mxu0 0.0
    %1744 = vmatpush1.msra.mxu0 %v1634
    %1745 = vmatprep.subr.mxu0 0.0
    %1746 = vmatpush1.msra.mxu0 %v1637
    %1747 = vmatprep.subr.mxu0 0.0
    %1748 = vmatpush1.msra.mxu0 0.0
    %1749 = vmatprep.subr.mxu0 0.0
    %1750 = vmatpush1.msra.mxu0 0.0
    %1751 = vmatprep.subr.mxu0 0.0
    %1752 = vmatpush1.msra.mxu0 0.0
    %1753 = vmatprep.subr.mxu0 0.0
    %1754 = vmatpush1.msra.mxu0 0.0
    %1755 = vmatprep.subr.mxu0 0.0
    %1756 = vmatpush1.msra.mxu0 0.0
    %1757 = vmatprep.subr.mxu0 0.0
    %1758 = vmatpush1.msra.mxu0 0.0
    %1759 = vmatprep.subr.mxu0 0.0
    %1760 = vmatpush1.msra.mxu0 0.0
    %1761 = vmatprep.subr.mxu0 0.0
    %1762 = vmatpush1.msra.mxu0 0.0
    %1763 = vmatprep.subr.mxu0 0.0
    %1764 = vmatpush1.msra.mxu0 0.0
    %1765 = vmatprep.subr.mxu0 0.0
    %1766 = vmatpush1.msra.mxu0 0.0
    %1767 = vmatprep.subr.mxu0 0.0
    %1768 = vmatpush1.msra.mxu0 0.0
    %1769 = vmatprep.subr.mxu0 0.0
    %1770 = vmatpush1.msra.mxu0 0.0
    %1771 = vmatprep.subr.mxu0 0.0
    %1772 = vmatpush1.msra.mxu0 0.0
    %1773 = vmatprep.subr.mxu0 0.0
    %1774 = vmatpush1.msra.mxu0 0.0
    %1775 = vmatprep.subr.mxu0 0.0
    %1776 = vmatpush1.msra.mxu0 0.0
    %1777 = vmatprep.subr.mxu0 0.0
    %1778 = vmatpush1.msra.mxu0 0.0
    %1779 = vmatprep.mubr.f32.mxu0 0.0
    %1780 = vmatmul.mubr.f32.gmra.mrb[0].mxu0 %v1588
    %v1781 = vpop.f32.mrb[0].mxu0
    %v1782 = vadd.f32 0.0, %v1781
    %v1783 = vpop.f32.mrb[0].mxu0
    %1784 = vmatprep.mubr.f32.mxu0 0.0
    %1785 = vmatmul.mubr.f32.gmra.mrb[0].mxu0 %v1589
    %v1786 = vpop.f32.mrb[0].mxu0
    %v1787 = vadd.f32 0.0, %v1786
    %v1788 = vpop.f32.mrb[0].mxu0
    %1789 = vdwg.mxu0
    %s1790 = scalar_lea.vmem %s0, 240
    %v1791 = vld [vmem:[%s1790] sm:$0xff]
    %v1792 = vld [vmem:[%s1790 + $0x8] sm:$0xff]
    %v1793 = vld [vmem:[%s1790 + $0x10] sm:$0xff]
    %v1794 = vld [vmem:[%s1790 + $0x18] sm:$0xff]
    %v1795 = vld [vmem:[%s1790 + $0x20] sm:$0xff]
    %v1796 = vld [vmem:[%s1790 + $0x28] sm:$0xff]
    %v1797 = vadd.f32 %v1791, %v1705
    %v1798 = vadd.f32 %v1792, %v1707
    %v1799 = vadd.f32 %v1794, %v1711
    %v1800 = vadd.f32 %v1795, %v1713
    %v1801 = vxor.u32 %v1797, 2147483648
    %v1802 = vxor.u32 %v1798, 2147483648
    %v1803 = vxor.u32 %v1799, 2147483648
    %v1804 = vxor.u32 %v1800, 2147483648
    %v1805 = vmul.f32 %v1801, 1.442695
    %v1806 = vpow.pop %v1805
    %v1807 = vmul.f32 %v1802, 1.442695
    %v1808 = vpow.pop %v1807
    %v1809 = vmul.f32 %v1803, 1.442695
    %v1810 = vpow.pop %v1809
    %v1811 = vmul.f32 %v1804, 1.442695
    %v1812 = vpow.pop %v1811
    %v1813 = vadd.f32 %v1806, 1.0
    %v1814 = vadd.f32 %v1808, 1.0
    %v1815 = vadd.f32 %v1810, 1.0
    %v1816 = vadd.f32 %v1812, 1.0
    %v1817 = vrcp.pop %v1813
    %v1818 = vmul.f32 1.0, %v1817
    %v1819 = vrcp.pop %v1814
    %v1820 = vmul.f32 1.0, %v1819
    %v1821 = vrcp.pop %v1815
    %v1822 = vmul.f32 1.0, %v1821
    %v1823 = vrcp.pop %v1816
    %v1824 = vmul.f32 1.0, %v1823
    %v1825 = vadd.f32 %v1782, %v42
    %v1826 = vadd.f32 %v1787, %v42
    %v1827 = vmul.f32 %v1818, %v1825
    %v1828 = vmul.f32 %v1822, %v1826
    %v1829 = vadd.f32 %v1793, %v1827
    %v1830 = vadd.f32 %v1796, %v1828
    %v1831 = vtanh.pop %v1829
    %v1832 = vtanh.pop %v1830
    %v1833 = vsub.f32 1.0, %v1820
    %v1834 = vsub.f32 1.0, %v1824
    %v1835 = vmul.f32 %v1833, %v1831
    %v1836 = vmul.f32 %v1834, %v1832
    %v1837 = vmul.f32 %v1820, %v1588
    %v1838 = vmul.f32 %v1824, %v1589
    %v1839 = vadd.f32 %v1835, %v1837
    %v1840 = vadd.f32 %v1836, %v1838
    %1841 = vst [vmem:[#allocation2] sm:$0xff] %v1839
    %1842 = vst [vmem:[#allocation2 + $0x8] sm:$0xff] %v1840
    %v1843 = vsel %vm60, %v1839, 0.0
    %v1844 = vsel %vm60, %v1840, 0.0
    %1845 = vadd.xlane.f32.xlu0 %v1843
    %v1846 = vpop.xlane.xlu0 %1845
    %1847 = vadd.xlane.f32.xlu0 %v1844
    %v1848 = vpop.xlane.xlu0 %1847
    %v1849 = vmul.f32 %v1846, 0.03125
    %v1850 = vmul.f32 %v1848, 0.03125
    %v1851 = vsub.f32 %v1843, %v1849
    %v1852 = vsub.f32 %v1844, %v1850
    %v1853 = vsel %vm60, %v1851, 0.0
    %v1854 = vsel %vm60, %v1852, 0.0
    %v1855 = vmul.f32 %v1853, %v1853
    %v1856 = vmul.f32 %v1854, %v1854
    %1857 = vadd.xlane.f32.xlu0 %v1855
    %v1858 = vpop.xlane.xlu0 %1857
    %1859 = vadd.xlane.f32.xlu0 %v1856
    %v1860 = vpop.xlane.xlu0 %1859
    %v1861 = vmul.f32 %v1858, 0.03125
    %v1862 = vmul.f32 %v1860, 0.03125
    %v1863 = vadd.f32 %v1861, 1e-05
    %v1864 = vadd.f32 %v1862, 1e-05
    %v1865 = vrsqrt.pop %v1863
    %v1866 = vrsqrt.pop %v1864
    %v1867 = vmul.f32 %v1853, %v1865
    %v1868 = vmul.f32 %v1854, %v1866
    %v1869 = vmul.f32 %v1867, %v49
    %v1870 = vmul.f32 %v1868, %v49
    %v1871 = vadd.f32 %v1869, %v56
    %v1872 = vadd.f32 %v1870, %v56
    %s1873 = scalar_lea.vmem [#allocation3], 80
    %1874 = vst [vmem:[%s1873] sm:$0xff] %v1871
    %1875 = vst [vmem:[%s1873 + $0x8] sm:$0xff] %v1872
    %v1876 = vld [vmem:[#allocation2] sm:$0xff]
    %v1877 = vld [vmem:[#allocation2 + $0x8] sm:$0xff]
    %s1878 = scalar_lea.vmem %s1, 96
    %v1879 = vld [vmem:[%s1878] sm:$0xff]
    %v1880 = vld [vmem:[%s1878 + $0x8] sm:$0xff]
    %1882 = vset.pattern.permute.xlu0 0
    %1883 = vperm.xlu0 %1882, %v1879
    %v1884 = vpop.permute.xlu0 %1883
    %1887 = vset.pattern.permute.xlu0 0
    %1888 = vperm.xlu0 %1887, %v1880
    %v1889 = vpop.permute.xlu0 %1888
    %v1891 = vmul.f32 %v1876, %v1884
    %v1892 = vmul.f32 %v1877, %v1889
    %v1893 = vld [vmem:[%s3] sm:$0xff]
    %v1894 = vld [vmem:[%s3 + $0x8] sm:$0xff]
    %v1895 = vld [vmem:[%s3 + $0x10] sm:$0xff]
    %v1896 = vld [vmem:[%s3 + $0x18] sm:$0xff]
    %v1897 = vld [vmem:[%s3 + $0x20] sm:$0xff]
    %v1898 = vld [vmem:[%s3 + $0x28] sm:$0xff]
    %v1899 = vld [vmem:[%s3 + $0x30] sm:$0xff]
    %v1900 = vld [vmem:[%s3 + $0x38] sm:$0xff]
    %v1901 = vld [vmem:[%s3 + $0x40] sm:$0xff]
    %v1902 = vld [vmem:[%s3 + $0x48] sm:$0xff]
    %v1903 = vld [vmem:[%s3 + $0x50] sm:$0xff]
    %v1904 = vld [vmem:[%s3 + $0x58] sm:$0xff]
    %v1905 = vld [vmem:[%s3 + $0x60] sm:$0xff]
    %v1906 = vld [vmem:[%s3 + $0x68] sm:$0xff]
    %v1907 = vld [vmem:[%s3 + $0x70] sm:$0xff]
    %v1908 = vld [vmem:[%s3 + $0x78] sm:$0xff]
    %v1909 = vld [vmem:[%s3 + $0x80] sm:$0xff]
    %v1910 = vld [vmem:[%s3 + $0x88] sm:$0xff]
    %v1911 = vld [vmem:[%s3 + $0x90] sm:$0xff]
    %v1912 = vld [vmem:[%s3 + $0x98] sm:$0xff]
    %v1913 = vld [vmem:[%s3 + $0xa0] sm:$0xff]
    %v1914 = vld [vmem:[%s3 + $0xa8] sm:$0xff]
    %v1915 = vld [vmem:[%s3 + $0xb0] sm:$0xff]
    %v1916 = vld [vmem:[%s3 + $0xb8] sm:$0xff]
    %v1917 = vld [vmem:[%s3 + $0xc0] sm:$0xff]
    %v1918 = vld [vmem:[%s3 + $0xc8] sm:$0xff]
    %v1919 = vld [vmem:[%s3 + $0xd0] sm:$0xff]
    %v1920 = vld [vmem:[%s3 + $0xd8] sm:$0xff]
    %v1921 = vld [vmem:[%s3 + $0xe0] sm:$0xff]
    %v1922 = vld [vmem:[%s3 + $0xe8] sm:$0xff]
    %v1923 = vld [vmem:[%s3 + $0xf0] sm:$0xff]
    %v1924 = vld [vmem:[%s3 + $0xf8] sm:$0xff]
    %v1925 = vld [vmem:[%s3 + $0x100] sm:$0xff]
    %v1926 = vld [vmem:[%s3 + $0x108] sm:$0xff]
    %v1927 = vld [vmem:[%s3 + $0x110] sm:$0xff]
    %v1928 = vld [vmem:[%s3 + $0x118] sm:$0xff]
    %v1929 = vld [vmem:[%s3 + $0x120] sm:$0xff]
    %v1930 = vld [vmem:[%s3 + $0x128] sm:$0xff]
    %v1931 = vld [vmem:[%s3 + $0x130] sm:$0xff]
    %v1932 = vld [vmem:[%s3 + $0x138] sm:$0xff]
    %v1933 = vld [vmem:[%s3 + $0x140] sm:$0xff]
    %v1934 = vld [vmem:[%s3 + $0x148] sm:$0xff]
    %v1935 = vld [vmem:[%s3 + $0x150] sm:$0xff]
    %v1936 = vld [vmem:[%s3 + $0x158] sm:$0xff]
    %v1937 = vld [vmem:[%s3 + $0x160] sm:$0xff]
    %v1938 = vld [vmem:[%s3 + $0x168] sm:$0xff]
    %v1939 = vld [vmem:[%s3 + $0x170] sm:$0xff]
    %v1940 = vld [vmem:[%s3 + $0x178] sm:$0xff]
    %1941 = vmatprep.subr.mxu0 %v1894
    %1942 = vmatpush1.msra.mxu0 %v1893
    %1943 = vmatprep.subr.mxu0 %v1897
    %1944 = vmatpush1.msra.mxu0 %v1896
    %1945 = vmatprep.subr.mxu0 %v1900
    %1946 = vmatpush1.msra.mxu0 %v1899
    %1947 = vmatprep.subr.mxu0 %v1903
    %1948 = vmatpush1.msra.mxu0 %v1902
    %1949 = vmatprep.subr.mxu0 %v1906
    %1950 = vmatpush1.msra.mxu0 %v1905
    %1951 = vmatprep.subr.mxu0 %v1909
    %1952 = vmatpush1.msra.mxu0 %v1908
    %1953 = vmatprep.subr.mxu0 %v1912
    %1954 = vmatpush1.msra.mxu0 %v1911
    %1955 = vmatprep.subr.mxu0 %v1915
    %1956 = vmatpush1.msra.mxu0 %v1914
    %1957 = vmatprep.subr.mxu0 %v1918
    %1958 = vmatpush1.msra.mxu0 %v1917
    %1959 = vmatprep.subr.mxu0 %v1921
    %1960 = vmatpush1.msra.mxu0 %v1920
    %1961 = vmatprep.subr.mxu0 %v1924
    %1962 = vmatpush1.msra.mxu0 %v1923
    %1963 = vmatprep.subr.mxu0 %v1927
    %1964 = vmatpush1.msra.mxu0 %v1926
    %1965 = vmatprep.subr.mxu0 %v1930
    %1966 = vmatpush1.msra.mxu0 %v1929
    %1967 = vmatprep.subr.mxu0 %v1933
    %1968 = vmatpush1.msra.mxu0 %v1932
    %1969 = vmatprep.subr.mxu0 %v1936
    %1970 = vmatpush1.msra.mxu0 %v1935
    %1971 = vmatprep.subr.mxu0 %v1939
    %1972 = vmatpush1.msra.mxu0 %v1938
    %1973 = vmatprep.subr.mxu0 0.0
    %1974 = vmatpush1.msra.mxu0 0.0
    %1975 = vmatprep.subr.mxu0 0.0
    %1976 = vmatpush1.msra.mxu0 0.0
    %1977 = vmatprep.subr.mxu0 0.0
    %1978 = vmatpush1.msra.mxu0 0.0
    %1979 = vmatprep.subr.mxu0 0.0
    %1980 = vmatpush1.msra.mxu0 0.0
    %1981 = vmatprep.subr.mxu0 0.0
    %1982 = vmatpush1.msra.mxu0 0.0
    %1983 = vmatprep.subr.mxu0 0.0
    %1984 = vmatpush1.msra.mxu0 0.0
    %1985 = vmatprep.subr.mxu0 0.0
    %1986 = vmatpush1.msra.mxu0 0.0
    %1987 = vmatprep.subr.mxu0 0.0
    %1988 = vmatpush1.msra.mxu0 0.0
    %1989 = vmatprep.subr.mxu0 0.0
    %1990 = vmatpush1.msra.mxu0 0.0
    %1991 = vmatprep.subr.mxu0 0.0
    %1992 = vmatpush1.msra.mxu0 0.0
    %1993 = vmatprep.subr.mxu0 0.0
    %1994 = vmatpush1.msra.mxu0 0.0
    %1995 = vmatprep.subr.mxu0 0.0
    %1996 = vmatpush1.msra.mxu0 0.0
    %1997 = vmatprep.subr.mxu0 0.0
    %1998 = vmatpush1.msra.mxu0 0.0
    %1999 = vmatprep.subr.mxu0 0.0
    %2000 = vmatpush1.msra.mxu0 0.0
    %2001 = vmatprep.subr.mxu0 0.0
    %2002 = vmatpush1.msra.mxu0 0.0
    %2003 = vmatprep.subr.mxu0 0.0
    %2004 = vmatpush1.msra.mxu0 0.0
    %2005 = vmatprep.mubr.f32.mxu0 0.0
    %2006 = vmatmul.mubr.f32.gmra.mrb[0].mxu0 %v1891
    %v2007 = vpop.f32.mrb[0].mxu0
    %v2008 = vadd.f32 0.0, %v2007
    %v2009 = vpop.f32.mrb[0].mxu0
    %v2010 = vadd.f32 0.0, %v2009
    %2011 = vmatprep.mubr.f32.mxu0 0.0
    %2012 = vmatmul.mubr.f32.gmra.mrb[0].mxu0 %v1892
    %v2013 = vpop.f32.mrb[0].mxu0
    %v2014 = vadd.f32 0.0, %v2013
    %v2015 = vpop.f32.mrb[0].mxu0
    %v2016 = vadd.f32 0.0, %v2015
    %2017 = vdwg.mxu0
    %2018 = vmatprep.subr.mxu0 0.0
    %2019 = vmatpush1.msra.mxu0 %v1895
    %2020 = vmatprep.subr.mxu0 0.0
    %2021 = vmatpush1.msra.mxu0 %v1898
    %2022 = vmatprep.subr.mxu0 0.0
    %2023 = vmatpush1.msra.mxu0 %v1901
    %2024 = vmatprep.subr.mxu0 0.0
    %2025 = vmatpush1.msra.mxu0 %v1904
    %2026 = vmatprep.subr.mxu0 0.0
    %2027 = vmatpush1.msra.mxu0 %v1907
    %2028 = vmatprep.subr.mxu0 0.0
    %2029 = vmatpush1.msra.mxu0 %v1910
    %2030 = vmatprep.subr.mxu0 0.0
    %2031 = vmatpush1.msra.mxu0 %v1913
    %2032 = vmatprep.subr.mxu0 0.0
    %2033 = vmatpush1.msra.mxu0 %v1916
    %2034 = vmatprep.subr.mxu0 0.0
    %2035 = vmatpush1.msra.mxu0 %v1919
    %2036 = vmatprep.subr.mxu0 0.0
    %2037 = vmatpush1.msra.mxu0 %v1922
    %2038 = vmatprep.subr.mxu0 0.0
    %2039 = vmatpush1.msra.mxu0 %v1925
    %2040 = vmatprep.subr.mxu0 0.0
    %2041 = vmatpush1.msra.mxu0 %v1928
    %2042 = vmatprep.subr.mxu0 0.0
    %2043 = vmatpush1.msra.mxu0 %v1931
    %2044 = vmatprep.subr.mxu0 0.0
    %2045 = vmatpush1.msra.mxu0 %v1934
    %2046 = vmatprep.subr.mxu0 0.0
    %2047 = vmatpush1.msra.mxu0 %v1937
    %2048 = vmatprep.subr.mxu0 0.0
    %2049 = vmatpush1.msra.mxu0 %v1940
    %2050 = vmatprep.subr.mxu0 0.0
    %2051 = vmatpush1.msra.mxu0 0.0
    %2052 = vmatprep.subr.mxu0 0.0
    %2053 = vmatpush1.msra.mxu0 0.0
    %2054 = vmatprep.subr.mxu0 0.0
    %2055 = vmatpush1.msra.mxu0 0.0
    %2056 = vmatprep.subr.mxu0 0.0
    %2057 = vmatpush1.msra.mxu0 0.0
    %2058 = vmatprep.subr.mxu0 0.0
    %2059 = vmatpush1.msra.mxu0 0.0
    %2060 = vmatprep.subr.mxu0 0.0
    %2061 = vmatpush1.msra.mxu0 0.0
    %2062 = vmatprep.subr.mxu0 0.0
    %2063 = vmatpush1.msra.mxu0 0.0
    %2064 = vmatprep.subr.mxu0 0.0
    %2065 = vmatpush1.msra.mxu0 0.0
    %2066 = vmatprep.subr.mxu0 0.0
    %2067 = vmatpush1.msra.mxu0 0.0
    %2068 = vmatprep.subr.mxu0 0.0
    %2069 = vmatpush1.msra.mxu0 0.0
    %2070 = vmatprep.subr.mxu0 0.0
    %2071 = vmatpush1.msra.mxu0 0.0
    %2072 = vmatprep.subr.mxu0 0.0
    %2073 = vmatpush1.msra.mxu0 0.0
    %2074 = vmatprep.subr.mxu0 0.0
    %2075 = vmatpush1.msra.mxu0 0.0
    %2076 = vmatprep.subr.mxu0 0.0
    %2077 = vmatpush1.msra.mxu0 0.0
    %2078 = vmatprep.subr.mxu0 0.0
    %2079 = vmatpush1.msra.mxu0 0.0
    %2080 = vmatprep.subr.mxu0 0.0
    %2081 = vmatpush1.msra.mxu0 0.0
    %2082 = vmatprep.mubr.f32.mxu0 0.0
    %2083 = vmatmul.mubr.f32.gmra.mrb[0].mxu0 %v1891
    %v2084 = vpop.f32.mrb[0].mxu0
    %v2085 = vadd.f32 0.0, %v2084
    %v2086 = vpop.f32.mrb[0].mxu0
    %2087 = vmatprep.mubr.f32.mxu0 0.0
    %2088 = vmatmul.mubr.f32.gmra.mrb[0].mxu0 %v1892
    %v2089 = vpop.f32.mrb[0].mxu0
    %v2090 = vadd.f32 0.0, %v2089
    %v2091 = vpop.f32.mrb[0].mxu0
    %2092 = vdwg.mxu0
    %s2093 = scalar_lea.vmem %s0, 288
    %v2094 = vld [vmem:[%s2093] sm:$0xff]
    %v2095 = vld [vmem:[%s2093 + $0x8] sm:$0xff]
    %v2096 = vld [vmem:[%s2093 + $0x10] sm:$0xff]
    %v2097 = vld [vmem:[%s2093 + $0x18] sm:$0xff]
    %v2098 = vld [vmem:[%s2093 + $0x20] sm:$0xff]
    %v2099 = vld [vmem:[%s2093 + $0x28] sm:$0xff]
    %v2100 = vadd.f32 %v2094, %v2008
    %v2101 = vadd.f32 %v2095, %v2010
    %v2102 = vadd.f32 %v2097, %v2014
    %v2103 = vadd.f32 %v2098, %v2016
    %v2104 = vxor.u32 %v2100, 2147483648
    %v2105 = vxor.u32 %v2101, 2147483648
    %v2106 = vxor.u32 %v2102, 2147483648
    %v2107 = vxor.u32 %v2103, 2147483648
    %v2108 = vmul.f32 %v2104, 1.442695
    %v2109 = vpow.pop %v2108
    %v2110 = vmul.f32 %v2105, 1.442695
    %v2111 = vpow.pop %v2110
    %v2112 = vmul.f32 %v2106, 1.442695
    %v2113 = vpow.pop %v2112
    %v2114 = vmul.f32 %v2107, 1.442695
    %v2115 = vpow.pop %v2114
    %v2116 = vadd.f32 %v2109, 1.0
    %v2117 = vadd.f32 %v2111, 1.0
    %v2118 = vadd.f32 %v2113, 1.0
    %v2119 = vadd.f32 %v2115, 1.0
    %v2120 = vrcp.pop %v2116
    %v2121 = vmul.f32 1.0, %v2120
    %v2122 = vrcp.pop %v2117
    %v2123 = vmul.f32 1.0, %v2122
    %v2124 = vrcp.pop %v2118
    %v2125 = vmul.f32 1.0, %v2124
    %v2126 = vrcp.pop %v2119
    %v2127 = vmul.f32 1.0, %v2126
    %v2128 = vadd.f32 %v2085, %v42
    %v2129 = vadd.f32 %v2090, %v42
    %v2130 = vmul.f32 %v2121, %v2128
    %v2131 = vmul.f32 %v2125, %v2129
    %v2132 = vadd.f32 %v2096, %v2130
    %v2133 = vadd.f32 %v2099, %v2131
    %v2134 = vtanh.pop %v2132
    %v2135 = vtanh.pop %v2133
    %v2136 = vsub.f32 1.0, %v2123
    %v2137 = vsub.f32 1.0, %v2127
    %v2138 = vmul.f32 %v2136, %v2134
    %v2139 = vmul.f32 %v2137, %v2135
    %v2140 = vmul.f32 %v2123, %v1891
    %v2141 = vmul.f32 %v2127, %v1892
    %v2142 = vadd.f32 %v2138, %v2140
    %v2143 = vadd.f32 %v2139, %v2141
    %2144 = vst [vmem:[#allocation2] sm:$0xff] %v2142
    %2145 = vst [vmem:[#allocation2 + $0x8] sm:$0xff] %v2143
    %v2146 = vsel %vm60, %v2142, 0.0
    %v2147 = vsel %vm60, %v2143, 0.0
    %2148 = vadd.xlane.f32.xlu0 %v2146
    %v2149 = vpop.xlane.xlu0 %2148
    %2150 = vadd.xlane.f32.xlu0 %v2147
    %v2151 = vpop.xlane.xlu0 %2150
    %v2152 = vmul.f32 %v2149, 0.03125
    %v2153 = vmul.f32 %v2151, 0.03125
    %v2154 = vsub.f32 %v2146, %v2152
    %v2155 = vsub.f32 %v2147, %v2153
    %v2156 = vsel %vm60, %v2154, 0.0
    %v2157 = vsel %vm60, %v2155, 0.0
    %v2158 = vmul.f32 %v2156, %v2156
    %v2159 = vmul.f32 %v2157, %v2157
    %2160 = vadd.xlane.f32.xlu0 %v2158
    %v2161 = vpop.xlane.xlu0 %2160
    %2162 = vadd.xlane.f32.xlu0 %v2159
    %v2163 = vpop.xlane.xlu0 %2162
    %v2164 = vmul.f32 %v2161, 0.03125
    %v2165 = vmul.f32 %v2163, 0.03125
    %v2166 = vadd.f32 %v2164, 1e-05
    %v2167 = vadd.f32 %v2165, 1e-05
    %v2168 = vrsqrt.pop %v2166
    %v2169 = vrsqrt.pop %v2167
    %v2170 = vmul.f32 %v2156, %v2168
    %v2171 = vmul.f32 %v2157, %v2169
    %v2172 = vmul.f32 %v2170, %v49
    %v2173 = vmul.f32 %v2171, %v49
    %v2174 = vadd.f32 %v2172, %v56
    %v2175 = vadd.f32 %v2173, %v56
    %s2176 = scalar_lea.vmem [#allocation3], 96
    %2177 = vst [vmem:[%s2176] sm:$0xff] %v2174
    %2178 = vst [vmem:[%s2176 + $0x8] sm:$0xff] %v2175
    %v2179 = vld [vmem:[#allocation2] sm:$0xff]
    %v2180 = vld [vmem:[#allocation2 + $0x8] sm:$0xff]
    %s2181 = scalar_lea.vmem %s1, 112
    %v2182 = vld [vmem:[%s2181] sm:$0xff]
    %v2183 = vld [vmem:[%s2181 + $0x8] sm:$0xff]
    %2185 = vset.pattern.permute.xlu0 0
    %2186 = vperm.xlu0 %2185, %v2182
    %v2187 = vpop.permute.xlu0 %2186
    %2190 = vset.pattern.permute.xlu0 0
    %2191 = vperm.xlu0 %2190, %v2183
    %v2192 = vpop.permute.xlu0 %2191
    %v2194 = vmul.f32 %v2179, %v2187
    %v2195 = vmul.f32 %v2180, %v2192
    %v2196 = vld [vmem:[%s3] sm:$0xff]
    %v2197 = vld [vmem:[%s3 + $0x8] sm:$0xff]
    %v2198 = vld [vmem:[%s3 + $0x10] sm:$0xff]
    %v2199 = vld [vmem:[%s3 + $0x18] sm:$0xff]
    %v2200 = vld [vmem:[%s3 + $0x20] sm:$0xff]
    %v2201 = vld [vmem:[%s3 + $0x28] sm:$0xff]
    %v2202 = vld [vmem:[%s3 + $0x30] sm:$0xff]
    %v2203 = vld [vmem:[%s3 + $0x38] sm:$0xff]
    %v2204 = vld [vmem:[%s3 + $0x40] sm:$0xff]
    %v2205 = vld [vmem:[%s3 + $0x48] sm:$0xff]
    %v2206 = vld [vmem:[%s3 + $0x50] sm:$0xff]
    %v2207 = vld [vmem:[%s3 + $0x58] sm:$0xff]
    %v2208 = vld [vmem:[%s3 + $0x60] sm:$0xff]
    %v2209 = vld [vmem:[%s3 + $0x68] sm:$0xff]
    %v2210 = vld [vmem:[%s3 + $0x70] sm:$0xff]
    %v2211 = vld [vmem:[%s3 + $0x78] sm:$0xff]
    %v2212 = vld [vmem:[%s3 + $0x80] sm:$0xff]
    %v2213 = vld [vmem:[%s3 + $0x88] sm:$0xff]
    %v2214 = vld [vmem:[%s3 + $0x90] sm:$0xff]
    %v2215 = vld [vmem:[%s3 + $0x98] sm:$0xff]
    %v2216 = vld [vmem:[%s3 + $0xa0] sm:$0xff]
    %v2217 = vld [vmem:[%s3 + $0xa8] sm:$0xff]
    %v2218 = vld [vmem:[%s3 + $0xb0] sm:$0xff]
    %v2219 = vld [vmem:[%s3 + $0xb8] sm:$0xff]
    %v2220 = vld [vmem:[%s3 + $0xc0] sm:$0xff]
    %v2221 = vld [vmem:[%s3 + $0xc8] sm:$0xff]
    %v2222 = vld [vmem:[%s3 + $0xd0] sm:$0xff]
    %v2223 = vld [vmem:[%s3 + $0xd8] sm:$0xff]
    %v2224 = vld [vmem:[%s3 + $0xe0] sm:$0xff]
    %v2225 = vld [vmem:[%s3 + $0xe8] sm:$0xff]
    %v2226 = vld [vmem:[%s3 + $0xf0] sm:$0xff]
    %v2227 = vld [vmem:[%s3 + $0xf8] sm:$0xff]
    %v2228 = vld [vmem:[%s3 + $0x100] sm:$0xff]
    %v2229 = vld [vmem:[%s3 + $0x108] sm:$0xff]
    %v2230 = vld [vmem:[%s3 + $0x110] sm:$0xff]
    %v2231 = vld [vmem:[%s3 + $0x118] sm:$0xff]
    %v2232 = vld [vmem:[%s3 + $0x120] sm:$0xff]
    %v2233 = vld [vmem:[%s3 + $0x128] sm:$0xff]
    %v2234 = vld [vmem:[%s3 + $0x130] sm:$0xff]
    %v2235 = vld [vmem:[%s3 + $0x138] sm:$0xff]
    %v2236 = vld [vmem:[%s3 + $0x140] sm:$0xff]
    %v2237 = vld [vmem:[%s3 + $0x148] sm:$0xff]
    %v2238 = vld [vmem:[%s3 + $0x150] sm:$0xff]
    %v2239 = vld [vmem:[%s3 + $0x158] sm:$0xff]
    %v2240 = vld [vmem:[%s3 + $0x160] sm:$0xff]
    %v2241 = vld [vmem:[%s3 + $0x168] sm:$0xff]
    %v2242 = vld [vmem:[%s3 + $0x170] sm:$0xff]
    %v2243 = vld [vmem:[%s3 + $0x178] sm:$0xff]
    %2244 = vmatprep.subr.mxu0 %v2197
    %2245 = vmatpush1.msra.mxu0 %v2196
    %2246 = vmatprep.subr.mxu0 %v2200
    %2247 = vmatpush1.msra.mxu0 %v2199
    %2248 = vmatprep.subr.mxu0 %v2203
    %2249 = vmatpush1.msra.mxu0 %v2202
    %2250 = vmatprep.subr.mxu0 %v2206
    %2251 = vmatpush1.msra.mxu0 %v2205
    %2252 = vmatprep.subr.mxu0 %v2209
    %2253 = vmatpush1.msra.mxu0 %v2208
    %2254 = vmatprep.subr.mxu0 %v2212
    %2255 = vmatpush1.msra.mxu0 %v2211
    %2256 = vmatprep.subr.mxu0 %v2215
    %2257 = vmatpush1.msra.mxu0 %v2214
    %2258 = vmatprep.subr.mxu0 %v2218
    %2259 = vmatpush1.msra.mxu0 %v2217
    %2260 = vmatprep.subr.mxu0 %v2221
    %2261 = vmatpush1.msra.mxu0 %v2220
    %2262 = vmatprep.subr.mxu0 %v2224
    %2263 = vmatpush1.msra.mxu0 %v2223
    %2264 = vmatprep.subr.mxu0 %v2227
    %2265 = vmatpush1.msra.mxu0 %v2226
    %2266 = vmatprep.subr.mxu0 %v2230
    %2267 = vmatpush1.msra.mxu0 %v2229
    %2268 = vmatprep.subr.mxu0 %v2233
    %2269 = vmatpush1.msra.mxu0 %v2232
    %2270 = vmatprep.subr.mxu0 %v2236
    %2271 = vmatpush1.msra.mxu0 %v2235
    %2272 = vmatprep.subr.mxu0 %v2239
    %2273 = vmatpush1.msra.mxu0 %v2238
    %2274 = vmatprep.subr.mxu0 %v2242
    %2275 = vmatpush1.msra.mxu0 %v2241
    %2276 = vmatprep.subr.mxu0 0.0
    %2277 = vmatpush1.msra.mxu0 0.0
    %2278 = vmatprep.subr.mxu0 0.0
    %2279 = vmatpush1.msra.mxu0 0.0
    %2280 = vmatprep.subr.mxu0 0.0
    %2281 = vmatpush1.msra.mxu0 0.0
    %2282 = vmatprep.subr.mxu0 0.0
    %2283 = vmatpush1.msra.mxu0 0.0
    %2284 = vmatprep.subr.mxu0 0.0
    %2285 = vmatpush1.msra.mxu0 0.0
    %2286 = vmatprep.subr.mxu0 0.0
    %2287 = vmatpush1.msra.mxu0 0.0
    %2288 = vmatprep.subr.mxu0 0.0
    %2289 = vmatpush1.msra.mxu0 0.0
    %2290 = vmatprep.subr.mxu0 0.0
    %2291 = vmatpush1.msra.mxu0 0.0
    %2292 = vmatprep.subr.mxu0 0.0
    %2293 = vmatpush1.msra.mxu0 0.0
    %2294 = vmatprep.subr.mxu0 0.0
    %2295 = vmatpush1.msra.mxu0 0.0
    %2296 = vmatprep.subr.mxu0 0.0
    %2297 = vmatpush1.msra.mxu0 0.0
    %2298 = vmatprep.subr.mxu0 0.0
    %2299 = vmatpush1.msra.mxu0 0.0
    %2300 = vmatprep.subr.mxu0 0.0
    %2301 = vmatpush1.msra.mxu0 0.0
    %2302 = vmatprep.subr.mxu0 0.0
    %2303 = vmatpush1.msra.mxu0 0.0
    %2304 = vmatprep.subr.mxu0 0.0
    %2305 = vmatpush1.msra.mxu0 0.0
    %2306 = vmatprep.subr.mxu0 0.0
    %2307 = vmatpush1.msra.mxu0 0.0
    %2308 = vmatprep.mubr.f32.mxu0 0.0
    %2309 = vmatmul.mubr.f32.gmra.mrb[0].mxu0 %v2194
    %v2310 = vpop.f32.mrb[0].mxu0
    %v2311 = vadd.f32 0.0, %v2310
    %v2312 = vpop.f32.mrb[0].mxu0
    %v2313 = vadd.f32 0.0, %v2312
    %2314 = vmatprep.mubr.f32.mxu0 0.0
    %2315 = vmatmul.mubr.f32.gmra.mrb[0].mxu0 %v2195
    %v2316 = vpop.f32.mrb[0].mxu0
    %v2317 = vadd.f32 0.0, %v2316
    %v2318 = vpop.f32.mrb[0].mxu0
    %v2319 = vadd.f32 0.0, %v2318
    %2320 = vdwg.mxu0
    %2321 = vmatprep.subr.mxu0 0.0
    %2322 = vmatpush1.msra.mxu0 %v2198
    %2323 = vmatprep.subr.mxu0 0.0
    %2324 = vmatpush1.msra.mxu0 %v2201
    %2325 = vmatprep.subr.mxu0 0.0
    %2326 = vmatpush1.msra.mxu0 %v2204
    %2327 = vmatprep.subr.mxu0 0.0
    %2328 = vmatpush1.msra.mxu0 %v2207
    %2329 = vmatprep.subr.mxu0 0.0
    %2330 = vmatpush1.msra.mxu0 %v2210
    %2331 = vmatprep.subr.mxu0 0.0
    %2332 = vmatpush1.msra.mxu0 %v2213
    %2333 = vmatprep.subr.mxu0 0.0
    %2334 = vmatpush1.msra.mxu0 %v2216
    %2335 = vmatprep.subr.mxu0 0.0
    %2336 = vmatpush1.msra.mxu0 %v2219
    %2337 = vmatprep.subr.mxu0 0.0
    %2338 = vmatpush1.msra.mxu0 %v2222
    %2339 = vmatprep.subr.mxu0 0.0
    %2340 = vmatpush1.msra.mxu0 %v2225
    %2341 = vmatprep.subr.mxu0 0.0
    %2342 = vmatpush1.msra.mxu0 %v2228
    %2343 = vmatprep.subr.mxu0 0.0
    %2344 = vmatpush1.msra.mxu0 %v2231
    %2345 = vmatprep.subr.mxu0 0.0
    %2346 = vmatpush1.msra.mxu0 %v2234
    %2347 = vmatprep.subr.mxu0 0.0
    %2348 = vmatpush1.msra.mxu0 %v2237
    %2349 = vmatprep.subr.mxu0 0.0
    %2350 = vmatpush1.msra.mxu0 %v2240
    %2351 = vmatprep.subr.mxu0 0.0
    %2352 = vmatpush1.msra.mxu0 %v2243
    %2353 = vmatprep.subr.mxu0 0.0
    %2354 = vmatpush1.msra.mxu0 0.0
    %2355 = vmatprep.subr.mxu0 0.0
    %2356 = vmatpush1.msra.mxu0 0.0
    %2357 = vmatprep.subr.mxu0 0.0
    %2358 = vmatpush1.msra.mxu0 0.0
    %2359 = vmatprep.subr.mxu0 0.0
    %2360 = vmatpush1.msra.mxu0 0.0
    %2361 = vmatprep.subr.mxu0 0.0
    %2362 = vmatpush1.msra.mxu0 0.0
    %2363 = vmatprep.subr.mxu0 0.0
    %2364 = vmatpush1.msra.mxu0 0.0
    %2365 = vmatprep.subr.mxu0 0.0
    %2366 = vmatpush1.msra.mxu0 0.0
    %2367 = vmatprep.subr.mxu0 0.0
    %2368 = vmatpush1.msra.mxu0 0.0
    %2369 = vmatprep.subr.mxu0 0.0
    %2370 = vmatpush1.msra.mxu0 0.0
    %2371 = vmatprep.subr.mxu0 0.0
    %2372 = vmatpush1.msra.mxu0 0.0
    %2373 = vmatprep.subr.mxu0 0.0
    %2374 = vmatpush1.msra.mxu0 0.0
    %2375 = vmatprep.subr.mxu0 0.0
    %2376 = vmatpush1.msra.mxu0 0.0
    %2377 = vmatprep.subr.mxu0 0.0
    %2378 = vmatpush1.msra.mxu0 0.0
    %2379 = vmatprep.subr.mxu0 0.0
    %2380 = vmatpush1.msra.mxu0 0.0
    %2381 = vmatprep.subr.mxu0 0.0
    %2382 = vmatpush1.msra.mxu0 0.0
    %2383 = vmatprep.subr.mxu0 0.0
    %2384 = vmatpush1.msra.mxu0 0.0
    %2385 = vmatprep.mubr.f32.mxu0 0.0
    %2386 = vmatmul.mubr.f32.gmra.mrb[0].mxu0 %v2194
    %v2387 = vpop.f32.mrb[0].mxu0
    %v2388 = vadd.f32 0.0, %v2387
    %v2389 = vpop.f32.mrb[0].mxu0
    %2390 = vmatprep.mubr.f32.mxu0 0.0
    %2391 = vmatmul.mubr.f32.gmra.mrb[0].mxu0 %v2195
    %v2392 = vpop.f32.mrb[0].mxu0
    %v2393 = vadd.f32 0.0, %v2392
    %v2394 = vpop.f32.mrb[0].mxu0
    %2395 = vdwg.mxu0
    %s2396 = scalar_lea.vmem %s0, 336
    %v2397 = vld [vmem:[%s2396] sm:$0xff]
    %v2398 = vld [vmem:[%s2396 + $0x8] sm:$0xff]
    %v2399 = vld [vmem:[%s2396 + $0x10] sm:$0xff]
    %v2400 = vld [vmem:[%s2396 + $0x18] sm:$0xff]
    %v2401 = vld [vmem:[%s2396 + $0x20] sm:$0xff]
    %v2402 = vld [vmem:[%s2396 + $0x28] sm:$0xff]
    %v2403 = vadd.f32 %v2397, %v2311
    %v2404 = vadd.f32 %v2398, %v2313
    %v2405 = vadd.f32 %v2400, %v2317
    %v2406 = vadd.f32 %v2401, %v2319
    %v2407 = vxor.u32 %v2403, 2147483648
    %v2408 = vxor.u32 %v2404, 2147483648
    %v2409 = vxor.u32 %v2405, 2147483648
    %v2410 = vxor.u32 %v2406, 2147483648
    %v2411 = vmul.f32 %v2407, 1.442695
    %v2412 = vpow.pop %v2411
    %v2413 = vmul.f32 %v2408, 1.442695
    %v2414 = vpow.pop %v2413
    %v2415 = vmul.f32 %v2409, 1.442695
    %v2416 = vpow.pop %v2415
    %v2417 = vmul.f32 %v2410, 1.442695
    %v2418 = vpow.pop %v2417
    %v2419 = vadd.f32 %v2412, 1.0
    %v2420 = vadd.f32 %v2414, 1.0
    %v2421 = vadd.f32 %v2416, 1.0
    %v2422 = vadd.f32 %v2418, 1.0
    %v2423 = vrcp.pop %v2419
    %v2424 = vmul.f32 1.0, %v2423
    %v2425 = vrcp.pop %v2420
    %v2426 = vmul.f32 1.0, %v2425
    %v2427 = vrcp.pop %v2421
    %v2428 = vmul.f32 1.0, %v2427
    %v2429 = vrcp.pop %v2422
    %v2430 = vmul.f32 1.0, %v2429
    %v2431 = vadd.f32 %v2388, %v42
    %v2432 = vadd.f32 %v2393, %v42
    %v2433 = vmul.f32 %v2424, %v2431
    %v2434 = vmul.f32 %v2428, %v2432
    %v2435 = vadd.f32 %v2399, %v2433
    %v2436 = vadd.f32 %v2402, %v2434
    %v2437 = vtanh.pop %v2435
    %v2438 = vtanh.pop %v2436
    %v2439 = vsub.f32 1.0, %v2426
    %v2440 = vsub.f32 1.0, %v2430
    %v2441 = vmul.f32 %v2439, %v2437
    %v2442 = vmul.f32 %v2440, %v2438
    %v2443 = vmul.f32 %v2426, %v2194
    %v2444 = vmul.f32 %v2430, %v2195
    %v2445 = vadd.f32 %v2441, %v2443
    %v2446 = vadd.f32 %v2442, %v2444
    %2447 = vst [vmem:[#allocation2] sm:$0xff] %v2445
    %2448 = vst [vmem:[#allocation2 + $0x8] sm:$0xff] %v2446
    %v2449 = vsel %vm60, %v2445, 0.0
    %v2450 = vsel %vm60, %v2446, 0.0
    %2451 = vadd.xlane.f32.xlu0 %v2449
    %v2452 = vpop.xlane.xlu0 %2451
    %2453 = vadd.xlane.f32.xlu0 %v2450
    %v2454 = vpop.xlane.xlu0 %2453
    %v2455 = vmul.f32 %v2452, 0.03125
    %v2456 = vmul.f32 %v2454, 0.03125
    %v2457 = vsub.f32 %v2449, %v2455
    %v2458 = vsub.f32 %v2450, %v2456
    %v2459 = vsel %vm60, %v2457, 0.0
    %v2460 = vsel %vm60, %v2458, 0.0
    %v2461 = vmul.f32 %v2459, %v2459
    %v2462 = vmul.f32 %v2460, %v2460
    %2463 = vadd.xlane.f32.xlu0 %v2461
    %v2464 = vpop.xlane.xlu0 %2463
    %2465 = vadd.xlane.f32.xlu0 %v2462
    %v2466 = vpop.xlane.xlu0 %2465
    %v2467 = vmul.f32 %v2464, 0.03125
    %v2468 = vmul.f32 %v2466, 0.03125
    %v2469 = vadd.f32 %v2467, 1e-05
    %v2470 = vadd.f32 %v2468, 1e-05
    %v2471 = vrsqrt.pop %v2469
    %v2472 = vrsqrt.pop %v2470
    %v2473 = vmul.f32 %v2459, %v2471
    %v2474 = vmul.f32 %v2460, %v2472
    %v2475 = vmul.f32 %v2473, %v49
    %v2476 = vmul.f32 %v2474, %v49
    %v2477 = vadd.f32 %v2475, %v56
    %v2478 = vadd.f32 %v2476, %v56
    %s2479 = scalar_lea.vmem [#allocation3], 112
    %2480 = vst [vmem:[%s2479] sm:$0xff] %v2477
    %2481 = vst [vmem:[%s2479 + $0x8] sm:$0xff] %v2478
    %v2482 = vld [vmem:[#allocation2] sm:$0xff]
    %v2483 = vld [vmem:[#allocation2 + $0x8] sm:$0xff]
    %s2484 = scalar_lea.vmem %s1, 128
    %v2485 = vld [vmem:[%s2484] sm:$0xff]
    %v2486 = vld [vmem:[%s2484 + $0x8] sm:$0xff]
    %2488 = vset.pattern.permute.xlu0 0
    %2489 = vperm.xlu0 %2488, %v2485
    %v2490 = vpop.permute.xlu0 %2489
    %2493 = vset.pattern.permute.xlu0 0
    %2494 = vperm.xlu0 %2493, %v2486
    %v2495 = vpop.permute.xlu0 %2494
    %v2497 = vmul.f32 %v2482, %v2490
    %v2498 = vmul.f32 %v2483, %v2495
    %v2499 = vld [vmem:[%s3] sm:$0xff]
    %v2500 = vld [vmem:[%s3 + $0x8] sm:$0xff]
    %v2501 = vld [vmem:[%s3 + $0x10] sm:$0xff]
    %v2502 = vld [vmem:[%s3 + $0x18] sm:$0xff]
    %v2503 = vld [vmem:[%s3 + $0x20] sm:$0xff]
    %v2504 = vld [vmem:[%s3 + $0x28] sm:$0xff]
    %v2505 = vld [vmem:[%s3 + $0x30] sm:$0xff]
    %v2506 = vld [vmem:[%s3 + $0x38] sm:$0xff]
    %v2507 = vld [vmem:[%s3 + $0x40] sm:$0xff]
    %v2508 = vld [vmem:[%s3 + $0x48] sm:$0xff]
    %v2509 = vld [vmem:[%s3 + $0x50] sm:$0xff]
    %v2510 = vld [vmem:[%s3 + $0x58] sm:$0xff]
    %v2511 = vld [vmem:[%s3 + $0x60] sm:$0xff]
    %v2512 = vld [vmem:[%s3 + $0x68] sm:$0xff]
    %v2513 = vld [vmem:[%s3 + $0x70] sm:$0xff]
    %v2514 = vld [vmem:[%s3 + $0x78] sm:$0xff]
    %v2515 = vld [vmem:[%s3 + $0x80] sm:$0xff]
    %v2516 = vld [vmem:[%s3 + $0x88] sm:$0xff]
    %v2517 = vld [vmem:[%s3 + $0x90] sm:$0xff]
    %v2518 = vld [vmem:[%s3 + $0x98] sm:$0xff]
    %v2519 = vld [vmem:[%s3 + $0xa0] sm:$0xff]
    %v2520 = vld [vmem:[%s3 + $0xa8] sm:$0xff]
    %v2521 = vld [vmem:[%s3 + $0xb0] sm:$0xff]
    %v2522 = vld [vmem:[%s3 + $0xb8] sm:$0xff]
    %v2523 = vld [vmem:[%s3 + $0xc0] sm:$0xff]
    %v2524 = vld [vmem:[%s3 + $0xc8] sm:$0xff]
    %v2525 = vld [vmem:[%s3 + $0xd0] sm:$0xff]
    %v2526 = vld [vmem:[%s3 + $0xd8] sm:$0xff]
    %v2527 = vld [vmem:[%s3 + $0xe0] sm:$0xff]
    %v2528 = vld [vmem:[%s3 + $0xe8] sm:$0xff]
    %v2529 = vld [vmem:[%s3 + $0xf0] sm:$0xff]
    %v2530 = vld [vmem:[%s3 + $0xf8] sm:$0xff]
    %v2531 = vld [vmem:[%s3 + $0x100] sm:$0xff]
    %v2532 = vld [vmem:[%s3 + $0x108] sm:$0xff]
    %v2533 = vld [vmem:[%s3 + $0x110] sm:$0xff]
    %v2534 = vld [vmem:[%s3 + $0x118] sm:$0xff]
    %v2535 = vld [vmem:[%s3 + $0x120] sm:$0xff]
    %v2536 = vld [vmem:[%s3 + $0x128] sm:$0xff]
    %v2537 = vld [vmem:[%s3 + $0x130] sm:$0xff]
    %v2538 = vld [vmem:[%s3 + $0x138] sm:$0xff]
    %v2539 = vld [vmem:[%s3 + $0x140] sm:$0xff]
    %v2540 = vld [vmem:[%s3 + $0x148] sm:$0xff]
    %v2541 = vld [vmem:[%s3 + $0x150] sm:$0xff]
    %v2542 = vld [vmem:[%s3 + $0x158] sm:$0xff]
    %v2543 = vld [vmem:[%s3 + $0x160] sm:$0xff]
    %v2544 = vld [vmem:[%s3 + $0x168] sm:$0xff]
    %v2545 = vld [vmem:[%s3 + $0x170] sm:$0xff]
    %v2546 = vld [vmem:[%s3 + $0x178] sm:$0xff]
    %2547 = vmatprep.subr.mxu0 %v2500
    %2548 = vmatpush1.msra.mxu0 %v2499
    %2549 = vmatprep.subr.mxu0 %v2503
    %2550 = vmatpush1.msra.mxu0 %v2502
    %2551 = vmatprep.subr.mxu0 %v2506
    %2552 = vmatpush1.msra.mxu0 %v2505
    %2553 = vmatprep.subr.mxu0 %v2509
    %2554 = vmatpush1.msra.mxu0 %v2508
    %2555 = vmatprep.subr.mxu0 %v2512
    %2556 = vmatpush1.msra.mxu0 %v2511
    %2557 = vmatprep.subr.mxu0 %v2515
    %2558 = vmatpush1.msra.mxu0 %v2514
    %2559 = vmatprep.subr.mxu0 %v2518
    %2560 = vmatpush1.msra.mxu0 %v2517
    %2561 = vmatprep.subr.mxu0 %v2521
    %2562 = vmatpush1.msra.mxu0 %v2520
    %2563 = vmatprep.subr.mxu0 %v2524
    %2564 = vmatpush1.msra.mxu0 %v2523
    %2565 = vmatprep.subr.mxu0 %v2527
    %2566 = vmatpush1.msra.mxu0 %v2526
    %2567 = vmatprep.subr.mxu0 %v2530
    %2568 = vmatpush1.msra.mxu0 %v2529
    %2569 = vmatprep.subr.mxu0 %v2533
    %2570 = vmatpush1.msra.mxu0 %v2532
    %2571 = vmatprep.subr.mxu0 %v2536
    %2572 = vmatpush1.msra.mxu0 %v2535
    %2573 = vmatprep.subr.mxu0 %v2539
    %2574 = vmatpush1.msra.mxu0 %v2538
    %2575 = vmatprep.subr.mxu0 %v2542
    %2576 = vmatpush1.msra.mxu0 %v2541
    %2577 = vmatprep.subr.mxu0 %v2545
    %2578 = vmatpush1.msra.mxu0 %v2544
    %2579 = vmatprep.subr.mxu0 0.0
    %2580 = vmatpush1.msra.mxu0 0.0
    %2581 = vmatprep.subr.mxu0 0.0
    %2582 = vmatpush1.msra.mxu0 0.0
    %2583 = vmatprep.subr.mxu0 0.0
    %2584 = vmatpush1.msra.mxu0 0.0
    %2585 = vmatprep.subr.mxu0 0.0
    %2586 = vmatpush1.msra.mxu0 0.0
    %2587 = vmatprep.subr.mxu0 0.0
    %2588 = vmatpush1.msra.mxu0 0.0
    %2589 = vmatprep.subr.mxu0 0.0
    %2590 = vmatpush1.msra.mxu0 0.0
    %2591 = vmatprep.subr.mxu0 0.0
    %2592 = vmatpush1.msra.mxu0 0.0
    %2593 = vmatprep.subr.mxu0 0.0
    %2594 = vmatpush1.msra.mxu0 0.0
    %2595 = vmatprep.subr.mxu0 0.0
    %2596 = vmatpush1.msra.mxu0 0.0
    %2597 = vmatprep.subr.mxu0 0.0
    %2598 = vmatpush1.msra.mxu0 0.0
    %2599 = vmatprep.subr.mxu0 0.0
    %2600 = vmatpush1.msra.mxu0 0.0
    %2601 = vmatprep.subr.mxu0 0.0
    %2602 = vmatpush1.msra.mxu0 0.0
    %2603 = vmatprep.subr.mxu0 0.0
    %2604 = vmatpush1.msra.mxu0 0.0
    %2605 = vmatprep.subr.mxu0 0.0
    %2606 = vmatpush1.msra.mxu0 0.0
    %2607 = vmatprep.subr.mxu0 0.0
    %2608 = vmatpush1.msra.mxu0 0.0
    %2609 = vmatprep.subr.mxu0 0.0
    %2610 = vmatpush1.msra.mxu0 0.0
    %2611 = vmatprep.mubr.f32.mxu0 0.0
    %2612 = vmatmul.mubr.f32.gmra.mrb[0].mxu0 %v2497
    %v2613 = vpop.f32.mrb[0].mxu0
    %v2614 = vadd.f32 0.0, %v2613
    %v2615 = vpop.f32.mrb[0].mxu0
    %v2616 = vadd.f32 0.0, %v2615
    %2617 = vmatprep.mubr.f32.mxu0 0.0
    %2618 = vmatmul.mubr.f32.gmra.mrb[0].mxu0 %v2498
    %v2619 = vpop.f32.mrb[0].mxu0
    %v2620 = vadd.f32 0.0, %v2619
    %v2621 = vpop.f32.mrb[0].mxu0
    %v2622 = vadd.f32 0.0, %v2621
    %2623 = vdwg.mxu0
    %2624 = vmatprep.subr.mxu0 0.0
    %2625 = vmatpush1.msra.mxu0 %v2501
    %2626 = vmatprep.subr.mxu0 0.0
    %2627 = vmatpush1.msra.mxu0 %v2504
    %2628 = vmatprep.subr.mxu0 0.0
    %2629 = vmatpush1.msra.mxu0 %v2507
    %2630 = vmatprep.subr.mxu0 0.0
    %2631 = vmatpush1.msra.mxu0 %v2510
    %2632 = vmatprep.subr.mxu0 0.0
    %2633 = vmatpush1.msra.mxu0 %v2513
    %2634 = vmatprep.subr.mxu0 0.0
    %2635 = vmatpush1.msra.mxu0 %v2516
    %2636 = vmatprep.subr.mxu0 0.0
    %2637 = vmatpush1.msra.mxu0 %v2519
    %2638 = vmatprep.subr.mxu0 0.0
    %2639 = vmatpush1.msra.mxu0 %v2522
    %2640 = vmatprep.subr.mxu0 0.0
    %2641 = vmatpush1.msra.mxu0 %v2525
    %2642 = vmatprep.subr.mxu0 0.0
    %2643 = vmatpush1.msra.mxu0 %v2528
    %2644 = vmatprep.subr.mxu0 0.0
    %2645 = vmatpush1.msra.mxu0 %v2531
    %2646 = vmatprep.subr.mxu0 0.0
    %2647 = vmatpush1.msra.mxu0 %v2534
    %2648 = vmatprep.subr.mxu0 0.0
    %2649 = vmatpush1.msra.mxu0 %v2537
    %2650 = vmatprep.subr.mxu0 0.0
    %2651 = vmatpush1.msra.mxu0 %v2540
    %2652 = vmatprep.subr.mxu0 0.0
    %2653 = vmatpush1.msra.mxu0 %v2543
    %2654 = vmatprep.subr.mxu0 0.0
    %2655 = vmatpush1.msra.mxu0 %v2546
    %2656 = vmatprep.subr.mxu0 0.0
    %2657 = vmatpush1.msra.mxu0 0.0
    %2658 = vmatprep.subr.mxu0 0.0
    %2659 = vmatpush1.msra.mxu0 0.0
    %2660 = vmatprep.subr.mxu0 0.0
    %2661 = vmatpush1.msra.mxu0 0.0
    %2662 = vmatprep.subr.mxu0 0.0
    %2663 = vmatpush1.msra.mxu0 0.0
    %2664 = vmatprep.subr.mxu0 0.0
    %2665 = vmatpush1.msra.mxu0 0.0
    %2666 = vmatprep.subr.mxu0 0.0
    %2667 = vmatpush1.msra.mxu0 0.0
    %2668 = vmatprep.subr.mxu0 0.0
    %2669 = vmatpush1.msra.mxu0 0.0
    %2670 = vmatprep.subr.mxu0 0.0
    %2671 = vmatpush1.msra.mxu0 0.0
    %2672 = vmatprep.subr.mxu0 0.0
    %2673 = vmatpush1.msra.mxu0 0.0
    %2674 = vmatprep.subr.mxu0 0.0
    %2675 = vmatpush1.msra.mxu0 0.0
    %2676 = vmatprep.subr.mxu0 0.0
    %2677 = vmatpush1.msra.mxu0 0.0
    %2678 = vmatprep.subr.mxu0 0.0
    %2679 = vmatpush1.msra.mxu0 0.0
    %2680 = vmatprep.subr.mxu0 0.0
    %2681 = vmatpush1.msra.mxu0 0.0
    %2682 = vmatprep.subr.mxu0 0.0
    %2683 = vmatpush1.msra.mxu0 0.0
    %2684 = vmatprep.subr.mxu0 0.0
    %2685 = vmatpush1.msra.mxu0 0.0
    %2686 = vmatprep.subr.mxu0 0.0
    %2687 = vmatpush1.msra.mxu0 0.0
    %2688 = vmatprep.mubr.f32.mxu0 0.0
    %2689 = vmatmul.mubr.f32.gmra.mrb[0].mxu0 %v2497
    %v2690 = vpop.f32.mrb[0].mxu0
    %v2691 = vadd.f32 0.0, %v2690
    %v2692 = vpop.f32.mrb[0].mxu0
    %2693 = vmatprep.mubr.f32.mxu0 0.0
    %2694 = vmatmul.mubr.f32.gmra.mrb[0].mxu0 %v2498
    %v2695 = vpop.f32.mrb[0].mxu0
    %v2696 = vadd.f32 0.0, %v2695
    %v2697 = vpop.f32.mrb[0].mxu0
    %2698 = vdwg.mxu0
    %s2699 = scalar_lea.vmem %s0, 384
    %v2700 = vld [vmem:[%s2699] sm:$0xff]
    %v2701 = vld [vmem:[%s2699 + $0x8] sm:$0xff]
    %v2702 = vld [vmem:[%s2699 + $0x10] sm:$0xff]
    %v2703 = vld [vmem:[%s2699 + $0x18] sm:$0xff]
    %v2704 = vld [vmem:[%s2699 + $0x20] sm:$0xff]
    %v2705 = vld [vmem:[%s2699 + $0x28] sm:$0xff]
    %v2706 = vadd.f32 %v2700, %v2614
    %v2707 = vadd.f32 %v2701, %v2616
    %v2708 = vadd.f32 %v2703, %v2620
    %v2709 = vadd.f32 %v2704, %v2622
    %v2710 = vxor.u32 %v2706, 2147483648
    %v2711 = vxor.u32 %v2707, 2147483648
    %v2712 = vxor.u32 %v2708, 2147483648
    %v2713 = vxor.u32 %v2709, 2147483648
    %v2714 = vmul.f32 %v2710, 1.442695
    %v2715 = vpow.pop %v2714
    %v2716 = vmul.f32 %v2711, 1.442695
    %v2717 = vpow.pop %v2716
    %v2718 = vmul.f32 %v2712, 1.442695
    %v2719 = vpow.pop %v2718
    %v2720 = vmul.f32 %v2713, 1.442695
    %v2721 = vpow.pop %v2720
    %v2722 = vadd.f32 %v2715, 1.0
    %v2723 = vadd.f32 %v2717, 1.0
    %v2724 = vadd.f32 %v2719, 1.0
    %v2725 = vadd.f32 %v2721, 1.0
    %v2726 = vrcp.pop %v2722
    %v2727 = vmul.f32 1.0, %v2726
    %v2728 = vrcp.pop %v2723
    %v2729 = vmul.f32 1.0, %v2728
    %v2730 = vrcp.pop %v2724
    %v2731 = vmul.f32 1.0, %v2730
    %v2732 = vrcp.pop %v2725
    %v2733 = vmul.f32 1.0, %v2732
    %v2734 = vadd.f32 %v2691, %v42
    %v2735 = vadd.f32 %v2696, %v42
    %v2736 = vmul.f32 %v2727, %v2734
    %v2737 = vmul.f32 %v2731, %v2735
    %v2738 = vadd.f32 %v2702, %v2736
    %v2739 = vadd.f32 %v2705, %v2737
    %v2740 = vtanh.pop %v2738
    %v2741 = vtanh.pop %v2739
    %v2742 = vsub.f32 1.0, %v2729
    %v2743 = vsub.f32 1.0, %v2733
    %v2744 = vmul.f32 %v2742, %v2740
    %v2745 = vmul.f32 %v2743, %v2741
    %v2746 = vmul.f32 %v2729, %v2497
    %v2747 = vmul.f32 %v2733, %v2498
    %v2748 = vadd.f32 %v2744, %v2746
    %v2749 = vadd.f32 %v2745, %v2747
    %2750 = vst [vmem:[#allocation2] sm:$0xff] %v2748
    %2751 = vst [vmem:[#allocation2 + $0x8] sm:$0xff] %v2749
    %v2752 = vsel %vm60, %v2748, 0.0
    %v2753 = vsel %vm60, %v2749, 0.0
    %2754 = vadd.xlane.f32.xlu0 %v2752
    %v2755 = vpop.xlane.xlu0 %2754
    %2756 = vadd.xlane.f32.xlu0 %v2753
    %v2757 = vpop.xlane.xlu0 %2756
    %v2758 = vmul.f32 %v2755, 0.03125
    %v2759 = vmul.f32 %v2757, 0.03125
    %v2760 = vsub.f32 %v2752, %v2758
    %v2761 = vsub.f32 %v2753, %v2759
    %v2762 = vsel %vm60, %v2760, 0.0
    %v2763 = vsel %vm60, %v2761, 0.0
    %v2764 = vmul.f32 %v2762, %v2762
    %v2765 = vmul.f32 %v2763, %v2763
    %2766 = vadd.xlane.f32.xlu0 %v2764
    %v2767 = vpop.xlane.xlu0 %2766
    %2768 = vadd.xlane.f32.xlu0 %v2765
    %v2769 = vpop.xlane.xlu0 %2768
    %v2770 = vmul.f32 %v2767, 0.03125
    %v2771 = vmul.f32 %v2769, 0.03125
    %v2772 = vadd.f32 %v2770, 1e-05
    %v2773 = vadd.f32 %v2771, 1e-05
    %v2774 = vrsqrt.pop %v2772
    %v2775 = vrsqrt.pop %v2773
    %v2776 = vmul.f32 %v2762, %v2774
    %v2777 = vmul.f32 %v2763, %v2775
    %v2778 = vmul.f32 %v2776, %v49
    %v2779 = vmul.f32 %v2777, %v49
    %v2780 = vadd.f32 %v2778, %v56
    %v2781 = vadd.f32 %v2779, %v56
    %s2782 = scalar_lea.vmem [#allocation3], 128
    %2783 = vst [vmem:[%s2782] sm:$0xff] %v2780
    %2784 = vst [vmem:[%s2782 + $0x8] sm:$0xff] %v2781
    %v2785 = vld [vmem:[#allocation2] sm:$0xff]
    %v2786 = vld [vmem:[#allocation2 + $0x8] sm:$0xff]
    %s2787 = scalar_lea.vmem %s1, 144
    %v2788 = vld [vmem:[%s2787] sm:$0xff]
    %v2789 = vld [vmem:[%s2787 + $0x8] sm:$0xff]
    %2791 = vset.pattern.permute.xlu0 0
    %2792 = vperm.xlu0 %2791, %v2788
    %v2793 = vpop.permute.xlu0 %2792
    %2796 = vset.pattern.permute.xlu0 0
    %2797 = vperm.xlu0 %2796, %v2789
    %v2798 = vpop.permute.xlu0 %2797
    %v2800 = vmul.f32 %v2785, %v2793
    %v2801 = vmul.f32 %v2786, %v2798
    %v2802 = vld [vmem:[%s3] sm:$0xff]
    %v2803 = vld [vmem:[%s3 + $0x8] sm:$0xff]
    %v2804 = vld [vmem:[%s3 + $0x10] sm:$0xff]
    %v2805 = vld [vmem:[%s3 + $0x18] sm:$0xff]
    %v2806 = vld [vmem:[%s3 + $0x20] sm:$0xff]
    %v2807 = vld [vmem:[%s3 + $0x28] sm:$0xff]
    %v2808 = vld [vmem:[%s3 + $0x30] sm:$0xff]
    %v2809 = vld [vmem:[%s3 + $0x38] sm:$0xff]
    %v2810 = vld [vmem:[%s3 + $0x40] sm:$0xff]
    %v2811 = vld [vmem:[%s3 + $0x48] sm:$0xff]
    %v2812 = vld [vmem:[%s3 + $0x50] sm:$0xff]
    %v2813 = vld [vmem:[%s3 + $0x58] sm:$0xff]
    %v2814 = vld [vmem:[%s3 + $0x60] sm:$0xff]
    %v2815 = vld [vmem:[%s3 + $0x68] sm:$0xff]
    %v2816 = vld [vmem:[%s3 + $0x70] sm:$0xff]
    %v2817 = vld [vmem:[%s3 + $0x78] sm:$0xff]
    %v2818 = vld [vmem:[%s3 + $0x80] sm:$0xff]
    %v2819 = vld [vmem:[%s3 + $0x88] sm:$0xff]
    %v2820 = vld [vmem:[%s3 + $0x90] sm:$0xff]
    %v2821 = vld [vmem:[%s3 + $0x98] sm:$0xff]
    %v2822 = vld [vmem:[%s3 + $0xa0] sm:$0xff]
    %v2823 = vld [vmem:[%s3 + $0xa8] sm:$0xff]
    %v2824 = vld [vmem:[%s3 + $0xb0] sm:$0xff]
    %v2825 = vld [vmem:[%s3 + $0xb8] sm:$0xff]
    %v2826 = vld [vmem:[%s3 + $0xc0] sm:$0xff]
    %v2827 = vld [vmem:[%s3 + $0xc8] sm:$0xff]
    %v2828 = vld [vmem:[%s3 + $0xd0] sm:$0xff]
    %v2829 = vld [vmem:[%s3 + $0xd8] sm:$0xff]
    %v2830 = vld [vmem:[%s3 + $0xe0] sm:$0xff]
    %v2831 = vld [vmem:[%s3 + $0xe8] sm:$0xff]
    %v2832 = vld [vmem:[%s3 + $0xf0] sm:$0xff]
    %v2833 = vld [vmem:[%s3 + $0xf8] sm:$0xff]
    %v2834 = vld [vmem:[%s3 + $0x100] sm:$0xff]
    %v2835 = vld [vmem:[%s3 + $0x108] sm:$0xff]
    %v2836 = vld [vmem:[%s3 + $0x110] sm:$0xff]
    %v2837 = vld [vmem:[%s3 + $0x118] sm:$0xff]
    %v2838 = vld [vmem:[%s3 + $0x120] sm:$0xff]
    %v2839 = vld [vmem:[%s3 + $0x128] sm:$0xff]
    %v2840 = vld [vmem:[%s3 + $0x130] sm:$0xff]
    %v2841 = vld [vmem:[%s3 + $0x138] sm:$0xff]
    %v2842 = vld [vmem:[%s3 + $0x140] sm:$0xff]
    %v2843 = vld [vmem:[%s3 + $0x148] sm:$0xff]
    %v2844 = vld [vmem:[%s3 + $0x150] sm:$0xff]
    %v2845 = vld [vmem:[%s3 + $0x158] sm:$0xff]
    %v2846 = vld [vmem:[%s3 + $0x160] sm:$0xff]
    %v2847 = vld [vmem:[%s3 + $0x168] sm:$0xff]
    %v2848 = vld [vmem:[%s3 + $0x170] sm:$0xff]
    %v2849 = vld [vmem:[%s3 + $0x178] sm:$0xff]
    %2850 = vmatprep.subr.mxu0 %v2803
    %2851 = vmatpush1.msra.mxu0 %v2802
    %2852 = vmatprep.subr.mxu0 %v2806
    %2853 = vmatpush1.msra.mxu0 %v2805
    %2854 = vmatprep.subr.mxu0 %v2809
    %2855 = vmatpush1.msra.mxu0 %v2808
    %2856 = vmatprep.subr.mxu0 %v2812
    %2857 = vmatpush1.msra.mxu0 %v2811
    %2858 = vmatprep.subr.mxu0 %v2815
    %2859 = vmatpush1.msra.mxu0 %v2814
    %2860 = vmatprep.subr.mxu0 %v2818
    %2861 = vmatpush1.msra.mxu0 %v2817
    %2862 = vmatprep.subr.mxu0 %v2821
    %2863 = vmatpush1.msra.mxu0 %v2820
    %2864 = vmatprep.subr.mxu0 %v2824
    %2865 = vmatpush1.msra.mxu0 %v2823
    %2866 = vmatprep.subr.mxu0 %v2827
    %2867 = vmatpush1.msra.mxu0 %v2826
    %2868 = vmatprep.subr.mxu0 %v2830
    %2869 = vmatpush1.msra.mxu0 %v2829
    %2870 = vmatprep.subr.mxu0 %v2833
    %2871 = vmatpush1.msra.mxu0 %v2832
    %2872 = vmatprep.subr.mxu0 %v2836
    %2873 = vmatpush1.msra.mxu0 %v2835
    %2874 = vmatprep.subr.mxu0 %v2839
    %2875 = vmatpush1.msra.mxu0 %v2838
    %2876 = vmatprep.subr.mxu0 %v2842
    %2877 = vmatpush1.msra.mxu0 %v2841
    %2878 = vmatprep.subr.mxu0 %v2845
    %2879 = vmatpush1.msra.mxu0 %v2844
    %2880 = vmatprep.subr.mxu0 %v2848
    %2881 = vmatpush1.msra.mxu0 %v2847
    %2882 = vmatprep.subr.mxu0 0.0
    %2883 = vmatpush1.msra.mxu0 0.0
    %2884 = vmatprep.subr.mxu0 0.0
    %2885 = vmatpush1.msra.mxu0 0.0
    %2886 = vmatprep.subr.mxu0 0.0
    %2887 = vmatpush1.msra.mxu0 0.0
    %2888 = vmatprep.subr.mxu0 0.0
    %2889 = vmatpush1.msra.mxu0 0.0
    %2890 = vmatprep.subr.mxu0 0.0
    %2891 = vmatpush1.msra.mxu0 0.0
    %2892 = vmatprep.subr.mxu0 0.0
    %2893 = vmatpush1.msra.mxu0 0.0
    %2894 = vmatprep.subr.mxu0 0.0
    %2895 = vmatpush1.msra.mxu0 0.0
    %2896 = vmatprep.subr.mxu0 0.0
    %2897 = vmatpush1.msra.mxu0 0.0
    %2898 = vmatprep.subr.mxu0 0.0
    %2899 = vmatpush1.msra.mxu0 0.0
    %2900 = vmatprep.subr.mxu0 0.0
    %2901 = vmatpush1.msra.mxu0 0.0
    %2902 = vmatprep.subr.mxu0 0.0
    %2903 = vmatpush1.msra.mxu0 0.0
    %2904 = vmatprep.subr.mxu0 0.0
    %2905 = vmatpush1.msra.mxu0 0.0
    %2906 = vmatprep.subr.mxu0 0.0
    %2907 = vmatpush1.msra.mxu0 0.0
    %2908 = vmatprep.subr.mxu0 0.0
    %2909 = vmatpush1.msra.mxu0 0.0
    %2910 = vmatprep.subr.mxu0 0.0
    %2911 = vmatpush1.msra.mxu0 0.0
    %2912 = vmatprep.subr.mxu0 0.0
    %2913 = vmatpush1.msra.mxu0 0.0
    %2914 = vmatprep.mubr.f32.mxu0 0.0
    %2915 = vmatmul.mubr.f32.gmra.mrb[0].mxu0 %v2800
    %v2916 = vpop.f32.mrb[0].mxu0
    %v2917 = vadd.f32 0.0, %v2916
    %v2918 = vpop.f32.mrb[0].mxu0
    %v2919 = vadd.f32 0.0, %v2918
    %2920 = vmatprep.mubr.f32.mxu0 0.0
    %2921 = vmatmul.mubr.f32.gmra.mrb[0].mxu0 %v2801
    %v2922 = vpop.f32.mrb[0].mxu0
    %v2923 = vadd.f32 0.0, %v2922
    %v2924 = vpop.f32.mrb[0].mxu0
    %v2925 = vadd.f32 0.0, %v2924
    %2926 = vdwg.mxu0
    %2927 = vmatprep.subr.mxu0 0.0
    %2928 = vmatpush1.msra.mxu0 %v2804
    %2929 = vmatprep.subr.mxu0 0.0
    %2930 = vmatpush1.msra.mxu0 %v2807
    %2931 = vmatprep.subr.mxu0 0.0
    %2932 = vmatpush1.msra.mxu0 %v2810
    %2933 = vmatprep.subr.mxu0 0.0
    %2934 = vmatpush1.msra.mxu0 %v2813
    %2935 = vmatprep.subr.mxu0 0.0
    %2936 = vmatpush1.msra.mxu0 %v2816
    %2937 = vmatprep.subr.mxu0 0.0
    %2938 = vmatpush1.msra.mxu0 %v2819
    %2939 = vmatprep.subr.mxu0 0.0
    %2940 = vmatpush1.msra.mxu0 %v2822
    %2941 = vmatprep.subr.mxu0 0.0
    %2942 = vmatpush1.msra.mxu0 %v2825
    %2943 = vmatprep.subr.mxu0 0.0
    %2944 = vmatpush1.msra.mxu0 %v2828
    %2945 = vmatprep.subr.mxu0 0.0
    %2946 = vmatpush1.msra.mxu0 %v2831
    %2947 = vmatprep.subr.mxu0 0.0
    %2948 = vmatpush1.msra.mxu0 %v2834
    %2949 = vmatprep.subr.mxu0 0.0
    %2950 = vmatpush1.msra.mxu0 %v2837
    %2951 = vmatprep.subr.mxu0 0.0
    %2952 = vmatpush1.msra.mxu0 %v2840
    %2953 = vmatprep.subr.mxu0 0.0
    %2954 = vmatpush1.msra.mxu0 %v2843
    %2955 = vmatprep.subr.mxu0 0.0
    %2956 = vmatpush1.msra.mxu0 %v2846
    %2957 = vmatprep.subr.mxu0 0.0
    %2958 = vmatpush1.msra.mxu0 %v2849
    %2959 = vmatprep.subr.mxu0 0.0
    %2960 = vmatpush1.msra.mxu0 0.0
    %2961 = vmatprep.subr.mxu0 0.0
    %2962 = vmatpush1.msra.mxu0 0.0
    %2963 = vmatprep.subr.mxu0 0.0
    %2964 = vmatpush1.msra.mxu0 0.0
    %2965 = vmatprep.subr.mxu0 0.0
    %2966 = vmatpush1.msra.mxu0 0.0
    %2967 = vmatprep.subr.mxu0 0.0
    %2968 = vmatpush1.msra.mxu0 0.0
    %2969 = vmatprep.subr.mxu0 0.0
    %2970 = vmatpush1.msra.mxu0 0.0
    %2971 = vmatprep.subr.mxu0 0.0
    %2972 = vmatpush1.msra.mxu0 0.0
    %2973 = vmatprep.subr.mxu0 0.0
    %2974 = vmatpush1.msra.mxu0 0.0
    %2975 = vmatprep.subr.mxu0 0.0
    %2976 = vmatpush1.msra.mxu0 0.0
    %2977 = vmatprep.subr.mxu0 0.0
    %2978 = vmatpush1.msra.mxu0 0.0
    %2979 = vmatprep.subr.mxu0 0.0
    %2980 = vmatpush1.msra.mxu0 0.0
    %2981 = vmatprep.subr.mxu0 0.0
    %2982 = vmatpush1.msra.mxu0 0.0
    %2983 = vmatprep.subr.mxu0 0.0
    %2984 = vmatpush1.msra.mxu0 0.0
    %2985 = vmatprep.subr.mxu0 0.0
    %2986 = vmatpush1.msra.mxu0 0.0
    %2987 = vmatprep.subr.mxu0 0.0
    %2988 = vmatpush1.msra.mxu0 0.0
    %2989 = vmatprep.subr.mxu0 0.0
    %2990 = vmatpush1.msra.mxu0 0.0
    %2991 = vmatprep.mubr.f32.mxu0 0.0
    %2992 = vmatmul.mubr.f32.gmra.mrb[0].mxu0 %v2800
    %v2993 = vpop.f32.mrb[0].mxu0
    %v2994 = vadd.f32 0.0, %v2993
    %v2995 = vpop.f32.mrb[0].mxu0
    %2996 = vmatprep.mubr.f32.mxu0 0.0
    %2997 = vmatmul.mubr.f32.gmra.mrb[0].mxu0 %v2801
    %v2998 = vpop.f32.mrb[0].mxu0
    %v2999 = vadd.f32 0.0, %v2998
    %v3000 = vpop.f32.mrb[0].mxu0
    %3001 = vdwg.mxu0
    %s3002 = scalar_lea.vmem %s0, 432
    %v3003 = vld [vmem:[%s3002] sm:$0xff]
    %v3004 = vld [vmem:[%s3002 + $0x8] sm:$0xff]
    %v3005 = vld [vmem:[%s3002 + $0x10] sm:$0xff]
    %v3006 = vld [vmem:[%s3002 + $0x18] sm:$0xff]
    %v3007 = vld [vmem:[%s3002 + $0x20] sm:$0xff]
    %v3008 = vld [vmem:[%s3002 + $0x28] sm:$0xff]
    %v3009 = vadd.f32 %v3003, %v2917
    %v3010 = vadd.f32 %v3004, %v2919
    %v3011 = vadd.f32 %v3006, %v2923
    %v3012 = vadd.f32 %v3007, %v2925
    %v3013 = vxor.u32 %v3009, 2147483648
    %v3014 = vxor.u32 %v3010, 2147483648
    %v3015 = vxor.u32 %v3011, 2147483648
    %v3016 = vxor.u32 %v3012, 2147483648
    %v3017 = vmul.f32 %v3013, 1.442695
    %v3018 = vpow.pop %v3017
    %v3019 = vmul.f32 %v3014, 1.442695
    %v3020 = vpow.pop %v3019
    %v3021 = vmul.f32 %v3015, 1.442695
    %v3022 = vpow.pop %v3021
    %v3023 = vmul.f32 %v3016, 1.442695
    %v3024 = vpow.pop %v3023
    %v3025 = vadd.f32 %v3018, 1.0
    %v3026 = vadd.f32 %v3020, 1.0
    %v3027 = vadd.f32 %v3022, 1.0
    %v3028 = vadd.f32 %v3024, 1.0
    %v3029 = vrcp.pop %v3025
    %v3030 = vmul.f32 1.0, %v3029
    %v3031 = vrcp.pop %v3026
    %v3032 = vmul.f32 1.0, %v3031
    %v3033 = vrcp.pop %v3027
    %v3034 = vmul.f32 1.0, %v3033
    %v3035 = vrcp.pop %v3028
    %v3036 = vmul.f32 1.0, %v3035
    %v3037 = vadd.f32 %v2994, %v42
    %v3038 = vadd.f32 %v2999, %v42
    %v3039 = vmul.f32 %v3030, %v3037
    %v3040 = vmul.f32 %v3034, %v3038
    %v3041 = vadd.f32 %v3005, %v3039
    %v3042 = vadd.f32 %v3008, %v3040
    %v3043 = vtanh.pop %v3041
    %v3044 = vtanh.pop %v3042
    %v3045 = vsub.f32 1.0, %v3032
    %v3046 = vsub.f32 1.0, %v3036
    %v3047 = vmul.f32 %v3045, %v3043
    %v3048 = vmul.f32 %v3046, %v3044
    %v3049 = vmul.f32 %v3032, %v2800
    %v3050 = vmul.f32 %v3036, %v2801
    %v3051 = vadd.f32 %v3047, %v3049
    %v3052 = vadd.f32 %v3048, %v3050
    %3053 = vst [vmem:[#allocation2] sm:$0xff] %v3051
    %3054 = vst [vmem:[#allocation2 + $0x8] sm:$0xff] %v3052
    %v3055 = vsel %vm60, %v3051, 0.0
    %v3056 = vsel %vm60, %v3052, 0.0
    %3057 = vadd.xlane.f32.xlu0 %v3055
    %v3058 = vpop.xlane.xlu0 %3057
    %3059 = vadd.xlane.f32.xlu0 %v3056
    %v3060 = vpop.xlane.xlu0 %3059
    %v3061 = vmul.f32 %v3058, 0.03125
    %v3062 = vmul.f32 %v3060, 0.03125
    %v3063 = vsub.f32 %v3055, %v3061
    %v3064 = vsub.f32 %v3056, %v3062
    %v3065 = vsel %vm60, %v3063, 0.0
    %v3066 = vsel %vm60, %v3064, 0.0
    %v3067 = vmul.f32 %v3065, %v3065
    %v3068 = vmul.f32 %v3066, %v3066
    %3069 = vadd.xlane.f32.xlu0 %v3067
    %v3070 = vpop.xlane.xlu0 %3069
    %3071 = vadd.xlane.f32.xlu0 %v3068
    %v3072 = vpop.xlane.xlu0 %3071
    %v3073 = vmul.f32 %v3070, 0.03125
    %v3074 = vmul.f32 %v3072, 0.03125
    %v3075 = vadd.f32 %v3073, 1e-05
    %v3076 = vadd.f32 %v3074, 1e-05
    %v3077 = vrsqrt.pop %v3075
    %v3078 = vrsqrt.pop %v3076
    %v3079 = vmul.f32 %v3065, %v3077
    %v3080 = vmul.f32 %v3066, %v3078
    %v3081 = vmul.f32 %v3079, %v49
    %v3082 = vmul.f32 %v3080, %v49
    %v3083 = vadd.f32 %v3081, %v56
    %v3084 = vadd.f32 %v3082, %v56
    %s3085 = scalar_lea.vmem [#allocation3], 144
    %3086 = vst [vmem:[%s3085] sm:$0xff] %v3083
    %3087 = vst [vmem:[%s3085 + $0x8] sm:$0xff] %v3084
    %v3088 = vld [vmem:[#allocation2] sm:$0xff]
    %v3089 = vld [vmem:[#allocation2 + $0x8] sm:$0xff]
    %s3090 = scalar_lea.vmem %s1, 160
    %v3091 = vld [vmem:[%s3090] sm:$0xff]
    %v3092 = vld [vmem:[%s3090 + $0x8] sm:$0xff]
    %3094 = vset.pattern.permute.xlu0 0
    %3095 = vperm.xlu0 %3094, %v3091
    %v3096 = vpop.permute.xlu0 %3095
    %3099 = vset.pattern.permute.xlu0 0
    %3100 = vperm.xlu0 %3099, %v3092
    %v3101 = vpop.permute.xlu0 %3100
    %v3103 = vmul.f32 %v3088, %v3096
    %v3104 = vmul.f32 %v3089, %v3101
    %v3105 = vld [vmem:[%s3] sm:$0xff]
    %v3106 = vld [vmem:[%s3 + $0x8] sm:$0xff]
    %v3107 = vld [vmem:[%s3 + $0x10] sm:$0xff]
    %v3108 = vld [vmem:[%s3 + $0x18] sm:$0xff]
    %v3109 = vld [vmem:[%s3 + $0x20] sm:$0xff]
    %v3110 = vld [vmem:[%s3 + $0x28] sm:$0xff]
    %v3111 = vld [vmem:[%s3 + $0x30] sm:$0xff]
    %v3112 = vld [vmem:[%s3 + $0x38] sm:$0xff]
    %v3113 = vld [vmem:[%s3 + $0x40] sm:$0xff]
    %v3114 = vld [vmem:[%s3 + $0x48] sm:$0xff]
    %v3115 = vld [vmem:[%s3 + $0x50] sm:$0xff]
    %v3116 = vld [vmem:[%s3 + $0x58] sm:$0xff]
    %v3117 = vld [vmem:[%s3 + $0x60] sm:$0xff]
    %v3118 = vld [vmem:[%s3 + $0x68] sm:$0xff]
    %v3119 = vld [vmem:[%s3 + $0x70] sm:$0xff]
    %v3120 = vld [vmem:[%s3 + $0x78] sm:$0xff]
    %v3121 = vld [vmem:[%s3 + $0x80] sm:$0xff]
    %v3122 = vld [vmem:[%s3 + $0x88] sm:$0xff]
    %v3123 = vld [vmem:[%s3 + $0x90] sm:$0xff]
    %v3124 = vld [vmem:[%s3 + $0x98] sm:$0xff]
    %v3125 = vld [vmem:[%s3 + $0xa0] sm:$0xff]
    %v3126 = vld [vmem:[%s3 + $0xa8] sm:$0xff]
    %v3127 = vld [vmem:[%s3 + $0xb0] sm:$0xff]
    %v3128 = vld [vmem:[%s3 + $0xb8] sm:$0xff]
    %v3129 = vld [vmem:[%s3 + $0xc0] sm:$0xff]
    %v3130 = vld [vmem:[%s3 + $0xc8] sm:$0xff]
    %v3131 = vld [vmem:[%s3 + $0xd0] sm:$0xff]
    %v3132 = vld [vmem:[%s3 + $0xd8] sm:$0xff]
    %v3133 = vld [vmem:[%s3 + $0xe0] sm:$0xff]
    %v3134 = vld [vmem:[%s3 + $0xe8] sm:$0xff]
    %v3135 = vld [vmem:[%s3 + $0xf0] sm:$0xff]
    %v3136 = vld [vmem:[%s3 + $0xf8] sm:$0xff]
    %v3137 = vld [vmem:[%s3 + $0x100] sm:$0xff]
    %v3138 = vld [vmem:[%s3 + $0x108] sm:$0xff]
    %v3139 = vld [vmem:[%s3 + $0x110] sm:$0xff]
    %v3140 = vld [vmem:[%s3 + $0x118] sm:$0xff]
    %v3141 = vld [vmem:[%s3 + $0x120] sm:$0xff]
    %v3142 = vld [vmem:[%s3 + $0x128] sm:$0xff]
    %v3143 = vld [vmem:[%s3 + $0x130] sm:$0xff]
    %v3144 = vld [vmem:[%s3 + $0x138] sm:$0xff]
    %v3145 = vld [vmem:[%s3 + $0x140] sm:$0xff]
    %v3146 = vld [vmem:[%s3 + $0x148] sm:$0xff]
    %v3147 = vld [vmem:[%s3 + $0x150] sm:$0xff]
    %v3148 = vld [vmem:[%s3 + $0x158] sm:$0xff]
    %v3149 = vld [vmem:[%s3 + $0x160] sm:$0xff]
    %v3150 = vld [vmem:[%s3 + $0x168] sm:$0xff]
    %v3151 = vld [vmem:[%s3 + $0x170] sm:$0xff]
    %v3152 = vld [vmem:[%s3 + $0x178] sm:$0xff]
    %3153 = vmatprep.subr.mxu0 %v3106
    %3154 = vmatpush1.msra.mxu0 %v3105
    %3155 = vmatprep.subr.mxu0 %v3109
    %3156 = vmatpush1.msra.mxu0 %v3108
    %3157 = vmatprep.subr.mxu0 %v3112
    %3158 = vmatpush1.msra.mxu0 %v3111
    %3159 = vmatprep.subr.mxu0 %v3115
    %3160 = vmatpush1.msra.mxu0 %v3114
    %3161 = vmatprep.subr.mxu0 %v3118
    %3162 = vmatpush1.msra.mxu0 %v3117
    %3163 = vmatprep.subr.mxu0 %v3121
    %3164 = vmatpush1.msra.mxu0 %v3120
    %3165 = vmatprep.subr.mxu0 %v3124
    %3166 = vmatpush1.msra.mxu0 %v3123
    %3167 = vmatprep.subr.mxu0 %v3127
    %3168 = vmatpush1.msra.mxu0 %v3126
    %3169 = vmatprep.subr.mxu0 %v3130
    %3170 = vmatpush1.msra.mxu0 %v3129
    %3171 = vmatprep.subr.mxu0 %v3133
    %3172 = vmatpush1.msra.mxu0 %v3132
    %3173 = vmatprep.subr.mxu0 %v3136
    %3174 = vmatpush1.msra.mxu0 %v3135
    %3175 = vmatprep.subr.mxu0 %v3139
    %3176 = vmatpush1.msra.mxu0 %v3138
    %3177 = vmatprep.subr.mxu0 %v3142
    %3178 = vmatpush1.msra.mxu0 %v3141
    %3179 = vmatprep.subr.mxu0 %v3145
    %3180 = vmatpush1.msra.mxu0 %v3144
    %3181 = vmatprep.subr.mxu0 %v3148
    %3182 = vmatpush1.msra.mxu0 %v3147
    %3183 = vmatprep.subr.mxu0 %v3151
    %3184 = vmatpush1.msra.mxu0 %v3150
    %3185 = vmatprep.subr.mxu0 0.0
    %3186 = vmatpush1.msra.mxu0 0.0
    %3187 = vmatprep.subr.mxu0 0.0
    %3188 = vmatpush1.msra.mxu0 0.0
    %3189 = vmatprep.subr.mxu0 0.0
    %3190 = vmatpush1.msra.mxu0 0.0
    %3191 = vmatprep.subr.mxu0 0.0
    %3192 = vmatpush1.msra.mxu0 0.0
    %3193 = vmatprep.subr.mxu0 0.0
    %3194 = vmatpush1.msra.mxu0 0.0
    %3195 = vmatprep.subr.mxu0 0.0
    %3196 = vmatpush1.msra.mxu0 0.0
    %3197 = vmatprep.subr.mxu0 0.0
    %3198 = vmatpush1.msra.mxu0 0.0
    %3199 = vmatprep.subr.mxu0 0.0
    %3200 = vmatpush1.msra.mxu0 0.0
    %3201 = vmatprep.subr.mxu0 0.0
    %3202 = vmatpush1.msra.mxu0 0.0
    %3203 = vmatprep.subr.mxu0 0.0
    %3204 = vmatpush1.msra.mxu0 0.0
    %3205 = vmatprep.subr.mxu0 0.0
    %3206 = vmatpush1.msra.mxu0 0.0
    %3207 = vmatprep.subr.mxu0 0.0
    %3208 = vmatpush1.msra.mxu0 0.0
    %3209 = vmatprep.subr.mxu0 0.0
    %3210 = vmatpush1.msra.mxu0 0.0
    %3211 = vmatprep.subr.mxu0 0.0
    %3212 = vmatpush1.msra.mxu0 0.0
    %3213 = vmatprep.subr.mxu0 0.0
    %3214 = vmatpush1.msra.mxu0 0.0
    %3215 = vmatprep.subr.mxu0 0.0
    %3216 = vmatpush1.msra.mxu0 0.0
    %3217 = vmatprep.mubr.f32.mxu0 0.0
    %3218 = vmatmul.mubr.f32.gmra.mrb[0].mxu0 %v3103
    %v3219 = vpop.f32.mrb[0].mxu0
    %v3220 = vadd.f32 0.0, %v3219
    %v3221 = vpop.f32.mrb[0].mxu0
    %v3222 = vadd.f32 0.0, %v3221
    %3223 = vmatprep.mubr.f32.mxu0 0.0
    %3224 = vmatmul.mubr.f32.gmra.mrb[0].mxu0 %v3104
    %v3225 = vpop.f32.mrb[0].mxu0
    %v3226 = vadd.f32 0.0, %v3225
    %v3227 = vpop.f32.mrb[0].mxu0
    %v3228 = vadd.f32 0.0, %v3227
    %3229 = vdwg.mxu0
    %3230 = vmatprep.subr.mxu0 0.0
    %3231 = vmatpush1.msra.mxu0 %v3107
    %3232 = vmatprep.subr.mxu0 0.0
    %3233 = vmatpush1.msra.mxu0 %v3110
    %3234 = vmatprep.subr.mxu0 0.0
    %3235 = vmatpush1.msra.mxu0 %v3113
    %3236 = vmatprep.subr.mxu0 0.0
    %3237 = vmatpush1.msra.mxu0 %v3116
    %3238 = vmatprep.subr.mxu0 0.0
    %3239 = vmatpush1.msra.mxu0 %v3119
    %3240 = vmatprep.subr.mxu0 0.0
    %3241 = vmatpush1.msra.mxu0 %v3122
    %3242 = vmatprep.subr.mxu0 0.0
    %3243 = vmatpush1.msra.mxu0 %v3125
    %3244 = vmatprep.subr.mxu0 0.0
    %3245 = vmatpush1.msra.mxu0 %v3128
    %3246 = vmatprep.subr.mxu0 0.0
    %3247 = vmatpush1.msra.mxu0 %v3131
    %3248 = vmatprep.subr.mxu0 0.0
    %3249 = vmatpush1.msra.mxu0 %v3134
    %3250 = vmatprep.subr.mxu0 0.0
    %3251 = vmatpush1.msra.mxu0 %v3137
    %3252 = vmatprep.subr.mxu0 0.0
    %3253 = vmatpush1.msra.mxu0 %v3140
    %3254 = vmatprep.subr.mxu0 0.0
    %3255 = vmatpush1.msra.mxu0 %v3143
    %3256 = vmatprep.subr.mxu0 0.0
    %3257 = vmatpush1.msra.mxu0 %v3146
    %3258 = vmatprep.subr.mxu0 0.0
    %3259 = vmatpush1.msra.mxu0 %v3149
    %3260 = vmatprep.subr.mxu0 0.0
    %3261 = vmatpush1.msra.mxu0 %v3152
    %3262 = vmatprep.subr.mxu0 0.0
    %3263 = vmatpush1.msra.mxu0 0.0
    %3264 = vmatprep.subr.mxu0 0.0
    %3265 = vmatpush1.msra.mxu0 0.0
    %3266 = vmatprep.subr.mxu0 0.0
    %3267 = vmatpush1.msra.mxu0 0.0
    %3268 = vmatprep.subr.mxu0 0.0
    %3269 = vmatpush1.msra.mxu0 0.0
    %3270 = vmatprep.subr.mxu0 0.0
    %3271 = vmatpush1.msra.mxu0 0.0
    %3272 = vmatprep.subr.mxu0 0.0
    %3273 = vmatpush1.msra.mxu0 0.0
    %3274 = vmatprep.subr.mxu0 0.0
    %3275 = vmatpush1.msra.mxu0 0.0
    %3276 = vmatprep.subr.mxu0 0.0
    %3277 = vmatpush1.msra.mxu0 0.0
    %3278 = vmatprep.subr.mxu0 0.0
    %3279 = vmatpush1.msra.mxu0 0.0
    %3280 = vmatprep.subr.mxu0 0.0
    %3281 = vmatpush1.msra.mxu0 0.0
    %3282 = vmatprep.subr.mxu0 0.0
    %3283 = vmatpush1.msra.mxu0 0.0
    %3284 = vmatprep.subr.mxu0 0.0
    %3285 = vmatpush1.msra.mxu0 0.0
    %3286 = vmatprep.subr.mxu0 0.0
    %3287 = vmatpush1.msra.mxu0 0.0
    %3288 = vmatprep.subr.mxu0 0.0
    %3289 = vmatpush1.msra.mxu0 0.0
    %3290 = vmatprep.subr.mxu0 0.0
    %3291 = vmatpush1.msra.mxu0 0.0
    %3292 = vmatprep.subr.mxu0 0.0
    %3293 = vmatpush1.msra.mxu0 0.0
    %3294 = vmatprep.mubr.f32.mxu0 0.0
    %3295 = vmatmul.mubr.f32.gmra.mrb[0].mxu0 %v3103
    %v3296 = vpop.f32.mrb[0].mxu0
    %v3297 = vadd.f32 0.0, %v3296
    %v3298 = vpop.f32.mrb[0].mxu0
    %3299 = vmatprep.mubr.f32.mxu0 0.0
    %3300 = vmatmul.mubr.f32.gmra.mrb[0].mxu0 %v3104
    %v3301 = vpop.f32.mrb[0].mxu0
    %v3302 = vadd.f32 0.0, %v3301
    %v3303 = vpop.f32.mrb[0].mxu0
    %3304 = vdwg.mxu0
    %s3305 = scalar_lea.vmem %s0, 480
    %v3306 = vld [vmem:[%s3305] sm:$0xff]
    %v3307 = vld [vmem:[%s3305 + $0x8] sm:$0xff]
    %v3308 = vld [vmem:[%s3305 + $0x10] sm:$0xff]
    %v3309 = vld [vmem:[%s3305 + $0x18] sm:$0xff]
    %v3310 = vld [vmem:[%s3305 + $0x20] sm:$0xff]
    %v3311 = vld [vmem:[%s3305 + $0x28] sm:$0xff]
    %v3312 = vadd.f32 %v3306, %v3220
    %v3313 = vadd.f32 %v3307, %v3222
    %v3314 = vadd.f32 %v3309, %v3226
    %v3315 = vadd.f32 %v3310, %v3228
    %v3316 = vxor.u32 %v3312, 2147483648
    %v3317 = vxor.u32 %v3313, 2147483648
    %v3318 = vxor.u32 %v3314, 2147483648
    %v3319 = vxor.u32 %v3315, 2147483648
    %v3320 = vmul.f32 %v3316, 1.442695
    %v3321 = vpow.pop %v3320
    %v3322 = vmul.f32 %v3317, 1.442695
    %v3323 = vpow.pop %v3322
    %v3324 = vmul.f32 %v3318, 1.442695
    %v3325 = vpow.pop %v3324
    %v3326 = vmul.f32 %v3319, 1.442695
    %v3327 = vpow.pop %v3326
    %v3328 = vadd.f32 %v3321, 1.0
    %v3329 = vadd.f32 %v3323, 1.0
    %v3330 = vadd.f32 %v3325, 1.0
    %v3331 = vadd.f32 %v3327, 1.0
    %v3332 = vrcp.pop %v3328
    %v3333 = vmul.f32 1.0, %v3332
    %v3334 = vrcp.pop %v3329
    %v3335 = vmul.f32 1.0, %v3334
    %v3336 = vrcp.pop %v3330
    %v3337 = vmul.f32 1.0, %v3336
    %v3338 = vrcp.pop %v3331
    %v3339 = vmul.f32 1.0, %v3338
    %v3340 = vadd.f32 %v3297, %v42
    %v3341 = vadd.f32 %v3302, %v42
    %v3342 = vmul.f32 %v3333, %v3340
    %v3343 = vmul.f32 %v3337, %v3341
    %v3344 = vadd.f32 %v3308, %v3342
    %v3345 = vadd.f32 %v3311, %v3343
    %v3346 = vtanh.pop %v3344
    %v3347 = vtanh.pop %v3345
    %v3348 = vsub.f32 1.0, %v3335
    %v3349 = vsub.f32 1.0, %v3339
    %v3350 = vmul.f32 %v3348, %v3346
    %v3351 = vmul.f32 %v3349, %v3347
    %v3352 = vmul.f32 %v3335, %v3103
    %v3353 = vmul.f32 %v3339, %v3104
    %v3354 = vadd.f32 %v3350, %v3352
    %v3355 = vadd.f32 %v3351, %v3353
    %3356 = vst [vmem:[#allocation2] sm:$0xff] %v3354
    %3357 = vst [vmem:[#allocation2 + $0x8] sm:$0xff] %v3355
    %v3358 = vsel %vm60, %v3354, 0.0
    %v3359 = vsel %vm60, %v3355, 0.0
    %3360 = vadd.xlane.f32.xlu0 %v3358
    %v3361 = vpop.xlane.xlu0 %3360
    %3362 = vadd.xlane.f32.xlu0 %v3359
    %v3363 = vpop.xlane.xlu0 %3362
    %v3364 = vmul.f32 %v3361, 0.03125
    %v3365 = vmul.f32 %v3363, 0.03125
    %v3366 = vsub.f32 %v3358, %v3364
    %v3367 = vsub.f32 %v3359, %v3365
    %v3368 = vsel %vm60, %v3366, 0.0
    %v3369 = vsel %vm60, %v3367, 0.0
    %v3370 = vmul.f32 %v3368, %v3368
    %v3371 = vmul.f32 %v3369, %v3369
    %3372 = vadd.xlane.f32.xlu0 %v3370
    %v3373 = vpop.xlane.xlu0 %3372
    %3374 = vadd.xlane.f32.xlu0 %v3371
    %v3375 = vpop.xlane.xlu0 %3374
    %v3376 = vmul.f32 %v3373, 0.03125
    %v3377 = vmul.f32 %v3375, 0.03125
    %v3378 = vadd.f32 %v3376, 1e-05
    %v3379 = vadd.f32 %v3377, 1e-05
    %v3380 = vrsqrt.pop %v3378
    %v3381 = vrsqrt.pop %v3379
    %v3382 = vmul.f32 %v3368, %v3380
    %v3383 = vmul.f32 %v3369, %v3381
    %v3384 = vmul.f32 %v3382, %v49
    %v3385 = vmul.f32 %v3383, %v49
    %v3386 = vadd.f32 %v3384, %v56
    %v3387 = vadd.f32 %v3385, %v56
    %s3388 = scalar_lea.vmem [#allocation3], 160
    %3389 = vst [vmem:[%s3388] sm:$0xff] %v3386
    %3390 = vst [vmem:[%s3388 + $0x8] sm:$0xff] %v3387
    %v3391 = vld [vmem:[#allocation2] sm:$0xff]
    %v3392 = vld [vmem:[#allocation2 + $0x8] sm:$0xff]
    %s3393 = scalar_lea.vmem %s1, 176
    %v3394 = vld [vmem:[%s3393] sm:$0xff]
    %v3395 = vld [vmem:[%s3393 + $0x8] sm:$0xff]
    %3397 = vset.pattern.permute.xlu0 0
    %3398 = vperm.xlu0 %3397, %v3394
    %v3399 = vpop.permute.xlu0 %3398
    %3402 = vset.pattern.permute.xlu0 0
    %3403 = vperm.xlu0 %3402, %v3395
    %v3404 = vpop.permute.xlu0 %3403
    %v3406 = vmul.f32 %v3391, %v3399
    %v3407 = vmul.f32 %v3392, %v3404
    %v3408 = vld [vmem:[%s3] sm:$0xff]
    %v3409 = vld [vmem:[%s3 + $0x8] sm:$0xff]
    %v3410 = vld [vmem:[%s3 + $0x10] sm:$0xff]
    %v3411 = vld [vmem:[%s3 + $0x18] sm:$0xff]
    %v3412 = vld [vmem:[%s3 + $0x20] sm:$0xff]
    %v3413 = vld [vmem:[%s3 + $0x28] sm:$0xff]
    %v3414 = vld [vmem:[%s3 + $0x30] sm:$0xff]
    %v3415 = vld [vmem:[%s3 + $0x38] sm:$0xff]
    %v3416 = vld [vmem:[%s3 + $0x40] sm:$0xff]
    %v3417 = vld [vmem:[%s3 + $0x48] sm:$0xff]
    %v3418 = vld [vmem:[%s3 + $0x50] sm:$0xff]
    %v3419 = vld [vmem:[%s3 + $0x58] sm:$0xff]
    %v3420 = vld [vmem:[%s3 + $0x60] sm:$0xff]
    %v3421 = vld [vmem:[%s3 + $0x68] sm:$0xff]
    %v3422 = vld [vmem:[%s3 + $0x70] sm:$0xff]
    %v3423 = vld [vmem:[%s3 + $0x78] sm:$0xff]
    %v3424 = vld [vmem:[%s3 + $0x80] sm:$0xff]
    %v3425 = vld [vmem:[%s3 + $0x88] sm:$0xff]
    %v3426 = vld [vmem:[%s3 + $0x90] sm:$0xff]
    %v3427 = vld [vmem:[%s3 + $0x98] sm:$0xff]
    %v3428 = vld [vmem:[%s3 + $0xa0] sm:$0xff]
    %v3429 = vld [vmem:[%s3 + $0xa8] sm:$0xff]
    %v3430 = vld [vmem:[%s3 + $0xb0] sm:$0xff]
    %v3431 = vld [vmem:[%s3 + $0xb8] sm:$0xff]
    %v3432 = vld [vmem:[%s3 + $0xc0] sm:$0xff]
    %v3433 = vld [vmem:[%s3 + $0xc8] sm:$0xff]
    %v3434 = vld [vmem:[%s3 + $0xd0] sm:$0xff]
    %v3435 = vld [vmem:[%s3 + $0xd8] sm:$0xff]
    %v3436 = vld [vmem:[%s3 + $0xe0] sm:$0xff]
    %v3437 = vld [vmem:[%s3 + $0xe8] sm:$0xff]
    %v3438 = vld [vmem:[%s3 + $0xf0] sm:$0xff]
    %v3439 = vld [vmem:[%s3 + $0xf8] sm:$0xff]
    %v3440 = vld [vmem:[%s3 + $0x100] sm:$0xff]
    %v3441 = vld [vmem:[%s3 + $0x108] sm:$0xff]
    %v3442 = vld [vmem:[%s3 + $0x110] sm:$0xff]
    %v3443 = vld [vmem:[%s3 + $0x118] sm:$0xff]
    %v3444 = vld [vmem:[%s3 + $0x120] sm:$0xff]
    %v3445 = vld [vmem:[%s3 + $0x128] sm:$0xff]
    %v3446 = vld [vmem:[%s3 + $0x130] sm:$0xff]
    %v3447 = vld [vmem:[%s3 + $0x138] sm:$0xff]
    %v3448 = vld [vmem:[%s3 + $0x140] sm:$0xff]
    %v3449 = vld [vmem:[%s3 + $0x148] sm:$0xff]
    %v3450 = vld [vmem:[%s3 + $0x150] sm:$0xff]
    %v3451 = vld [vmem:[%s3 + $0x158] sm:$0xff]
    %v3452 = vld [vmem:[%s3 + $0x160] sm:$0xff]
    %v3453 = vld [vmem:[%s3 + $0x168] sm:$0xff]
    %v3454 = vld [vmem:[%s3 + $0x170] sm:$0xff]
    %v3455 = vld [vmem:[%s3 + $0x178] sm:$0xff]
    %3456 = vmatprep.subr.mxu0 %v3409
    %3457 = vmatpush1.msra.mxu0 %v3408
    %3458 = vmatprep.subr.mxu0 %v3412
    %3459 = vmatpush1.msra.mxu0 %v3411
    %3460 = vmatprep.subr.mxu0 %v3415
    %3461 = vmatpush1.msra.mxu0 %v3414
    %3462 = vmatprep.subr.mxu0 %v3418
    %3463 = vmatpush1.msra.mxu0 %v3417
    %3464 = vmatprep.subr.mxu0 %v3421
    %3465 = vmatpush1.msra.mxu0 %v3420
    %3466 = vmatprep.subr.mxu0 %v3424
    %3467 = vmatpush1.msra.mxu0 %v3423
    %3468 = vmatprep.subr.mxu0 %v3427
    %3469 = vmatpush1.msra.mxu0 %v3426
    %3470 = vmatprep.subr.mxu0 %v3430
    %3471 = vmatpush1.msra.mxu0 %v3429
    %3472 = vmatprep.subr.mxu0 %v3433
    %3473 = vmatpush1.msra.mxu0 %v3432
    %3474 = vmatprep.subr.mxu0 %v3436
    %3475 = vmatpush1.msra.mxu0 %v3435
    %3476 = vmatprep.subr.mxu0 %v3439
    %3477 = vmatpush1.msra.mxu0 %v3438
    %3478 = vmatprep.subr.mxu0 %v3442
    %3479 = vmatpush1.msra.mxu0 %v3441
    %3480 = vmatprep.subr.mxu0 %v3445
    %3481 = vmatpush1.msra.mxu0 %v3444
    %3482 = vmatprep.subr.mxu0 %v3448
    %3483 = vmatpush1.msra.mxu0 %v3447
    %3484 = vmatprep.subr.mxu0 %v3451
    %3485 = vmatpush1.msra.mxu0 %v3450
    %3486 = vmatprep.subr.mxu0 %v3454
    %3487 = vmatpush1.msra.mxu0 %v3453
    %3488 = vmatprep.subr.mxu0 0.0
    %3489 = vmatpush1.msra.mxu0 0.0
    %3490 = vmatprep.subr.mxu0 0.0
    %3491 = vmatpush1.msra.mxu0 0.0
    %3492 = vmatprep.subr.mxu0 0.0
    %3493 = vmatpush1.msra.mxu0 0.0
    %3494 = vmatprep.subr.mxu0 0.0
    %3495 = vmatpush1.msra.mxu0 0.0
    %3496 = vmatprep.subr.mxu0 0.0
    %3497 = vmatpush1.msra.mxu0 0.0
    %3498 = vmatprep.subr.mxu0 0.0
    %3499 = vmatpush1.msra.mxu0 0.0
    %3500 = vmatprep.subr.mxu0 0.0
    %3501 = vmatpush1.msra.mxu0 0.0
    %3502 = vmatprep.subr.mxu0 0.0
    %3503 = vmatpush1.msra.mxu0 0.0
    %3504 = vmatprep.subr.mxu0 0.0
    %3505 = vmatpush1.msra.mxu0 0.0
    %3506 = vmatprep.subr.mxu0 0.0
    %3507 = vmatpush1.msra.mxu0 0.0
    %3508 = vmatprep.subr.mxu0 0.0
    %3509 = vmatpush1.msra.mxu0 0.0
    %3510 = vmatprep.subr.mxu0 0.0
    %3511 = vmatpush1.msra.mxu0 0.0
    %3512 = vmatprep.subr.mxu0 0.0
    %3513 = vmatpush1.msra.mxu0 0.0
    %3514 = vmatprep.subr.mxu0 0.0
    %3515 = vmatpush1.msra.mxu0 0.0
    %3516 = vmatprep.subr.mxu0 0.0
    %3517 = vmatpush1.msra.mxu0 0.0
    %3518 = vmatprep.subr.mxu0 0.0
    %3519 = vmatpush1.msra.mxu0 0.0
    %3520 = vmatprep.mubr.f32.mxu0 0.0
    %3521 = vmatmul.mubr.f32.gmra.mrb[0].mxu0 %v3406
    %v3522 = vpop.f32.mrb[0].mxu0
    %v3523 = vadd.f32 0.0, %v3522
    %v3524 = vpop.f32.mrb[0].mxu0
    %v3525 = vadd.f32 0.0, %v3524
    %3526 = vmatprep.mubr.f32.mxu0 0.0
    %3527 = vmatmul.mubr.f32.gmra.mrb[0].mxu0 %v3407
    %v3528 = vpop.f32.mrb[0].mxu0
    %v3529 = vadd.f32 0.0, %v3528
    %v3530 = vpop.f32.mrb[0].mxu0
    %v3531 = vadd.f32 0.0, %v3530
    %3532 = vdwg.mxu0
    %3533 = vmatprep.subr.mxu0 0.0
    %3534 = vmatpush1.msra.mxu0 %v3410
    %3535 = vmatprep.subr.mxu0 0.0
    %3536 = vmatpush1.msra.mxu0 %v3413
    %3537 = vmatprep.subr.mxu0 0.0
    %3538 = vmatpush1.msra.mxu0 %v3416
    %3539 = vmatprep.subr.mxu0 0.0
    %3540 = vmatpush1.msra.mxu0 %v3419
    %3541 = vmatprep.subr.mxu0 0.0
    %3542 = vmatpush1.msra.mxu0 %v3422
    %3543 = vmatprep.subr.mxu0 0.0
    %3544 = vmatpush1.msra.mxu0 %v3425
    %3545 = vmatprep.subr.mxu0 0.0
    %3546 = vmatpush1.msra.mxu0 %v3428
    %3547 = vmatprep.subr.mxu0 0.0
    %3548 = vmatpush1.msra.mxu0 %v3431
    %3549 = vmatprep.subr.mxu0 0.0
    %3550 = vmatpush1.msra.mxu0 %v3434
    %3551 = vmatprep.subr.mxu0 0.0
    %3552 = vmatpush1.msra.mxu0 %v3437
    %3553 = vmatprep.subr.mxu0 0.0
    %3554 = vmatpush1.msra.mxu0 %v3440
    %3555 = vmatprep.subr.mxu0 0.0
    %3556 = vmatpush1.msra.mxu0 %v3443
    %3557 = vmatprep.subr.mxu0 0.0
    %3558 = vmatpush1.msra.mxu0 %v3446
    %3559 = vmatprep.subr.mxu0 0.0
    %3560 = vmatpush1.msra.mxu0 %v3449
    %3561 = vmatprep.subr.mxu0 0.0
    %3562 = vmatpush1.msra.mxu0 %v3452
    %3563 = vmatprep.subr.mxu0 0.0
    %3564 = vmatpush1.msra.mxu0 %v3455
    %3565 = vmatprep.subr.mxu0 0.0
    %3566 = vmatpush1.msra.mxu0 0.0
    %3567 = vmatprep.subr.mxu0 0.0
    %3568 = vmatpush1.msra.mxu0 0.0
    %3569 = vmatprep.subr.mxu0 0.0
    %3570 = vmatpush1.msra.mxu0 0.0
    %3571 = vmatprep.subr.mxu0 0.0
    %3572 = vmatpush1.msra.mxu0 0.0
    %3573 = vmatprep.subr.mxu0 0.0
    %3574 = vmatpush1.msra.mxu0 0.0
    %3575 = vmatprep.subr.mxu0 0.0
    %3576 = vmatpush1.msra.mxu0 0.0
    %3577 = vmatprep.subr.mxu0 0.0
    %3578 = vmatpush1.msra.mxu0 0.0
    %3579 = vmatprep.subr.mxu0 0.0
    %3580 = vmatpush1.msra.mxu0 0.0
    %3581 = vmatprep.subr.mxu0 0.0
    %3582 = vmatpush1.msra.mxu0 0.0
    %3583 = vmatprep.subr.mxu0 0.0
    %3584 = vmatpush1.msra.mxu0 0.0
    %3585 = vmatprep.subr.mxu0 0.0
    %3586 = vmatpush1.msra.mxu0 0.0
    %3587 = vmatprep.subr.mxu0 0.0
    %3588 = vmatpush1.msra.mxu0 0.0
    %3589 = vmatprep.subr.mxu0 0.0
    %3590 = vmatpush1.msra.mxu0 0.0
    %3591 = vmatprep.subr.mxu0 0.0
    %3592 = vmatpush1.msra.mxu0 0.0
    %3593 = vmatprep.subr.mxu0 0.0
    %3594 = vmatpush1.msra.mxu0 0.0
    %3595 = vmatprep.subr.mxu0 0.0
    %3596 = vmatpush1.msra.mxu0 0.0
    %3597 = vmatprep.mubr.f32.mxu0 0.0
    %3598 = vmatmul.mubr.f32.gmra.mrb[0].mxu0 %v3406
    %v3599 = vpop.f32.mrb[0].mxu0
    %v3600 = vadd.f32 0.0, %v3599
    %v3601 = vpop.f32.mrb[0].mxu0
    %3602 = vmatprep.mubr.f32.mxu0 0.0
    %3603 = vmatmul.mubr.f32.gmra.mrb[0].mxu0 %v3407
    %v3604 = vpop.f32.mrb[0].mxu0
    %v3605 = vadd.f32 0.0, %v3604
    %v3606 = vpop.f32.mrb[0].mxu0
    %3607 = vdwg.mxu0
    %s3608 = scalar_lea.vmem %s0, 528
    %v3609 = vld [vmem:[%s3608] sm:$0xff]
    %v3610 = vld [vmem:[%s3608 + $0x8] sm:$0xff]
    %v3611 = vld [vmem:[%s3608 + $0x10] sm:$0xff]
    %v3612 = vld [vmem:[%s3608 + $0x18] sm:$0xff]
    %v3613 = vld [vmem:[%s3608 + $0x20] sm:$0xff]
    %v3614 = vld [vmem:[%s3608 + $0x28] sm:$0xff]
    %v3615 = vadd.f32 %v3609, %v3523
    %v3616 = vadd.f32 %v3610, %v3525
    %v3617 = vadd.f32 %v3612, %v3529
    %v3618 = vadd.f32 %v3613, %v3531
    %v3619 = vxor.u32 %v3615, 2147483648
    %v3620 = vxor.u32 %v3616, 2147483648
    %v3621 = vxor.u32 %v3617, 2147483648
    %v3622 = vxor.u32 %v3618, 2147483648
    %v3623 = vmul.f32 %v3619, 1.442695
    %v3624 = vpow.pop %v3623
    %v3625 = vmul.f32 %v3620, 1.442695
    %v3626 = vpow.pop %v3625
    %v3627 = vmul.f32 %v3621, 1.442695
    %v3628 = vpow.pop %v3627
    %v3629 = vmul.f32 %v3622, 1.442695
    %v3630 = vpow.pop %v3629
    %v3631 = vadd.f32 %v3624, 1.0
    %v3632 = vadd.f32 %v3626, 1.0
    %v3633 = vadd.f32 %v3628, 1.0
    %v3634 = vadd.f32 %v3630, 1.0
    %v3635 = vrcp.pop %v3631
    %v3636 = vmul.f32 1.0, %v3635
    %v3637 = vrcp.pop %v3632
    %v3638 = vmul.f32 1.0, %v3637
    %v3639 = vrcp.pop %v3633
    %v3640 = vmul.f32 1.0, %v3639
    %v3641 = vrcp.pop %v3634
    %v3642 = vmul.f32 1.0, %v3641
    %v3643 = vadd.f32 %v3600, %v42
    %v3644 = vadd.f32 %v3605, %v42
    %v3645 = vmul.f32 %v3636, %v3643
    %v3646 = vmul.f32 %v3640, %v3644
    %v3647 = vadd.f32 %v3611, %v3645
    %v3648 = vadd.f32 %v3614, %v3646
    %v3649 = vtanh.pop %v3647
    %v3650 = vtanh.pop %v3648
    %v3651 = vsub.f32 1.0, %v3638
    %v3652 = vsub.f32 1.0, %v3642
    %v3653 = vmul.f32 %v3651, %v3649
    %v3654 = vmul.f32 %v3652, %v3650
    %v3655 = vmul.f32 %v3638, %v3406
    %v3656 = vmul.f32 %v3642, %v3407
    %v3657 = vadd.f32 %v3653, %v3655
    %v3658 = vadd.f32 %v3654, %v3656
    %3659 = vst [vmem:[#allocation2] sm:$0xff] %v3657
    %3660 = vst [vmem:[#allocation2 + $0x8] sm:$0xff] %v3658
    %v3661 = vsel %vm60, %v3657, 0.0
    %v3662 = vsel %vm60, %v3658, 0.0
    %3663 = vadd.xlane.f32.xlu0 %v3661
    %v3664 = vpop.xlane.xlu0 %3663
    %3665 = vadd.xlane.f32.xlu0 %v3662
    %v3666 = vpop.xlane.xlu0 %3665
    %v3667 = vmul.f32 %v3664, 0.03125
    %v3668 = vmul.f32 %v3666, 0.03125
    %v3669 = vsub.f32 %v3661, %v3667
    %v3670 = vsub.f32 %v3662, %v3668
    %v3671 = vsel %vm60, %v3669, 0.0
    %v3672 = vsel %vm60, %v3670, 0.0
    %v3673 = vmul.f32 %v3671, %v3671
    %v3674 = vmul.f32 %v3672, %v3672
    %3675 = vadd.xlane.f32.xlu0 %v3673
    %v3676 = vpop.xlane.xlu0 %3675
    %3677 = vadd.xlane.f32.xlu0 %v3674
    %v3678 = vpop.xlane.xlu0 %3677
    %v3679 = vmul.f32 %v3676, 0.03125
    %v3680 = vmul.f32 %v3678, 0.03125
    %v3681 = vadd.f32 %v3679, 1e-05
    %v3682 = vadd.f32 %v3680, 1e-05
    %v3683 = vrsqrt.pop %v3681
    %v3684 = vrsqrt.pop %v3682
    %v3685 = vmul.f32 %v3671, %v3683
    %v3686 = vmul.f32 %v3672, %v3684
    %v3687 = vmul.f32 %v3685, %v49
    %v3688 = vmul.f32 %v3686, %v49
    %v3689 = vadd.f32 %v3687, %v56
    %v3690 = vadd.f32 %v3688, %v56
    %s3691 = scalar_lea.vmem [#allocation3], 176
    %3692 = vst [vmem:[%s3691] sm:$0xff] %v3689
    %3693 = vst [vmem:[%s3691 + $0x8] sm:$0xff] %v3690
    // Predicated region
    $region34: #{gru_module_forward.1} parent=1 // pred_check
      %p3694 = pneg %p29
    $region35: #{gru_module_forward.1} parent=1 // pred_check_branch
      %3696 = sbr.rel (%p3694) target = $region37
    $region36: #{gru_module_forward.1} parent=1 // pred_region
      %v3697 = vld [vmem:[#allocation2] sm:$0xff]
      %v3698 = vld [vmem:[#allocation2 + $0x8] sm:$0xff]
      %3699 = vst [vmem:[%s8] sm:$0xff] %v3697
      %3700 = vst [vmem:[%s8 + $0x8] sm:$0xff] %v3698
    $region37: #{gru_module_forward.1} parent=1 // pred_fallthru
      _
    // Predicated region
    $region38: #{gru_module_forward.1} parent=1 // pred_check
      _
    $region39: #{gru_module_forward.1} parent=1 // pred_check_branch
      %3702 = sbr.rel (0) target = $region41
    $region40: #{gru_module_forward.1} parent=1 // pred_region
      %s3704 = ssub.s32 3072, 3072
      %3705 = vsyncadd [#allocation4], %s3704
      %s3706 = sshll.u32 [#allocation3], 4
      %s3707 = int_to_ptr.vmem [resolvable:$true] %s3706
      %3712 = dma.vmem_to_hbm [thread:$0]  %s3707, 3072, %s7, [#allocation4], 128, 128, 8
    $region41: #{gru_module_forward.1} parent=1 // pred_fallthru
      _
    // Predicated region
    $region42: #{gru_module_forward.1} parent=1 // pred_check
      _
    $region43: #{gru_module_forward.1} parent=1 // pred_check_branch
      %3714 = sbr.rel (0) target = $region45
    $region44: #{gru_module_forward.1} parent=1 // pred_region
      _
    $region45: #{gru_module_forward.1} parent=1 // pred_fallthru
      _
    // Predicated region
    $region46: #{gru_module_forward.1} parent=1 // pred_check
      _
    $region47: #{gru_module_forward.1} parent=1 // pred_check_branch
      %3716 = sbr.rel (0) target = $region49
    $region48: #{gru_module_forward.1} parent=1 // pred_region
      %3717 = dma.done [#allocation4], 3072
    $region49: #{gru_module_forward.1} parent=1 // pred_fallthru
      _
    // Predicated region
    $region50: #{gru_module_forward.1} parent=1 // pred_check
      _
    $region51: #{gru_module_forward.1} parent=1 // pred_check_branch
      %3719 = sbr.rel (0) target = $region53
    $region52: #{gru_module_forward.1} parent=1 // pred_region
      _
    $region53: #{gru_module_forward.1} parent=1 // pred_fallthru
      _
    %3720 = vsyncpa [#allocation4], 1

</llo_original>
